<compile_context>
chip_gen: v7x
topology: tpu7x:2x2x1
jax: 0.10.0
libtpu: 0.0.40
codegen_flags: <defaults>
</compile_context>

<pallas_src>
import functools

import jax
import jax.numpy as jnp
from jax.experimental import pallas as pl
from jax.experimental.pallas import tpu as pltpu

F32 = jnp.float32
BF16 = jnp.bfloat16
EPS = 1e-8  # GlobLN epsilon


def _tpu_vmem_capacity_bytes():
    """Physical VMEM per core; conservative fallback if the query fails."""
    try:
        cap = int(getattr(pltpu.get_tpu_info(), "vmem_capacity_bytes", 0) or 0)
        if cap > 0:
            return cap
    except Exception:
        pass
    return 64 * 1024 * 1024


VMEM_CAP = _tpu_vmem_capacity_bytes()
# Generation-aware scoped-VMEM limit: ~40 MiB on v7x (64 MiB physical),
# ~80 MiB on v5e/v6e (128 MiB physical).
VMEM_LIMIT = int(max(32 * 1024 * 1024,
                     min(VMEM_CAP * 5 // 8, 100 * 1024 * 1024)))
# Lane tile for the K-tiled streaming kernels (encoder / decoder).
KT = 1024 if VMEM_CAP >= 100 * 1024 * 1024 else 512


def _cp(sem):
    return pltpu.CompilerParams(dimension_semantics=sem,
                                vmem_limit_bytes=VMEM_LIMIT)


def _masked_gln(x, g, b, vmask, inv_cnt):
    """Global layer norm over (channels, valid frames); one-pass statistics."""
    xm = x * vmask
    s1 = jnp.sum(xm)
    s2 = jnp.sum(xm * xm)
    mean = s1 * inv_cnt
    var = jnp.maximum(s2 * inv_cnt - mean * mean, 0.0)
    return (x - mean) * jax.lax.rsqrt(var + EPS) * g + b


# ----------------------------------------------------------------------------
# Encoder: Conv1d(1, N, L, L/2, bias=False) + ReLU as matmul over frames
# ----------------------------------------------------------------------------
def _enc_kernel(f_ref, w_ref, o_ref):
    y = jnp.dot(w_ref[...], f_ref[0].astype(BF16), preferred_element_type=F32)
    o_ref[0] = jnp.maximum(y, 0.0).astype(BF16)


def encoder_conv(frames, enc_w):
    Bsz, L, Kp = frames.shape
    N = enc_w.shape[0]
    return pl.pallas_call(
        _enc_kernel,
        out_shape=jax.ShapeDtypeStruct((Bsz, N, Kp), BF16),
        grid=(Bsz, Kp // KT),
        in_specs=[
            pl.BlockSpec((1, L, KT), lambda b, t: (b, 0, t)),
            pl.BlockSpec((N, L), lambda b, t: (0, 0)),
        ],
        out_specs=pl.BlockSpec((1, N, KT), lambda b, t: (b, 0, t)),
        compiler_params=_cp(("parallel", "parallel")),
    )(frames, enc_w)


# ----------------------------------------------------------------------------
# Fused TCN: bottleneck (GlobLN+1x1) -> R*X Conv1DBlocks -> mask -> mask*mix_e
# The residual stream / skip accumulator stay resident in VMEM scratch across
# the block grid axis; only the bf16 masked spectra are written back to HBM.
# ----------------------------------------------------------------------------
def _tcn_kernel(P, X, K, Nch, Bn, Sc, Hh, C,
                e_ref, bng_ref, bnb_ref, bnw_ref, bnb2_ref,
                inw_ref, inb_ref, dww_ref, dwb_ref, lng_ref, lnb_ref,
                rsw_ref, rsb_ref, mkw_ref, alpha_ref, malpha_ref,
                o_ref, out_s, skip_s, y_s):
    blk = pl.program_id(1)
    n_blk = pl.num_programs(1)
    Kp = out_s.shape[1]
    vmask = (jax.lax.broadcasted_iota(jnp.int32, (1, Kp), 1) < K).astype(F32)

    # ---- bottleneck: GlobLN(N) + Conv1d(N, Bn, 1) -- once per batch --------
    @pl.when(blk == 0)
    def _():
        x0 = e_ref[0].astype(F32)                               # (N, Kp)
        xn = _masked_gln(x0, bng_ref[...], bnb_ref[...], vmask,
                         1.0 / float(Nch * K))
        out_s[...] = (jnp.dot(bnw_ref[...], xn.astype(BF16),
                              preferred_element_type=F32)
                      + bnb2_ref[...]) * vmask
        skip_s[...] = jnp.zeros(skip_s.shape, F32)

    # ---- Conv1DBlock `blk` --------------------------------------------------
    alpha = alpha_ref[blk]                                      # shared PReLU
    lng = lng_ref[0]                                            # shared GlobLN
    lnb = lnb_ref[0]
    inv_hk = 1.0 / float(Hh * K)

    x = out_s[...]                                              # (Bn, Kp)
    h = jnp.dot(inw_ref[0], x.astype(BF16),
                preferred_element_type=F32) + inb_ref[0]        # in_conv (1x1)
    h = jnp.where(h >= 0.0, h, alpha * h)                       # PReLU
    # GlobLN; zero padded frames so the dilated conv sees zero padding and
    # roll wrap-around reads zeros.
    hn = _masked_gln(h, lng, lnb, vmask, inv_hk) * vmask

    # Dilated depthwise conv: dilation = 2 ** (blk % X).  Roll shifts must be
    # compile-time constants, so unroll one branch per dilation.
    dil_idx = blk % X
    for xi in range(X):
        dil = 2 ** xi
        pad = (P - 1) * dil // 2

        @pl.when(dil_idx == xi)
        def _(dil=dil, pad=pad):
            acc = None
            for j in range(P):                                  # P small & static
                off = j * dil - pad
                hj = hn if off == 0 else pltpu.roll(hn, shift=(-off) % Kp, axis=1)
                term = dww_ref[j] * hj                          # (H,1)*(H,Kp)
                acc = term if acc is None else acc + term
            y_s[...] = acc

    y = y_s[...] + dwb_ref[0]
    y = jnp.where(y >= 0.0, y, alpha * y)                       # shared PReLU
    y = _masked_gln(y, lng, lnb, vmask, inv_hk)                 # shared GlobLN

    # res_conv and skip_conv merged into one (Bn+Sc, H) x (H, Kp) matmul.
    rs = jnp.dot(rsw_ref[0], y.astype(BF16),
                 preferred_element_type=F32) + rsb_ref[0]
    out_s[...] = (x + rs[:Bn]) * vmask                          # residual path
    skip_s[...] = skip_s[...] + rs[Bn:]                         # skip accum

    # ---- mask (PReLU -> 1x1 -> ReLU) * mixture_e -- after the last block ----
    @pl.when(blk == n_blk - 1)
    def _():
        s = skip_s[...]
        s = jnp.where(s >= 0.0, s, malpha_ref[0] * s)
        m = jnp.maximum(jnp.dot(mkw_ref[...], s.astype(BF16),
                                preferred_element_type=F32), 0.0)
        e = e_ref[0].astype(F32)                                # (N, Kp)
        for c in range(C):
            o_ref[0, c * Nch:(c + 1) * Nch, :] = (
                m[c * Nch:(c + 1) * Nch, :] * e).astype(BF16)


def tcn_fused(mix_e, pp, K, P, X, C):
    Bsz, N, Kp = mix_e.shape
    nb, Hh, Bn = pp["in_w"].shape
    Sc = pp["rs_w"].shape[1] - Bn
    CN = pp["mask_w"].shape[0]
    kern = functools.partial(_tcn_kernel, P, X, K, N, Bn, Sc, Hh, C)
    blkmap = lambda b, l: (l, 0, 0)
    return pl.pallas_call(
        kern,
        out_shape=jax.ShapeDtypeStruct((Bsz, CN, Kp), BF16),
        grid=(Bsz, nb),
        in_specs=[
            pl.BlockSpec((1, N, Kp), lambda b, l: (b, 0, 0)),       # mixture_e
            pl.BlockSpec((N, 1), lambda b, l: (0, 0)),              # bn gamma
            pl.BlockSpec((N, 1), lambda b, l: (0, 0)),              # bn beta
            pl.BlockSpec((Bn, N), lambda b, l: (0, 0)),             # bn conv w
            pl.BlockSpec((Bn, 1), lambda b, l: (0, 0)),             # bn conv b
            pl.BlockSpec((1, Hh, Bn), blkmap),                      # in_w
            pl.BlockSpec((1, Hh, 1), blkmap),                       # in_b
            pl.BlockSpec((P, Hh, 1), lambda b, l: (l, 0, 0)),       # dw_w taps
            pl.BlockSpec((1, Hh, 1), blkmap),                       # dw_b
            pl.BlockSpec((1, Hh, 1), blkmap),                       # ln_g
            pl.BlockSpec((1, Hh, 1), blkmap),                       # ln_b
            pl.BlockSpec((1, Bn + Sc, Hh), blkmap),                 # res|skip w
            pl.BlockSpec((1, Bn + Sc, 1), blkmap),                  # res|skip b
            pl.BlockSpec((CN, Sc), lambda b, l: (0, 0)),            # mask_w
            pl.BlockSpec(memory_space=pltpu.MemorySpace.SMEM),      # alphas
            pl.BlockSpec(memory_space=pltpu.MemorySpace.SMEM),      # mask alpha
        ],
        out_specs=pl.BlockSpec((1, CN, Kp), lambda b, l: (b, 0, 0)),
        scratch_shapes=[pltpu.VMEM((Bn, Kp), F32),    # TCN residual stream
                        pltpu.VMEM((Sc, Kp), F32),    # skip accumulator
                        pltpu.VMEM((Hh, Kp), F32)],   # depthwise-conv output
        compiler_params=_cp(("parallel", "arbitrary")),
    )(mix_e, pp["bn_g"], pp["bn_b"], pp["bn_w"], pp["bn_b2"],
      pp["in_w"], pp["in_b"], pp["dw_w"], pp["dw_b"], pp["ln_g"], pp["ln_b"],
      pp["rs_w"], pp["rs_b"], pp["mask_w"], pp["alphas"], pp["mask_alpha"])


# ----------------------------------------------------------------------------
# Decoder: ConvTranspose1d(C*N, C, L, L/2, bias=False) as per-frame matmul
# ----------------------------------------------------------------------------
def _dec_kernel(x_ref, w_ref, o_ref):
    o_ref[0] = jnp.dot(w_ref[...], x_ref[0], preferred_element_type=F32)


def decode_frames(masked, dec_mat):
    Bsz, CN, Kp = masked.shape
    CL = dec_mat.shape[0]
    return pl.pallas_call(
        _dec_kernel,
        out_shape=jax.ShapeDtypeStruct((Bsz, CL, Kp), F32),
        grid=(Bsz, Kp // KT),
        in_specs=[
            pl.BlockSpec((1, CN, KT), lambda b, t: (b, 0, t)),
            pl.BlockSpec((CL, CN), lambda b, t: (0, 0)),
        ],
        out_specs=pl.BlockSpec((1, CL, KT), lambda b, t: (b, 0, t)),
        compiler_params=_cp(("parallel", "parallel")),
    )(masked, dec_mat)


# ----------------------------------------------------------------------------
# Parameters (deterministic, in-script) and one-time packing
# ----------------------------------------------------------------------------
def init_params(key, N, L, B, Sc, H, P, X, R, C):
    keys = iter(jax.random.split(key, 256))

    def nrm(shape, scale):
        return jax.random.normal(next(keys), shape, F32) * scale

    params = {
        "enc_w": nrm((N, L), 1.0 / jnp.sqrt(L)),            # Conv1d(1, N, L, L//2)
        "bn_gamma": jnp.ones((N,), F32),                    # GlobLN(N)
        "bn_beta": jnp.zeros((N,), F32),
        "bn_w": nrm((B, N), 1.0 / jnp.sqrt(N)),             # Conv1d(N, B, 1)
        "bn_b": nrm((B,), 0.1),
        "mask_alpha": jnp.asarray(0.25, F32),               # PReLU in mask_conv
        "mask_w": nrm((C * N, Sc), 1.0 / jnp.sqrt(Sc)),     # Conv1d(Sc, C*N, 1)
        "dec_w": nrm((C * N, C, L), 1.0 / jnp.sqrt(C * N)), # ConvTranspose1d(C*N,C,L)
    }
    blocks = []
    for _ in range(R * X):
        blocks.append({
            "in_w": nrm((H, B), 1.0 / jnp.sqrt(B)),         # Conv1d(B, H, 1)
            "in_b": nrm((H,), 0.1),
            "alpha": jnp.asarray(0.25, F32),                # shared PReLU
            "ln_g": jnp.ones((H,), F32),                    # shared GlobLN(H)
            "ln_b": jnp.zeros((H,), F32),
            "dw_w": nrm((H, P), 1.0 / jnp.sqrt(P)),         # depthwise Conv1d(H,H,P)
            "dw_b": nrm((H,), 0.1),
            "res_w": nrm((B, H), 1.0 / jnp.sqrt(H)),        # Conv1d(H, B, 1)
            "res_b": nrm((B,), 0.1),
            "skip_w": nrm((Sc, H), 1.0 / jnp.sqrt(H)),      # Conv1d(H, Sc, 1)
            "skip_b": nrm((Sc,), 0.1),
        })
    params["blocks"] = blocks
    return params


def pack_params(params, *, N, L, B, Sc, H, P, C):
    """Stack per-block weights and hoist all casts/reshapes out of the forward."""
    blocks = params["blocks"]
    nb = len(blocks)

    def stack(name):
        return jnp.stack([blk[name] for blk in blocks], axis=0)

    dw = jnp.transpose(stack("dw_w"), (0, 2, 1)).reshape(nb * P, H)   # taps
    rs_w = jnp.concatenate([stack("res_w"), stack("skip_w")], axis=1)
    rs_b = jnp.concatenate([stack("res_b"), stack("skip_b")], axis=1)

    return {
        "enc_w": params["enc_w"].astype(BF16),
        "bn_g": params["bn_gamma"].reshape(N, 1).astype(F32),
        "bn_b": params["bn_beta"].reshape(N, 1).astype(F32),
        "bn_w": params["bn_w"].astype(BF16),
        "bn_b2": params["bn_b"].reshape(B, 1).astype(F32),
        "in_w": stack("in_w").astype(BF16),                  # (nb, H, B)
        "in_b": stack("in_b")[..., None].astype(F32),        # (nb, H, 1)
        "dw_w": dw[..., None].astype(F32),                   # (nb*P, H, 1)
        "dw_b": stack("dw_b")[..., None].astype(F32),
        "ln_g": stack("ln_g")[..., None].astype(F32),
        "ln_b": stack("ln_b")[..., None].astype(F32),
        "rs_w": rs_w.astype(BF16),                           # (nb, B+Sc, H)
        "rs_b": rs_b[..., None].astype(F32),                 # (nb, B+Sc, 1)
        "alphas": stack("alpha").astype(F32),                # (nb,)
        "mask_w": params["mask_w"].astype(BF16),
        "mask_alpha": params["mask_alpha"].reshape(1).astype(F32),
        "dec_mat": params["dec_w"].reshape(C * N, C * L).T.astype(BF16),
    }


# ----------------------------------------------------------------------------
# Forward pass (glue + fused kernels)
# ----------------------------------------------------------------------------
def conv_tasnet_forward(pp, mixture, *, N, L, B, Sc, H, P, X, R, C):
    hop = L // 2
    Bsz, _, T = mixture.shape
    K = (T - L) // hop + 1                        # number of frames
    T_use = (K + 1) * hop                         # samples actually covered
    pad_max = (P - 1) * (2 ** (X - 1)) // 2       # largest dilated-conv padding
    Kp = ((K + pad_max + KT - 1) // KT) * KT      # lane-dense, multiple of KT
    assert Kp >= K + pad_max

    # ---- Encoder framing (hop = L/2): two shifted halves, no per-tap gather
    halves = mixture[:, 0, :T_use].astype(F32).reshape(Bsz, K + 1, hop)
    frames = jnp.concatenate([halves[:, :K, :], halves[:, 1:, :]], axis=-1)
    frames = jnp.transpose(frames, (0, 2, 1))                        # (B, L, K)
    frames = jnp.pad(frames, ((0, 0), (0, 0), (0, Kp - K)))
    mixture_e = encoder_conv(frames, pp["enc_w"])                    # (B,N,Kp) bf16

    # ---- Fused bottleneck + R*X Conv1DBlocks + mask + mask*mixture_e -------
    masked = tcn_fused(mixture_e, pp, K, P, X, C)                    # (B,C*N,Kp) bf16

    # ---- Decoder: ConvTranspose1d as matmul + 2-term overlap-add -----------
    frames_out = decode_frames(masked, pp["dec_mat"])[:, :, :K]      # (B,C*L,K)
    fo = frames_out.reshape(Bsz, C, L, K)
    first = jnp.transpose(fo[:, :, :hop, :], (0, 1, 3, 2)).reshape(Bsz, C, K * hop)
    second = jnp.transpose(fo[:, :, hop:, :], (0, 1, 3, 2)).reshape(Bsz, C, K * hop)
    # stride == L/2: each output sample gets exactly two frame contributions
    return (jnp.pad(first, ((0, 0), (0, 0), (0, hop))) +
            jnp.pad(second, ((0, 0), (0, 0), (hop, 0))))


# ----------------------------------------------------------------------------
if __name__ == "__main__":
    # Small ConvTasNet config (module defaults scaled down).
    N, L, B, Sc, H, P, X, R, C = 16, 8, 16, 16, 32, 3, 2, 2, 2
    batch, T = 2, 64                                    # T multiple of L//2

    key = jax.random.PRNGKey(0)
    kparam, kmix = jax.random.split(key)
    raw_params = init_params(kparam, N, L, B, Sc, H, P, X, R, C)
    packed = pack_params(raw_params, N=N, L=L, B=B, Sc=Sc, H=H, P=P, C=C)
    mixture = jax.random.normal(kmix, (batch, 1, T), F32)

    fwd = jax.jit(functools.partial(
        conv_tasnet_forward, N=N, L=L, B=B, Sc=Sc, H=H, P=P, X=X, R=R, C=C))
    out = jax.block_until_ready(fwd(packed, mixture))

    K = (T - L) // (L // 2) + 1
    assert out.shape == (batch, C, (K - 1) * (L // 2) + L), out.shape
    assert out.dtype == jnp.float32
    assert bool(jnp.all(jnp.isfinite(out)))
    print("KERNEL_OK")
</pallas_src>

<mosaic_0001>
module attributes {stable_mosaic.version = 11 : i64} {
  func.func @_enc_kernel(%arg0: i32, %arg1: i32, %arg2: memref<1x8x512xf32, #tpu.memory_space<vmem>>, %arg3: memref<16x8xbf16, #tpu.memory_space<vmem>>, %arg4: memref<1x16x512xbf16, #tpu.memory_space<vmem>>) attributes {dimension_semantics = [#tpu.dimension_semantics<parallel>, #tpu.dimension_semantics<parallel>], iteration_bounds = array<i64: 2, 1>, scalar_prefetch = 0 : i64, scratch_operands = 0 : i64, tpu.core_type = #tpu.core_type<tc>, window_params = [{transform_indices = @transform_0, window_bounds = array<i64: 1, 8, 512>}, {pipeline_mode = #tpu.pipeline_mode<synchronous>, transform_indices = @transform_1, window_bounds = array<i64: 16, 8>}, {transform_indices = @transform_2, window_bounds = array<i64: 1, 16, 512>}]} {
    %c0 = arith.constant 0 : index
    %c0_0 = arith.constant 0 : index
    %0 = vector.load %arg3[%c0, %c0_0] : memref<16x8xbf16, #tpu.memory_space<vmem>>, vector<16x8xbf16>
    %c0_1 = arith.constant 0 : index
    %c0_2 = arith.constant 0 : index
    %c0_3 = arith.constant 0 : index
    %1 = vector.load %arg2[%c0_1, %c0_2, %c0_3] : memref<1x8x512xf32, #tpu.memory_space<vmem>>, vector<1x8x512xf32>
    %2 = vector.shape_cast %1 : vector<1x8x512xf32> to vector<8x512xf32>
    %3 = arith.truncf %2 : vector<8x512xf32> to vector<8x512xbf16>
    %cst = arith.constant dense<0.000000e+00> : vector<16x512xf32>
    %4 = tpu.matmul %0, %3, %cst {dimension_numbers = #tpu.dot_dimension_numbers<[1], [0], [0], [1], [0, 0, 1, 1], [], []>} : vector<16x8xbf16>, vector<8x512xbf16>, vector<16x512xf32> -> vector<16x512xf32>
    %cst_4 = arith.constant 0.000000e+00 : f32
    %5 = vector.broadcast %cst_4 : f32 to vector<16x512xf32>
    %6 = arith.maximumf %4, %5 : vector<16x512xf32>
    %7 = arith.truncf %6 : vector<16x512xf32> to vector<16x512xbf16>
    %c0_5 = arith.constant 0 : index
    %c0_6 = arith.constant 0 : index
    %c0_7 = arith.constant 0 : index
    %8 = vector.load %arg4[%c0_5, %c0_6, %c0_7] : memref<1x16x512xbf16, #tpu.memory_space<vmem>>, vector<1x16x512xbf16>
    %9 = vector.shape_cast %8 : vector<1x16x512xbf16> to vector<16x512xbf16>
    %10 = vector.shape_cast %7 : vector<16x512xbf16> to vector<1x16x512xbf16>
    tpu.vector_store %arg4[%c0_5, %c0_6, %c0_7], %10 {strides = array<i32>} : memref<1x16x512xbf16, #tpu.memory_space<vmem>>, vector<1x16x512xbf16>,
    return
  }
  func.func @transform_0(%arg0: i32, %arg1: i32) -> (i32, i32, i32) {
    %c0_i32 = arith.constant 0 : i32
    %c0_i32_0 = arith.constant 0 : i32
    return %arg0, %c0_i32, %arg1 : i32, i32, i32
  }
  func.func @transform_1(%arg0: i32, %arg1: i32) -> (i32, i32) {
    %c0_i32 = arith.constant 0 : i32
    %c0_i32_0 = arith.constant 0 : i32
    %c0_i32_1 = arith.constant 0 : i32
    return %c0_i32, %c0_i32_0 : i32, i32
  }
  func.func @transform_2(%arg0: i32, %arg1: i32) -> (i32, i32, i32) {
    %c0_i32 = arith.constant 0 : i32
    %c0_i32_0 = arith.constant 0 : i32
    return %arg0, %c0_i32, %arg1 : i32, i32, i32
  }
}

module attributes {stable_mosaic.version = 11 : i64} {
  func.func @_dec_kernel(%arg0: i32, %arg1: i32, %arg2: memref<1x32x512xbf16, #tpu.memory_space<vmem>>, %arg3: memref<16x32xbf16, #tpu.memory_space<vmem>>, %arg4: memref<1x16x512xf32, #tpu.memory_space<vmem>>) attributes {dimension_semantics = [#tpu.dimension_semantics<parallel>, #tpu.dimension_semantics<parallel>], iteration_bounds = array<i64: 2, 1>, scalar_prefetch = 0 : i64, scratch_operands = 0 : i64, tpu.core_type = #tpu.core_type<tc>, window_params = [{transform_indices = @transform_0, window_bounds = array<i64: 1, 32, 512>}, {pipeline_mode = #tpu.pipeline_mode<synchronous>, transform_indices = @transform_1, window_bounds = array<i64: 16, 32>}, {transform_indices = @transform_2, window_bounds = array<i64: 1, 16, 512>}]} {
    %c0 = arith.constant 0 : index
    %c0_0 = arith.constant 0 : index
    %0 = vector.load %arg3[%c0, %c0_0] : memref<16x32xbf16, #tpu.memory_space<vmem>>, vector<16x32xbf16>
    %c0_1 = arith.constant 0 : index
    %c0_2 = arith.constant 0 : index
    %c0_3 = arith.constant 0 : index
    %1 = vector.load %arg2[%c0_1, %c0_2, %c0_3] : memref<1x32x512xbf16, #tpu.memory_space<vmem>>, vector<1x32x512xbf16>
    %2 = vector.shape_cast %1 : vector<1x32x512xbf16> to vector<32x512xbf16>
    %cst = arith.constant dense<0.000000e+00> : vector<16x512xf32>
    %3 = tpu.matmul %0, %2, %cst {dimension_numbers = #tpu.dot_dimension_numbers<[1], [0], [0], [1], [0, 0, 1, 1], [], []>} : vector<16x32xbf16>, vector<32x512xbf16>, vector<16x512xf32> -> vector<16x512xf32>
    %c0_4 = arith.constant 0 : index
    %c0_5 = arith.constant 0 : index
    %c0_6 = arith.constant 0 : index
    %4 = vector.load %arg4[%c0_4, %c0_5, %c0_6] : memref<1x16x512xf32, #tpu.memory_space<vmem>>, vector<1x16x512xf32>
    %5 = vector.shape_cast %4 : vector<1x16x512xf32> to vector<16x512xf32>
    %6 = vector.shape_cast %3 : vector<16x512xf32> to vector<1x16x512xf32>
    tpu.vector_store %arg4[%c0_4, %c0_5, %c0_6], %6 {strides = array<i32>} : memref<1x16x512xf32, #tpu.memory_space<vmem>>, vector<1x16x512xf32>,
    return
  }
  func.func @transform_0(%arg0: i32, %arg1: i32) -> (i32, i32, i32) {
    %c0_i32 = arith.constant 0 : i32
    %c0_i32_0 = arith.constant 0 : i32
    return %arg0, %c0_i32, %arg1 : i32, i32, i32
  }
  func.func @transform_1(%arg0: i32, %arg1: i32) -> (i32, i32) {
    %c0_i32 = arith.constant 0 : i32
    %c0_i32_0 = arith.constant 0 : i32
    %c0_i32_1 = arith.constant 0 : i32
    return %c0_i32, %c0_i32_0 : i32, i32
  }
  func.func @transform_2(%arg0: i32, %arg1: i32) -> (i32, i32, i32) {
    %c0_i32 = arith.constant 0 : i32
    %c0_i32_0 = arith.constant 0 : i32
    return %arg0, %c0_i32, %arg1 : i32, i32, i32
  }
}

module attributes {stable_mosaic.version = 11 : i64} {
  func.func @_tcn_kernel(%arg0: i32, %arg1: i32, %arg2: memref<1x16x512xbf16, #tpu.memory_space<vmem>>, %arg3: memref<16x1xf32, #tpu.memory_space<vmem>>, %arg4: memref<16x1xf32, #tpu.memory_space<vmem>>, %arg5: memref<16x16xbf16, #tpu.memory_space<vmem>>, %arg6: memref<16x1xf32, #tpu.memory_space<vmem>>, %arg7: memref<1x32x16xbf16, #tpu.memory_space<vmem>>, %arg8: memref<1x32x1xf32, #tpu.memory_space<vmem>>, %arg9: memref<3x32x1xf32, #tpu.memory_space<vmem>>, %arg10: memref<1x32x1xf32, #tpu.memory_space<vmem>>, %arg11: memref<1x32x1xf32, #tpu.memory_space<vmem>>, %arg12: memref<1x32x1xf32, #tpu.memory_space<vmem>>, %arg13: memref<1x32x32xbf16, #tpu.memory_space<vmem>>, %arg14: memref<1x32x1xf32, #tpu.memory_space<vmem>>, %arg15: memref<32x16xbf16, #tpu.memory_space<vmem>>, %arg16: memref<4xf32, #tpu.memory_space<smem>>, %arg17: memref<1xf32, #tpu.memory_space<smem>>, %arg18: memref<1x32x512xbf16, #tpu.memory_space<vmem>>, %arg19: memref<16x512xf32, #tpu.memory_space<vmem>>, %arg20: memref<16x512xf32, #tpu.memory_space<vmem>>, %arg21: memref<32x512xf32, #tpu.memory_space<vmem>>) attributes {dimension_semantics = [#tpu.dimension_semantics<parallel>, #tpu.dimension_semantics<arbitrary>], iteration_bounds = array<i64: 2, 4>, scalar_prefetch = 0 : i64, scratch_operands = 3 : i64, tpu.core_type = #tpu.core_type<tc>, window_params = [{transform_indices = @transform_0, window_bounds = array<i64: 1, 16, 512>}, {pipeline_mode = #tpu.pipeline_mode<synchronous>, transform_indices = @transform_1, window_bounds = array<i64: 16, 1>}, {pipeline_mode = #tpu.pipeline_mode<synchronous>, transform_indices = @transform_2, window_bounds = array<i64: 16, 1>}, {pipeline_mode = #tpu.pipeline_mode<synchronous>, transform_indices = @transform_3, window_bounds = array<i64: 16, 16>}, {pipeline_mode = #tpu.pipeline_mode<synchronous>, transform_indices = @transform_4, window_bounds = array<i64: 16, 1>}, {transform_indices = @transform_5, window_bounds = array<i64: 1, 32, 16>}, {transform_indices = @transform_6, window_bounds = array<i64: 1, 32, 1>}, {transform_indices = @transform_7, window_bounds = array<i64: 3, 32, 1>}, {transform_indices = @transform_8, window_bounds = array<i64: 1, 32, 1>}, {transform_indices = @transform_9, window_bounds = array<i64: 1, 32, 1>}, {transform_indices = @transform_10, window_bounds = array<i64: 1, 32, 1>}, {transform_indices = @transform_11, window_bounds = array<i64: 1, 32, 32>}, {transform_indices = @transform_12, window_bounds = array<i64: 1, 32, 1>}, {pipeline_mode = #tpu.pipeline_mode<synchronous>, transform_indices = @transform_13, window_bounds = array<i64: 32, 16>}, {transform_indices = @transform_14, window_bounds = array<i64: 4>}, {transform_indices = @transform_15, window_bounds = array<i64: 1>}, {transform_indices = @transform_16, window_bounds = array<i64: 1, 32, 512>}]} {
    %0 = tpu.iota {dimensions = array<i32: 1>} : vector<1x512xi32>
    %c15_i32 = arith.constant 15 : i32
    %1 = vector.broadcast %c15_i32 : i32 to vector<1x512xi32>
    %2 = arith.cmpi slt, %0, %1 : vector<1x512xi32>
    %3 = arith.extui %2 : vector<1x512xi1> to vector<1x512xi32>
    %4 = arith.sitofp %3 : vector<1x512xi32> to vector<1x512xf32>
    %c0_i32 = arith.constant 0 : i32
    %5 = arith.cmpi eq, %arg1, %c0_i32 : i32
    %6 = arith.extui %5 : i1 to i32
    %c0_i32_0 = arith.constant 0 : i32
    %7 = arith.cmpi ne, %6, %c0_i32_0 : i32
    scf.if %7 {
      %c0_55 = arith.constant 0 : index
      %c0_56 = arith.constant 0 : index
      %c0_57 = arith.constant 0 : index
      %128 = vector.load %arg2[%c0_55, %c0_56, %c0_57] : memref<1x16x512xbf16, #tpu.memory_space<vmem>>, vector<1x16x512xbf16>
      %129 = vector.shape_cast %128 : vector<1x16x512xbf16> to vector<16x512xbf16>
      %130 = arith.extf %129 : vector<16x512xbf16> to vector<16x512xf32>
      %c0_58 = arith.constant 0 : index
      %c0_59 = arith.constant 0 : index
      %131 = vector.load %arg3[%c0_58, %c0_59] : memref<16x1xf32, #tpu.memory_space<vmem>>, vector<16x1xf32>
      %c0_60 = arith.constant 0 : index
      %c0_61 = arith.constant 0 : index
      %132 = vector.load %arg4[%c0_60, %c0_61] : memref<16x1xf32, #tpu.memory_space<vmem>>, vector<16x1xf32>
      %133 = vector.broadcast %4 : vector<1x512xf32> to vector<16x512xf32>
      %134 = arith.mulf %130, %133 : vector<16x512xf32>
      %135 = vector.shape_cast %134 : vector<16x512xf32> to vector<1x16x512xf32>
      %cst_62 = arith.constant dense<0.000000e+00> : vector<1xf32>
      %136 = vector.multi_reduction <add>, %135, %cst_62 [1, 2] : vector<1x16x512xf32> to vector<1xf32>
      %137 = vector.shape_cast %136 : vector<1xf32> to vector<1x1x1xf32>
      %138 = vector.extract %137[0, 0, 0] : f32 from vector<1x1x1xf32>
      %139 = arith.mulf %134, %134 : vector<16x512xf32>
      %140 = vector.shape_cast %139 : vector<16x512xf32> to vector<1x16x512xf32>
      %cst_63 = arith.constant dense<0.000000e+00> : vector<1xf32>
      %141 = vector.multi_reduction <add>, %140, %cst_63 [1, 2] : vector<1x16x512xf32> to vector<1xf32>
      %142 = vector.shape_cast %141 : vector<1xf32> to vector<1x1x1xf32>
      %143 = vector.extract %142[0, 0, 0] : f32 from vector<1x1x1xf32>
      %cst_64 = arith.constant 0.00416666688 : f32
      %144 = arith.mulf %138, %cst_64 : f32
      %cst_65 = arith.constant 0.00416666688 : f32
      %145 = arith.mulf %143, %cst_65 : f32
      %146 = arith.mulf %144, %144 : f32
      %147 = arith.subf %145, %146 : f32
      %cst_66 = arith.constant 0.000000e+00 : f32
      %148 = arith.maximumf %147, %cst_66 : f32
      %149 = vector.broadcast %144 : f32 to vector<16x512xf32>
      %150 = arith.subf %130, %149 : vector<16x512xf32>
      %cst_67 = arith.constant 9.99999993E-9 : f32
      %151 = arith.addf %148, %cst_67 : f32
      %152 = math.rsqrt %151 : f32
      %153 = vector.broadcast %152 : f32 to vector<16x512xf32>
      %154 = arith.mulf %150, %153 : vector<16x512xf32>
      %155 = vector.broadcast %131 : vector<16x1xf32> to vector<16x512xf32>
      %156 = arith.mulf %154, %155 : vector<16x512xf32>
      %157 = vector.broadcast %132 : vector<16x1xf32> to vector<16x512xf32>
      %158 = arith.addf %156, %157 : vector<16x512xf32>
      %c0_68 = arith.constant 0 : index
      %c0_69 = arith.constant 0 : index
      %159 = vector.load %arg5[%c0_68, %c0_69] : memref<16x16xbf16, #tpu.memory_space<vmem>>, vector<16x16xbf16>
      %160 = arith.truncf %158 : vector<16x512xf32> to vector<16x512xbf16>
      %cst_70 = arith.constant dense<0.000000e+00> : vector<16x512xf32>
      %161 = tpu.matmul %159, %160, %cst_70 {dimension_numbers = #tpu.dot_dimension_numbers<[1], [0], [0], [1], [0, 0, 1, 1], [], []>} : vector<16x16xbf16>, vector<16x512xbf16>, vector<16x512xf32> -> vector<16x512xf32>
      %c0_71 = arith.constant 0 : index
      %c0_72 = arith.constant 0 : index
      %162 = vector.load %arg6[%c0_71, %c0_72] : memref<16x1xf32, #tpu.memory_space<vmem>>, vector<16x1xf32>
      %163 = vector.broadcast %162 : vector<16x1xf32> to vector<16x512xf32>
      %164 = arith.addf %161, %163 : vector<16x512xf32>
      %165 = vector.broadcast %4 : vector<1x512xf32> to vector<16x512xf32>
      %166 = arith.mulf %164, %165 : vector<16x512xf32>
      %c0_73 = arith.constant 0 : index
      %c0_74 = arith.constant 0 : index
      %167 = vector.load %arg19[%c0_73, %c0_74] : memref<16x512xf32, #tpu.memory_space<vmem>>, vector<16x512xf32>
      tpu.vector_store %arg19[%c0_73, %c0_74], %166 {strides = array<i32>} : memref<16x512xf32, #tpu.memory_space<vmem>>, vector<16x512xf32>,
      %cst_75 = arith.constant 0.000000e+00 : f32
      %168 = vector.broadcast %cst_75 : f32 to vector<16x512xf32>
      %c0_76 = arith.constant 0 : index
      %c0_77 = arith.constant 0 : index
      %169 = vector.load %arg20[%c0_76, %c0_77] : memref<16x512xf32, #tpu.memory_space<vmem>>, vector<16x512xf32>
      tpu.vector_store %arg20[%c0_76, %c0_77], %168 {strides = array<i32>} : memref<16x512xf32, #tpu.memory_space<vmem>>, vector<16x512xf32>,
    } else {
    }
    %8 = arith.index_cast %arg1 : i32 to index
    %9 = memref.load %arg16[%8] : memref<4xf32, #tpu.memory_space<smem>>
    %c0 = arith.constant 0 : index
    %c0_1 = arith.constant 0 : index
    %c0_2 = arith.constant 0 : index
    %10 = vector.load %arg11[%c0, %c0_1, %c0_2] : memref<1x32x1xf32, #tpu.memory_space<vmem>>, vector<1x32x1xf32>
    %11 = vector.shape_cast %10 : vector<1x32x1xf32> to vector<32x1xf32>
    %c0_3 = arith.constant 0 : index
    %c0_4 = arith.constant 0 : index
    %c0_5 = arith.constant 0 : index
    %12 = vector.load %arg12[%c0_3, %c0_4, %c0_5] : memref<1x32x1xf32, #tpu.memory_space<vmem>>, vector<1x32x1xf32>
    %13 = vector.shape_cast %12 : vector<1x32x1xf32> to vector<32x1xf32>
    %c0_6 = arith.constant 0 : index
    %c0_7 = arith.constant 0 : index
    %14 = vector.load %arg19[%c0_6, %c0_7] : memref<16x512xf32, #tpu.memory_space<vmem>>, vector<16x512xf32>
    %c0_8 = arith.constant 0 : index
    %c0_9 = arith.constant 0 : index
    %c0_10 = arith.constant 0 : index
    %15 = vector.load %arg7[%c0_8, %c0_9, %c0_10] : memref<1x32x16xbf16, #tpu.memory_space<vmem>>, vector<1x32x16xbf16>
    %16 = vector.shape_cast %15 : vector<1x32x16xbf16> to vector<32x16xbf16>
    %17 = arith.truncf %14 : vector<16x512xf32> to vector<16x512xbf16>
    %cst = arith.constant dense<0.000000e+00> : vector<32x512xf32>
    %18 = tpu.matmul %16, %17, %cst {dimension_numbers = #tpu.dot_dimension_numbers<[1], [0], [0], [1], [0, 0, 1, 1], [], []>} : vector<32x16xbf16>, vector<16x512xbf16>, vector<32x512xf32> -> vector<32x512xf32>
    %c0_11 = arith.constant 0 : index
    %c0_12 = arith.constant 0 : index
    %c0_13 = arith.constant 0 : index
    %19 = vector.load %arg8[%c0_11, %c0_12, %c0_13] : memref<1x32x1xf32, #tpu.memory_space<vmem>>, vector<1x32x1xf32>
    %20 = vector.shape_cast %19 : vector<1x32x1xf32> to vector<32x1xf32>
    %21 = vector.broadcast %20 : vector<32x1xf32> to vector<32x512xf32>
    %22 = arith.addf %18, %21 : vector<32x512xf32>
    %cst_14 = arith.constant 0.000000e+00 : f32
    %23 = vector.broadcast %cst_14 : f32 to vector<32x512xf32>
    %24 = arith.cmpf oge, %22, %23 : vector<32x512xf32>
    %25 = vector.broadcast %9 : f32 to vector<32x512xf32>
    %26 = arith.mulf %25, %22 : vector<32x512xf32>
    %27 = arith.select %24, %22, %26 : vector<32x512xi1>, vector<32x512xf32>
    %28 = vector.broadcast %4 : vector<1x512xf32> to vector<32x512xf32>
    %29 = arith.mulf %27, %28 : vector<32x512xf32>
    %30 = vector.shape_cast %29 : vector<32x512xf32> to vector<1x32x512xf32>
    %cst_15 = arith.constant dense<0.000000e+00> : vector<1xf32>
    %31 = vector.multi_reduction <add>, %30, %cst_15 [1, 2] : vector<1x32x512xf32> to vector<1xf32>
    %32 = vector.shape_cast %31 : vector<1xf32> to vector<1x1x1xf32>
    %33 = vector.extract %32[0, 0, 0] : f32 from vector<1x1x1xf32>
    %34 = arith.mulf %29, %29 : vector<32x512xf32>
    %35 = vector.shape_cast %34 : vector<32x512xf32> to vector<1x32x512xf32>
    %cst_16 = arith.constant dense<0.000000e+00> : vector<1xf32>
    %36 = vector.multi_reduction <add>, %35, %cst_16 [1, 2] : vector<1x32x512xf32> to vector<1xf32>
    %37 = vector.shape_cast %36 : vector<1xf32> to vector<1x1x1xf32>
    %38 = vector.extract %37[0, 0, 0] : f32 from vector<1x1x1xf32>
    %cst_17 = arith.constant 0.00208333344 : f32
    %39 = arith.mulf %33, %cst_17 : f32
    %cst_18 = arith.constant 0.00208333344 : f32
    %40 = arith.mulf %38, %cst_18 : f32
    %41 = arith.mulf %39, %39 : f32
    %42 = arith.subf %40, %41 : f32
    %cst_19 = arith.constant 0.000000e+00 : f32
    %43 = arith.maximumf %42, %cst_19 : f32
    %44 = vector.broadcast %39 : f32 to vector<32x512xf32>
    %45 = arith.subf %27, %44 : vector<32x512xf32>
    %cst_20 = arith.constant 9.99999993E-9 : f32
    %46 = arith.addf %43, %cst_20 : f32
    %47 = math.rsqrt %46 : f32
    %48 = vector.broadcast %47 : f32 to vector<32x512xf32>
    %49 = arith.mulf %45, %48 : vector<32x512xf32>
    %50 = vector.broadcast %11 : vector<32x1xf32> to vector<32x512xf32>
    %51 = arith.mulf %49, %50 : vector<32x512xf32>
    %52 = vector.broadcast %13 : vector<32x1xf32> to vector<32x512xf32>
    %53 = arith.addf %51, %52 : vector<32x512xf32>
    %54 = vector.broadcast %4 : vector<1x512xf32> to vector<32x512xf32>
    %55 = arith.mulf %53, %54 : vector<32x512xf32>
    %c2_i32 = arith.constant 2 : i32
    %c0_i32_21 = arith.constant 0 : i32
    %56 = arith.cmpi eq, %c2_i32, %c0_i32_21 : i32
    %c1_i32 = arith.constant 1 : i32
    %57 = arith.select %56, %c1_i32, %c2_i32 : i32
    %58 = arith.remsi %arg1, %57 : i32
    %c0_i32_22 = arith.constant 0 : i32
    %59 = arith.cmpi ne, %58, %c0_i32_22 : i32
    %c0_i32_23 = arith.constant 0 : i32
    %60 = arith.cmpi slt, %58, %c0_i32_23 : i32
    %c0_i32_24 = arith.constant 0 : i32
    %61 = arith.cmpi slt, %57, %c0_i32_24 : i32
    %62 = arith.xori %60, %61 : i1
    %63 = arith.andi %62, %59 : i1
    %64 = arith.addi %58, %57 : i32
    %65 = arith.select %63, %64, %58 : i32
    %c0_i32_25 = arith.constant 0 : i32
    %66 = arith.cmpi eq, %65, %c0_i32_25 : i32
    %67 = arith.extui %66 : i1 to i32
    %c0_i32_26 = arith.constant 0 : i32
    %68 = arith.cmpi ne, %67, %c0_i32_26 : i32
    scf.if %68 {
      %c1_i32_55 = arith.constant 1 : i32
      %128 = tpu.dynamic_rotate %55 by %c1_i32_55 dim 1 : vector<32x512xf32>, i32 -> vector<32x512xf32>
      %c0_56 = arith.constant 0 : index
      %c0_57 = arith.constant 0 : index
      %c0_58 = arith.constant 0 : index
      %129 = vector.load %arg9[%c0_56, %c0_57, %c0_58] : memref<3x32x1xf32, #tpu.memory_space<vmem>>, vector<1x32x1xf32>
      %130 = vector.shape_cast %129 : vector<1x32x1xf32> to vector<32x1xf32>
      %131 = vector.broadcast %130 : vector<32x1xf32> to vector<32x512xf32>
      %132 = arith.mulf %131, %128 : vector<32x512xf32>
      %c1 = arith.constant 1 : index
      %c0_59 = arith.constant 0 : index
      %c0_60 = arith.constant 0 : index
      %133 = vector.load %arg9[%c1, %c0_59, %c0_60] : memref<3x32x1xf32, #tpu.memory_space<vmem>>, vector<1x32x1xf32>
      %134 = vector.shape_cast %133 : vector<1x32x1xf32> to vector<32x1xf32>
      %135 = vector.broadcast %134 : vector<32x1xf32> to vector<32x512xf32>
      %136 = arith.mulf %135, %55 : vector<32x512xf32>
      %137 = arith.addf %132, %136 : vector<32x512xf32>
      %c511_i32 = arith.constant 511 : i32
      %138 = tpu.dynamic_rotate %55 by %c511_i32 dim 1 : vector<32x512xf32>, i32 -> vector<32x512xf32>
      %c2 = arith.constant 2 : index
      %c0_61 = arith.constant 0 : index
      %c0_62 = arith.constant 0 : index
      %139 = vector.load %arg9[%c2, %c0_61, %c0_62] : memref<3x32x1xf32, #tpu.memory_space<vmem>>, vector<1x32x1xf32>
      %140 = vector.shape_cast %139 : vector<1x32x1xf32> to vector<32x1xf32>
      %141 = vector.broadcast %140 : vector<32x1xf32> to vector<32x512xf32>
      %142 = arith.mulf %141, %138 : vector<32x512xf32>
      %143 = arith.addf %137, %142 : vector<32x512xf32>
      %c0_63 = arith.constant 0 : index
      %c0_64 = arith.constant 0 : index
      %144 = vector.load %arg21[%c0_63, %c0_64] : memref<32x512xf32, #tpu.memory_space<vmem>>, vector<32x512xf32>
      tpu.vector_store %arg21[%c0_63, %c0_64], %143 {strides = array<i32>} : memref<32x512xf32, #tpu.memory_space<vmem>>, vector<32x512xf32>,
    } else {
    }
    %c1_i32_27 = arith.constant 1 : i32
    %69 = arith.cmpi eq, %65, %c1_i32_27 : i32
    %70 = arith.extui %69 : i1 to i32
    %c0_i32_28 = arith.constant 0 : i32
    %71 = arith.cmpi ne, %70, %c0_i32_28 : i32
    scf.if %71 {
      %c2_i32_55 = arith.constant 2 : i32
      %128 = tpu.dynamic_rotate %55 by %c2_i32_55 dim 1 : vector<32x512xf32>, i32 -> vector<32x512xf32>
      %c0_56 = arith.constant 0 : index
      %c0_57 = arith.constant 0 : index
      %c0_58 = arith.constant 0 : index
      %129 = vector.load %arg9[%c0_56, %c0_57, %c0_58] : memref<3x32x1xf32, #tpu.memory_space<vmem>>, vector<1x32x1xf32>
      %130 = vector.shape_cast %129 : vector<1x32x1xf32> to vector<32x1xf32>
      %131 = vector.broadcast %130 : vector<32x1xf32> to vector<32x512xf32>
      %132 = arith.mulf %131, %128 : vector<32x512xf32>
      %c1 = arith.constant 1 : index
      %c0_59 = arith.constant 0 : index
      %c0_60 = arith.constant 0 : index
      %133 = vector.load %arg9[%c1, %c0_59, %c0_60] : memref<3x32x1xf32, #tpu.memory_space<vmem>>, vector<1x32x1xf32>
      %134 = vector.shape_cast %133 : vector<1x32x1xf32> to vector<32x1xf32>
      %135 = vector.broadcast %134 : vector<32x1xf32> to vector<32x512xf32>
      %136 = arith.mulf %135, %55 : vector<32x512xf32>
      %137 = arith.addf %132, %136 : vector<32x512xf32>
      %c510_i32 = arith.constant 510 : i32
      %138 = tpu.dynamic_rotate %55 by %c510_i32 dim 1 : vector<32x512xf32>, i32 -> vector<32x512xf32>
      %c2 = arith.constant 2 : index
      %c0_61 = arith.constant 0 : index
      %c0_62 = arith.constant 0 : index
      %139 = vector.load %arg9[%c2, %c0_61, %c0_62] : memref<3x32x1xf32, #tpu.memory_space<vmem>>, vector<1x32x1xf32>
      %140 = vector.shape_cast %139 : vector<1x32x1xf32> to vector<32x1xf32>
      %141 = vector.broadcast %140 : vector<32x1xf32> to vector<32x512xf32>
      %142 = arith.mulf %141, %138 : vector<32x512xf32>
      %143 = arith.addf %137, %142 : vector<32x512xf32>
      %c0_63 = arith.constant 0 : index
      %c0_64 = arith.constant 0 : index
      %144 = vector.load %arg21[%c0_63, %c0_64] : memref<32x512xf32, #tpu.memory_space<vmem>>, vector<32x512xf32>
      tpu.vector_store %arg21[%c0_63, %c0_64], %143 {strides = array<i32>} : memref<32x512xf32, #tpu.memory_space<vmem>>, vector<32x512xf32>,
    } else {
    }
    %c0_29 = arith.constant 0 : index
    %c0_30 = arith.constant 0 : index
    %72 = vector.load %arg21[%c0_29, %c0_30] : memref<32x512xf32, #tpu.memory_space<vmem>>, vector<32x512xf32>
    %c0_31 = arith.constant 0 : index
    %c0_32 = arith.constant 0 : index
    %c0_33 = arith.constant 0 : index
    %73 = vector.load %arg10[%c0_31, %c0_32, %c0_33] : memref<1x32x1xf32, #tpu.memory_space<vmem>>, vector<1x32x1xf32>
    %74 = vector.shape_cast %73 : vector<1x32x1xf32> to vector<32x1xf32>
    %75 = vector.broadcast %74 : vector<32x1xf32> to vector<32x512xf32>
    %76 = arith.addf %72, %75 : vector<32x512xf32>
    %cst_34 = arith.constant 0.000000e+00 : f32
    %77 = vector.broadcast %cst_34 : f32 to vector<32x512xf32>
    %78 = arith.cmpf oge, %76, %77 : vector<32x512xf32>
    %79 = vector.broadcast %9 : f32 to vector<32x512xf32>
    %80 = arith.mulf %79, %76 : vector<32x512xf32>
    %81 = arith.select %78, %76, %80 : vector<32x512xi1>, vector<32x512xf32>
    %82 = vector.broadcast %4 : vector<1x512xf32> to vector<32x512xf32>
    %83 = arith.mulf %81, %82 : vector<32x512xf32>
    %84 = vector.shape_cast %83 : vector<32x512xf32> to vector<1x32x512xf32>
    %cst_35 = arith.constant dense<0.000000e+00> : vector<1xf32>
    %85 = vector.multi_reduction <add>, %84, %cst_35 [1, 2] : vector<1x32x512xf32> to vector<1xf32>
    %86 = vector.shape_cast %85 : vector<1xf32> to vector<1x1x1xf32>
    %87 = vector.extract %86[0, 0, 0] : f32 from vector<1x1x1xf32>
    %88 = arith.mulf %83, %83 : vector<32x512xf32>
    %89 = vector.shape_cast %88 : vector<32x512xf32> to vector<1x32x512xf32>
    %cst_36 = arith.constant dense<0.000000e+00> : vector<1xf32>
    %90 = vector.multi_reduction <add>, %89, %cst_36 [1, 2] : vector<1x32x512xf32> to vector<1xf32>
    %91 = vector.shape_cast %90 : vector<1xf32> to vector<1x1x1xf32>
    %92 = vector.extract %91[0, 0, 0] : f32 from vector<1x1x1xf32>
    %cst_37 = arith.constant 0.00208333344 : f32
    %93 = arith.mulf %87, %cst_37 : f32
    %cst_38 = arith.constant 0.00208333344 : f32
    %94 = arith.mulf %92, %cst_38 : f32
    %95 = arith.mulf %93, %93 : f32
    %96 = arith.subf %94, %95 : f32
    %cst_39 = arith.constant 0.000000e+00 : f32
    %97 = arith.maximumf %96, %cst_39 : f32
    %98 = vector.broadcast %93 : f32 to vector<32x512xf32>
    %99 = arith.subf %81, %98 : vector<32x512xf32>
    %cst_40 = arith.constant 9.99999993E-9 : f32
    %100 = arith.addf %97, %cst_40 : f32
    %101 = math.rsqrt %100 : f32
    %102 = vector.broadcast %101 : f32 to vector<32x512xf32>
    %103 = arith.mulf %99, %102 : vector<32x512xf32>
    %104 = vector.broadcast %11 : vector<32x1xf32> to vector<32x512xf32>
    %105 = arith.mulf %103, %104 : vector<32x512xf32>
    %106 = vector.broadcast %13 : vector<32x1xf32> to vector<32x512xf32>
    %107 = arith.addf %105, %106 : vector<32x512xf32>
    %c0_41 = arith.constant 0 : index
    %c0_42 = arith.constant 0 : index
    %c0_43 = arith.constant 0 : index
    %108 = vector.load %arg13[%c0_41, %c0_42, %c0_43] : memref<1x32x32xbf16, #tpu.memory_space<vmem>>, vector<1x32x32xbf16>
    %109 = vector.shape_cast %108 : vector<1x32x32xbf16> to vector<32x32xbf16>
    %110 = arith.truncf %107 : vector<32x512xf32> to vector<32x512xbf16>
    %cst_44 = arith.constant dense<0.000000e+00> : vector<32x512xf32>
    %111 = tpu.matmul %109, %110, %cst_44 {dimension_numbers = #tpu.dot_dimension_numbers<[1], [0], [0], [1], [0, 0, 1, 1], [], []>} : vector<32x32xbf16>, vector<32x512xbf16>, vector<32x512xf32> -> vector<32x512xf32>
    %c0_45 = arith.constant 0 : index
    %c0_46 = arith.constant 0 : index
    %c0_47 = arith.constant 0 : index
    %112 = vector.load %arg14[%c0_45, %c0_46, %c0_47] : memref<1x32x1xf32, #tpu.memory_space<vmem>>, vector<1x32x1xf32>
    %113 = vector.shape_cast %112 : vector<1x32x1xf32> to vector<32x1xf32>
    %114 = vector.broadcast %113 : vector<32x1xf32> to vector<32x512xf32>
    %115 = arith.addf %111, %114 : vector<32x512xf32>
    %116 = vector.extract_strided_slice %115 {offsets = [0, 0], sizes = [16, 512], strides = [1, 1]} : vector<32x512xf32> to vector<16x512xf32>
    %117 = arith.addf %14, %116 : vector<16x512xf32>
    %118 = vector.broadcast %4 : vector<1x512xf32> to vector<16x512xf32>
    %119 = arith.mulf %117, %118 : vector<16x512xf32>
    %c0_48 = arith.constant 0 : index
    %c0_49 = arith.constant 0 : index
    %120 = vector.load %arg19[%c0_48, %c0_49] : memref<16x512xf32, #tpu.memory_space<vmem>>, vector<16x512xf32>
    tpu.vector_store %arg19[%c0_48, %c0_49], %119 {strides = array<i32>} : memref<16x512xf32, #tpu.memory_space<vmem>>, vector<16x512xf32>,
    %c0_50 = arith.constant 0 : index
    %c0_51 = arith.constant 0 : index
    %121 = vector.load %arg20[%c0_50, %c0_51] : memref<16x512xf32, #tpu.memory_space<vmem>>, vector<16x512xf32>
    %122 = vector.extract_strided_slice %115 {offsets = [16, 0], sizes = [16, 512], strides = [1, 1]} : vector<32x512xf32> to vector<16x512xf32>
    %123 = arith.addf %121, %122 : vector<16x512xf32>
    %c0_52 = arith.constant 0 : index
    %c0_53 = arith.constant 0 : index
    %124 = vector.load %arg20[%c0_52, %c0_53] : memref<16x512xf32, #tpu.memory_space<vmem>>, vector<16x512xf32>
    tpu.vector_store %arg20[%c0_52, %c0_53], %123 {strides = array<i32>} : memref<16x512xf32, #tpu.memory_space<vmem>>, vector<16x512xf32>,
    %c3_i32 = arith.constant 3 : i32
    %125 = arith.cmpi eq, %arg1, %c3_i32 : i32
    %126 = arith.extui %125 : i1 to i32
    %c0_i32_54 = arith.constant 0 : i32
    %127 = arith.cmpi ne, %126, %c0_i32_54 : i32
    scf.if %127 {
      %c0_55 = arith.constant 0 : index
      %c0_56 = arith.constant 0 : index
      %128 = vector.load %arg20[%c0_55, %c0_56] : memref<16x512xf32, #tpu.memory_space<vmem>>, vector<16x512xf32>
      %cst_57 = arith.constant 0.000000e+00 : f32
      %129 = vector.broadcast %cst_57 : f32 to vector<16x512xf32>
      %130 = arith.cmpf oge, %128, %129 : vector<16x512xf32>
      %c0_58 = arith.constant 0 : index
      %131 = memref.load %arg17[%c0_58] : memref<1xf32, #tpu.memory_space<smem>>
      %132 = vector.broadcast %131 : f32 to vector<16x512xf32>
      %133 = arith.mulf %132, %128 : vector<16x512xf32>
      %134 = arith.select %130, %128, %133 : vector<16x512xi1>, vector<16x512xf32>
      %c0_59 = arith.constant 0 : index
      %c0_60 = arith.constant 0 : index
      %135 = vector.load %arg15[%c0_59, %c0_60] : memref<32x16xbf16, #tpu.memory_space<vmem>>, vector<32x16xbf16>
      %136 = arith.truncf %134 : vector<16x512xf32> to vector<16x512xbf16>
      %cst_61 = arith.constant dense<0.000000e+00> : vector<32x512xf32>
      %137 = tpu.matmul %135, %136, %cst_61 {dimension_numbers = #tpu.dot_dimension_numbers<[1], [0], [0], [1], [0, 0, 1, 1], [], []>} : vector<32x16xbf16>, vector<16x512xbf16>, vector<32x512xf32> -> vector<32x512xf32>
      %cst_62 = arith.constant 0.000000e+00 : f32
      %138 = vector.broadcast %cst_62 : f32 to vector<32x512xf32>
      %139 = arith.maximumf %137, %138 : vector<32x512xf32>
      %c0_63 = arith.constant 0 : index
      %c0_64 = arith.constant 0 : index
      %c0_65 = arith.constant 0 : index
      %140 = vector.load %arg2[%c0_63, %c0_64, %c0_65] : memref<1x16x512xbf16, #tpu.memory_space<vmem>>, vector<1x16x512xbf16>
      %141 = vector.shape_cast %140 : vector<1x16x512xbf16> to vector<16x512xbf16>
      %142 = arith.extf %141 : vector<16x512xbf16> to vector<16x512xf32>
      %143 = vector.extract_strided_slice %139 {offsets = [0, 0], sizes = [16, 512], strides = [1, 1]} : vector<32x512xf32> to vector<16x512xf32>
      %144 = arith.mulf %143, %142 : vector<16x512xf32>
      %145 = arith.truncf %144 : vector<16x512xf32> to vector<16x512xbf16>
      %c0_66 = arith.constant 0 : index
      %c0_67 = arith.constant 0 : index
      %c0_68 = arith.constant 0 : index
      %146 = vector.load %arg18[%c0_66, %c0_67, %c0_68] : memref<1x32x512xbf16, #tpu.memory_space<vmem>>, vector<1x16x512xbf16>
      %147 = vector.shape_cast %146 : vector<1x16x512xbf16> to vector<16x512xbf16>
      %148 = vector.shape_cast %145 : vector<16x512xbf16> to vector<1x16x512xbf16>
      tpu.vector_store %arg18[%c0_66, %c0_67, %c0_68], %148 {strides = array<i32>} : memref<1x32x512xbf16, #tpu.memory_space<vmem>>, vector<1x16x512xbf16>,
      %149 = vector.extract_strided_slice %139 {offsets = [16, 0], sizes = [16, 512], strides = [1, 1]} : vector<32x512xf32> to vector<16x512xf32>
      %150 = arith.mulf %149, %142 : vector<16x512xf32>
      %151 = arith.truncf %150 : vector<16x512xf32> to vector<16x512xbf16>
      %c0_69 = arith.constant 0 : index
      %c16 = arith.constant 16 : index
      %c0_70 = arith.constant 0 : index
      %152 = vector.load %arg18[%c0_69, %c16, %c0_70] : memref<1x32x512xbf16, #tpu.memory_space<vmem>>, vector<1x16x512xbf16>
      %153 = vector.shape_cast %152 : vector<1x16x512xbf16> to vector<16x512xbf16>
      %154 = vector.shape_cast %151 : vector<16x512xbf16> to vector<1x16x512xbf16>
      tpu.vector_store %arg18[%c0_69, %c16, %c0_70], %154 {strides = array<i32>} : memref<1x32x512xbf16, #tpu.memory_space<vmem>>, vector<1x16x512xbf16>,
    } else {
    }
    return
  }
  func.func @transform_0(%arg0: i32, %arg1: i32) -> (i32, i32, i32) {
    %c0_i32 = arith.constant 0 : i32
    %c0_i32_0 = arith.constant 0 : i32
    %c0_i32_1 = arith.constant 0 : i32
    return %arg0, %c0_i32, %c0_i32_0 : i32, i32, i32
  }
  func.func @transform_1(%arg0: i32, %arg1: i32) -> (i32, i32) {
    %c0_i32 = arith.constant 0 : i32
    %c0_i32_0 = arith.constant 0 : i32
    %c0_i32_1 = arith.constant 0 : i32
    return %c0_i32, %c0_i32_0 : i32, i32
  }
  func.func @transform_2(%arg0: i32, %arg1: i32) -> (i32, i32) {
    %c0_i32 = arith.constant 0 : i32
    %c0_i32_0 = arith.constant 0 : i32
    %c0_i32_1 = arith.constant 0 : i32
    return %c0_i32, %c0_i32_0 : i32, i32
  }
  func.func @transform_3(%arg0: i32, %arg1: i32) -> (i32, i32) {
    %c0_i32 = arith.constant 0 : i32
    %c0_i32_0 = arith.constant 0 : i32
    %c0_i32_1 = arith.constant 0 : i32
    return %c0_i32, %c0_i32_0 : i32, i32
  }
  func.func @transform_4(%arg0: i32, %arg1: i32) -> (i32, i32) {
    %c0_i32 = arith.constant 0 : i32
    %c0_i32_0 = arith.constant 0 : i32
    %c0_i32_1 = arith.constant 0 : i32
    return %c0_i32, %c0_i32_0 : i32, i32
  }
  func.func @transform_5(%arg0: i32, %arg1: i32) -> (i32, i32, i32) {
    %c0_i32 = arith.constant 0 : i32
    %c0_i32_0 = arith.constant 0 : i32
    %c0_i32_1 = arith.constant 0 : i32
    return %arg1, %c0_i32, %c0_i32_0 : i32, i32, i32
  }
  func.func @transform_6(%arg0: i32, %arg1: i32) -> (i32, i32, i32) {
    %c0_i32 = arith.constant 0 : i32
    %c0_i32_0 = arith.constant 0 : i32
    %c0_i32_1 = arith.constant 0 : i32
    return %arg1, %c0_i32, %c0_i32_0 : i32, i32, i32
  }
  func.func @transform_7(%arg0: i32, %arg1: i32) -> (i32, i32, i32) {
    %c0_i32 = arith.constant 0 : i32
    %c0_i32_0 = arith.constant 0 : i32
    %c0_i32_1 = arith.constant 0 : i32
    return %arg1, %c0_i32, %c0_i32_0 : i32, i32, i32
  }
  func.func @transform_8(%arg0: i32, %arg1: i32) -> (i32, i32, i32) {
    %c0_i32 = arith.constant 0 : i32
    %c0_i32_0 = arith.constant 0 : i32
    %c0_i32_1 = arith.constant 0 : i32
    return %arg1, %c0_i32, %c0_i32_0 : i32, i32, i32
  }
  func.func @transform_9(%arg0: i32, %arg1: i32) -> (i32, i32, i32) {
    %c0_i32 = arith.constant 0 : i32
    %c0_i32_0 = arith.constant 0 : i32
    %c0_i32_1 = arith.constant 0 : i32
    return %arg1, %c0_i32, %c0_i32_0 : i32, i32, i32
  }
  func.func @transform_10(%arg0: i32, %arg1: i32) -> (i32, i32, i32) {
    %c0_i32 = arith.constant 0 : i32
    %c0_i32_0 = arith.constant 0 : i32
    %c0_i32_1 = arith.constant 0 : i32
    return %arg1, %c0_i32, %c0_i32_0 : i32, i32, i32
  }
  func.func @transform_11(%arg0: i32, %arg1: i32) -> (i32, i32, i32) {
    %c0_i32 = arith.constant 0 : i32
    %c0_i32_0 = arith.constant 0 : i32
    %c0_i32_1 = arith.constant 0 : i32
    return %arg1, %c0_i32, %c0_i32_0 : i32, i32, i32
  }
  func.func @transform_12(%arg0: i32, %arg1: i32) -> (i32, i32, i32) {
    %c0_i32 = arith.constant 0 : i32
    %c0_i32_0 = arith.constant 0 : i32
    %c0_i32_1 = arith.constant 0 : i32
    return %arg1, %c0_i32, %c0_i32_0 : i32, i32, i32
  }
  func.func @transform_13(%arg0: i32, %arg1: i32) -> (i32, i32) {
    %c0_i32 = arith.constant 0 : i32
    %c0_i32_0 = arith.constant 0 : i32
    %c0_i32_1 = arith.constant 0 : i32
    return %c0_i32, %c0_i32_0 : i32, i32
  }
  func.func @transform_14(%arg0: i32, %arg1: i32) -> i32 {
    %c0_i32 = arith.constant 0 : i32
    %c0_i32_0 = arith.constant 0 : i32
    return %c0_i32 : i32
  }
  func.func @transform_15(%arg0: i32, %arg1: i32) -> i32 {
    %c0_i32 = arith.constant 0 : i32
    %c0_i32_0 = arith.constant 0 : i32
    return %c0_i32 : i32
  }
  func.func @transform_16(%arg0: i32, %arg1: i32) -> (i32, i32, i32) {
    %c0_i32 = arith.constant 0 : i32
    %c0_i32_0 = arith.constant 0 : i32
    %c0_i32_1 = arith.constant 0 : i32
    return %arg0, %c0_i32, %c0_i32_0 : i32, i32, i32
  }
}

</mosaic_0001>

<llo_original>
// kernel: squeeze.1
$region0: #{squeeze.1}
  %s0 = inlined_call_operand.vmem [shape: f32[2,64], index: 0, kind: input, shape index: {}]
  %s1 = inlined_call_operand.vmem [shape: f32[2,16,4], index: 1, kind: output, shape index: {}]
  $region1: #{squeeze.1} parent=0
    #allocation0 [shape = 'u8[4096]{0}', space=vmem, size = 0x1000, scoped, tag = 'scoped mem for input reshape']
    %s3 = sshllo.u32 0, 2
    %v4 = vld [vmem:[%s0] sm:%s3]
    %5 = vst [vmem:[#allocation0] sm:%s3] %v4
    %v6 = vld [vmem:[#allocation0] sm:$0x3]
    %vm7 = vcmask 31744
    %8 = vst.msk [vmem:[%s1] ss:$16 sm:$0x3] %vm7, %v6
    %v9 = vld [vmem:[#allocation0] sm:$0x3]
    %10 = vrot.lane.b32.xlu0 %v9, 124
    %v11 = vpop.permute.xlu0 %10
    %vm12 = vcmask 31744
    %s13 = scalar_lea.vmem %s1, 1
    %14 = vst.msk [vmem:[%s13] ss:$16 sm:$0x3] %vm12, %v11
    %v15 = vld [vmem:[#allocation0] sm:$0x3]
    %16 = vrot.lane.b32.xlu0 %v15, 120
    %v17 = vpop.permute.xlu0 %16
    %vm18 = vcmask 31744
    %s19 = scalar_lea.vmem %s1, 2
    %20 = vst.msk [vmem:[%s19] ss:$16 sm:$0x3] %vm18, %v17
    %v21 = vld [vmem:[#allocation0] sm:$0x3]
    %22 = vrot.lane.b32.xlu0 %v21, 116
    %v23 = vpop.permute.xlu0 %22
    %vm24 = vcmask 31744
    %s25 = scalar_lea.vmem %s1, 3
    %26 = vst.msk [vmem:[%s25] ss:$16 sm:$0x3] %vm24, %v23
    %v27 = vld [vmem:[#allocation0] sm:$0x3]
    %28 = vrot.lane.b32.xlu0 %v27, 112
    %v29 = vpop.permute.xlu0 %28
    %vm30 = vcmask 31744
    %s31 = scalar_lea.vmem %s1, 4
    %32 = vst.msk [vmem:[%s31] ss:$16 sm:$0x3] %vm30, %v29
    %v33 = vld [vmem:[#allocation0] sm:$0x3]
    %34 = vrot.lane.b32.xlu0 %v33, 108
    %v35 = vpop.permute.xlu0 %34
    %vm36 = vcmask 31744
    %s37 = scalar_lea.vmem %s1, 5
    %38 = vst.msk [vmem:[%s37] ss:$16 sm:$0x3] %vm36, %v35
    %v39 = vld [vmem:[#allocation0] sm:$0x3]
    %40 = vrot.lane.b32.xlu0 %v39, 104
    %v41 = vpop.permute.xlu0 %40
    %vm42 = vcmask 31744
    %s43 = scalar_lea.vmem %s1, 6
    %44 = vst.msk [vmem:[%s43] ss:$16 sm:$0x3] %vm42, %v41
    %v45 = vld [vmem:[#allocation0] sm:$0x3]
    %46 = vrot.lane.b32.xlu0 %v45, 100
    %v47 = vpop.permute.xlu0 %46
    %vm48 = vcmask 31744
    %s49 = scalar_lea.vmem %s1, 7
    %50 = vst.msk [vmem:[%s49] ss:$16 sm:$0x3] %vm48, %v47
    %v51 = vld [vmem:[#allocation0] sm:$0x3]
    %52 = vrot.lane.b32.xlu0 %v51, 96
    %v53 = vpop.permute.xlu0 %52
    %vm54 = vcmask 31744
    %s55 = scalar_lea.vmem %s1, 8
    %56 = vst.msk [vmem:[%s55] ss:$16 sm:$0x3] %vm54, %v53
    %v57 = vld [vmem:[#allocation0] sm:$0x3]
    %58 = vrot.lane.b32.xlu0 %v57, 92
    %v59 = vpop.permute.xlu0 %58
    %vm60 = vcmask 31744
    %s61 = scalar_lea.vmem %s1, 9
    %62 = vst.msk [vmem:[%s61] ss:$16 sm:$0x3] %vm60, %v59
    %v63 = vld [vmem:[#allocation0] sm:$0x3]
    %64 = vrot.lane.b32.xlu0 %v63, 88
    %v65 = vpop.permute.xlu0 %64
    %vm66 = vcmask 31744
    %s67 = scalar_lea.vmem %s1, 10
    %68 = vst.msk [vmem:[%s67] ss:$16 sm:$0x3] %vm66, %v65
    %v69 = vld [vmem:[#allocation0] sm:$0x3]
    %70 = vrot.lane.b32.xlu0 %v69, 84
    %v71 = vpop.permute.xlu0 %70
    %vm72 = vcmask 31744
    %s73 = scalar_lea.vmem %s1, 11
    %74 = vst.msk [vmem:[%s73] ss:$16 sm:$0x3] %vm72, %v71
    %v75 = vld [vmem:[#allocation0] sm:$0x3]
    %76 = vrot.lane.b32.xlu0 %v75, 80
    %v77 = vpop.permute.xlu0 %76
    %vm78 = vcmask 31744
    %s79 = scalar_lea.vmem %s1, 12
    %80 = vst.msk [vmem:[%s79] ss:$16 sm:$0x3] %vm78, %v77
    %v81 = vld [vmem:[#allocation0] sm:$0x3]
    %82 = vrot.lane.b32.xlu0 %v81, 76
    %v83 = vpop.permute.xlu0 %82
    %vm84 = vcmask 31744
    %s85 = scalar_lea.vmem %s1, 13
    %86 = vst.msk [vmem:[%s85] ss:$16 sm:$0x3] %vm84, %v83
    %v87 = vld [vmem:[#allocation0] sm:$0x3]
    %88 = vrot.lane.b32.xlu0 %v87, 72
    %v89 = vpop.permute.xlu0 %88
    %vm90 = vcmask 31744
    %s91 = scalar_lea.vmem %s1, 14
    %92 = vst.msk [vmem:[%s91] ss:$16 sm:$0x3] %vm90, %v89
    %v93 = vld [vmem:[#allocation0] sm:$0x3]
    %94 = vrot.lane.b32.xlu0 %v93, 68
    %v95 = vpop.permute.xlu0 %94
    %vm96 = vcmask 31744
    %s97 = scalar_lea.vmem %s1, 15
    %98 = vst.msk [vmem:[%s97] ss:$16 sm:$0x3] %vm96, %v95

// kernel: conv_tasnet_forward.3
$region0: #{conv_tasnet_forward.3}
  #allocation0 [shape = 'u32[]', space=smem, size = 0x4, offset = 0x4, fixed_abs, tag = 'smem constant byte address 0x4 - core index']
  #allocation1 [shape = 'u32[144,128]{1,0:T(1,128)}', space=vmem, size = 0x12000, scoped, tag = 'internal scratch']
  %s0 = inlined_call_operand.vmem [shape: f32[2,8,512], index: 0, kind: input, shape index: {}]
  %s1 = inlined_call_operand.vmem [shape: bf16[16,8], index: 1, kind: input, shape index: {}]
  %s2 = inlined_call_operand.vmem [shape: bf16[2,16,512], index: 2, kind: output, shape index: {}]
  %s3 = sld [smem:[#allocation0]]
  $region41: #{conv_tasnet_forward.3} parent=0
    _
  %s5 = ssub.s32 1, %s3
  %s6 = scalar_select 0, %s5, %s3
  loop: start=0, step=1, limit=4
  $region2: #{conv_tasnet_forward.3} parent=0 // loop_pre_header
    _
  $region3: #{conv_tasnet_forward.3} parent=0 // loop_header
    %s8 = sphi 0, %s12
    %p9 = scmp.ge.s32.totalorder %s8, 4
    %s15 = sphi 0, %s27
    %s16 = sphi 0, %s23
    %s17 = sphi 0, %s15
    %s18 = sphi 0, %s16
    %s19 = sphi 0, %s17
    %s20 = sphi 0, %s18
    %s32 = sphi 0, %s34
    %s35 = sphi 0, %s32
    %s36 = sphi 0, %s35
    %s52 = sphi 0, %s36
    %s56 = sphi 0, %s56
    %s58 = sphi 0, %s56
    %s59 = sphi 0, %s58
    %s73 = sphi 0, %s59
    %s81 = sphi 0, %s83
    %s84 = sphi 0, %s81
    %s85 = sphi 0, %s84
    %s101 = sphi 0, %s85
  $region4: #{conv_tasnet_forward.3} parent=0 // loop_header_branch
    %11 = sbr.rel (%p9) target = $region8
  $region5: #{conv_tasnet_forward.3} parent=0 // loop_body
    %s13 = ssub.s32 %s8, 1
    %s14 = ssub.s32 %s8, 2
    %s21 = sadd.s32 1, %s16
    %p22 = scmp.ge.s32.totalorder %s21, 1
    %s23 = scalar_select %p22, 0, %s21
    %s24 = sadd.s32 1, %s15
    %s25 = scalar_select %p22, %s24, %s15
    %p26 = scmp.ge.s32.totalorder %s25, 2
    %s27 = scalar_select %p26, 0, %s25
    %s28 = ssub.s32 %s15, %s27
    %s29 = ssub.s32 %s16, %s23
    %s30 = sor.u32 %s28, %s29
    %p31 = scmp.eq.s32.totalorder %s30, 0
    %s33 = sadd.s32 %s32, 1
    %s34 = scalar_select %p31, %s32, %s33
    %p37 = pneg %p31
    %p38 = scmp.eq.s32.totalorder %s8, 1
    %p39 = por %p37, %p38
    %p40 = scmp.ne.s32.totalorder %s32, %s35
    %p41 = scmp.eq.s32.totalorder %s8, 0
    %p42 = por %p40, %p41
    %p43 = scmp.ne.s32.totalorder %s32, %s35
    %p44 = scmp.eq.s32.totalorder %s13, 1
    %p45 = por %p43, %p44
    %p46 = scmp.ne.s32.totalorder %s35, %s36
    %p47 = scmp.eq.s32.totalorder %s13, 0
    %p48 = por %p46, %p47
    %p49 = scmp.ne.s32.totalorder %s35, %s36
    %p50 = scmp.eq.s32.totalorder %s14, 1
    %p51 = por %p49, %p50
    %p53 = scmp.ne.s32.totalorder %s36, %s52
    %p54 = scmp.eq.s32.totalorder %s14, 0
    %p55 = por %p53, %p54
    %s57 = sadd.s32 %s56, 1
    %p60 = scmp.eq.s32.totalorder %s8, 1
    %p61 = scmp.ne.s32.totalorder %s56, %s58
    %p62 = scmp.eq.s32.totalorder %s8, 0
    %p63 = por %p61, %p62
    %p64 = scmp.ne.s32.totalorder %s56, %s58
    %p65 = scmp.eq.s32.totalorder %s13, 1
    %p66 = por %p64, %p65
    %p67 = scmp.ne.s32.totalorder %s58, %s59
    %p68 = scmp.eq.s32.totalorder %s13, 0
    %p69 = por %p67, %p68
    %p70 = scmp.ne.s32.totalorder %s58, %s59
    %p71 = scmp.eq.s32.totalorder %s14, 1
    %p72 = por %p70, %p71
    %p74 = scmp.ne.s32.totalorder %s59, %s73
    %p75 = scmp.eq.s32.totalorder %s14, 0
    %p76 = por %p74, %p75
    %s77 = ssub.s32 %s15, %s27
    %s78 = ssub.s32 %s16, %s23
    %s79 = sor.u32 %s77, %s78
    %p80 = scmp.eq.s32.totalorder %s79, 0
    %s82 = sadd.s32 %s81, 1
    %s83 = scalar_select %p80, %s81, %s82
    %p86 = pneg %p80
    %p87 = scmp.eq.s32.totalorder %s8, 1
    %p88 = por %p86, %p87
    %p89 = scmp.ne.s32.totalorder %s81, %s84
    %p90 = scmp.eq.s32.totalorder %s8, 0
    %p91 = por %p89, %p90
    %p92 = scmp.ne.s32.totalorder %s81, %s84
    %p93 = scmp.eq.s32.totalorder %s13, 1
    %p94 = por %p92, %p93
    %p95 = scmp.ne.s32.totalorder %s84, %s85
    %p96 = scmp.eq.s32.totalorder %s13, 0
    %p97 = por %p95, %p96
    %p98 = scmp.ne.s32.totalorder %s84, %s85
    %p99 = scmp.eq.s32.totalorder %s14, 1
    %p100 = por %p98, %p99
    %p102 = scmp.ne.s32.totalorder %s85, %s101
    %p103 = scmp.eq.s32.totalorder %s14, 0
    %p104 = por %p102, %p103
    %p105 = scmp.le.s32.totalorder 1, %s8
    %p106 = scmp.lt.s32.totalorder %s8, 3
    %p107 = pnand %p105, %p106
    %p108 = pneg %p107
    // Predicated region
    $region9: #{conv_tasnet_forward.3} parent=5 // pred_check
      _
    $region10: #{conv_tasnet_forward.3} parent=5 // pred_check_branch
      %110 = sbr.rel (%p107) target = $region12
    $region11: #{conv_tasnet_forward.3} parent=5 // pred_region
      %s111 = ssub.s32 %s8, 1
      // Predicated region
      $region13: #{conv_tasnet_forward.3} parent=11 // pred_check
        %p112 = pneg %p69
      $region14: #{conv_tasnet_forward.3} parent=11 // pred_check_branch
        %114 = sbr.rel (%p112) target = $region16
      $region15: #{conv_tasnet_forward.3} parent=11 // pred_region
        _
      $region16: #{conv_tasnet_forward.3} parent=11 // pred_fallthru
        _
    $region12: #{conv_tasnet_forward.3} parent=5 // pred_fallthru
      _
    %p115 = scmp.lt.s32.totalorder %s8, 2
    // Predicated region
    $region17: #{conv_tasnet_forward.3} parent=5 // pred_check
      %p116 = pneg %p115
    $region18: #{conv_tasnet_forward.3} parent=5 // pred_check_branch
      %118 = sbr.rel (%p116) target = $region20
    $region19: #{conv_tasnet_forward.3} parent=5 // pred_region
      // Predicated region
      $region21: #{conv_tasnet_forward.3} parent=19 // pred_check
        %p119 = pneg %p42
      $region22: #{conv_tasnet_forward.3} parent=19 // pred_check_branch
        %121 = sbr.rel (%p119) target = $region24
      $region23: #{conv_tasnet_forward.3} parent=19 // pred_region
        %s122 = smul.u32 4, %s16
        %p123 = scmp.lt.s32.totalorder %s15, 1
        %s124 = scalar_select %p123, %s15, 1
        %p125 = scmp.lt.s32.totalorder %s122, 3
        %s126 = scalar_select %p125, %s122, 3
        %s127 = smul.addr %s124, 4
        %s128 = sadd.s32 %s126, %s127
        %s129 = smul.addr %s128, 8
        %s130 = scalar_lea.vmem %s0, %s129
        %s131 = smul.u32 4, %s16
      $region24: #{conv_tasnet_forward.3} parent=19 // pred_fallthru
        _
    $region20: #{conv_tasnet_forward.3} parent=5 // pred_fallthru
      _
    %p132 = scmp.le.s32.totalorder 1, %s8
    %p133 = scmp.lt.s32.totalorder %s8, 3
    %p134 = pnand %p132, %p133
    %p135 = pneg %p134
    // Predicated region
    $region25: #{conv_tasnet_forward.3} parent=5 // pred_check
      _
    $region26: #{conv_tasnet_forward.3} parent=5 // pred_check_branch
      %137 = sbr.rel (%p134) target = $region28
    $region27: #{conv_tasnet_forward.3} parent=5 // pred_region
      %s138 = ssub.s32 %s8, 1
      %s139 = smul.u32 4, %s18
      %p140 = scmp.lt.s32.totalorder %s17, 1
      %s141 = scalar_select %p140, %s17, 1
      %p142 = scmp.lt.s32.totalorder %s139, 3
      %s143 = scalar_select %p142, %s139, 3
      %s144 = smul.addr %s141, 4
      %s145 = sadd.s32 %s143, %s144
      %s146 = smul.addr %s145, 8
      %s147 = scalar_lea.vmem %s0, %s146
      %p148 = pneg %p48
      %p149 = pneg %p45
      %p150 = pneg %p69
      %p151 = pneg %p66
      %p152 = pneg %p97
      %p153 = pneg %p94
      %s154 = smul.u32 4, %s18
      %p155 = scmp.lt.s32.totalorder %s17, 1
      %s156 = scalar_select %p155, %s17, 1
      %p157 = scmp.lt.s32.totalorder %s154, 3
      %s158 = scalar_select %p157, %s154, 3
      %s159 = smul.addr %s156, 8
      %s160 = sadd.s32 %s158, %s159
      %s161 = smul.addr %s160, 4
      %s162 = scalar_lea.vmem %s2, %s161
      %s163 = smul.u32 4, %s18
      %p164 = scmp.lt.s32.totalorder %s17, 1
      %s165 = scalar_select %p164, %s17, 1
      %p166 = scmp.lt.s32.totalorder %s163, 3
      %s167 = scalar_select %p166, %s163, 3
      %s168 = smul.addr %s165, 4
      %s169 = sadd.s32 %s167, %s168
      %s170 = smul.addr %s169, 8
      %s171 = scalar_lea.vmem %s0, %s170
      %s172 = smul.u32 4, %s18
      %s173 = smul.u32 4, %s18
      %p174 = scmp.lt.s32.totalorder %s17, 1
      %s175 = scalar_select %p174, %s17, 1
      %p176 = scmp.lt.s32.totalorder %s173, 3
      %s177 = scalar_select %p176, %s173, 3
      %s178 = smul.addr %s175, 8
      %s179 = sadd.s32 %s177, %s178
      %s180 = smul.addr %s179, 4
      %s181 = scalar_lea.vmem %s2, %s180
      %s182 = smul.u32 4, %s18
      %v184 = vld [vmem:[%s1] sm:$0xf]
      %v185 = vld [vmem:[%s1 + $0x4] sm:$0xf]
      %v186 = vld [vmem:[%s171] sm:$0xff]
      %v187 = vld [vmem:[%s171 + $0x8] sm:$0xff]
      %v188 = vld [vmem:[%s171 + $0x10] sm:$0xff]
      %v189 = vld [vmem:[%s171 + $0x18] sm:$0xff]
      %v190 = vpack.c.bf16 %v186, %v186
      %v191 = vpack.c.bf16 %v187, %v187
      %v192 = vpack.c.bf16 %v188, %v188
      %v193 = vpack.c.bf16 %v189, %v189
      %v196 = vunpack.c.l.b16 %v184
      %v197 = vunpack.c.l.b16 %v185
      %v198 = vpack.c.b16 %v197, %v196
      %vm199 = vcmask 64512
      %v201 = vsel %vm199, %v198, 0
      %vm203 = vcmask 1043456
      %v205 = vsel %vm203, %v190, 0
      %v208 = vsel %vm203, %v191, 0
      %v211 = vsel %vm203, %v192, 0
      %v214 = vsel %vm203, %v193, 0
      %216 = vmatprep.subr.bf16.mxu0 %v208
      %217 = vmatpush1.bf16.msra.mxu0 %v205
      %218 = vmatprep.subr.bf16.mxu0 0
      %219 = vmatpush1.bf16.msra.mxu0 0
      %220 = vmatprep.subr.bf16.mxu0 0
      %221 = vmatpush1.bf16.msra.mxu0 0
      %222 = vmatprep.subr.bf16.mxu0 0
      %223 = vmatpush1.bf16.msra.mxu0 0
      %224 = vmatprep.subr.bf16.mxu0 0
      %225 = vmatpush1.bf16.msra.mxu0 0
      %226 = vmatprep.subr.bf16.mxu0 0
      %227 = vmatpush1.bf16.msra.mxu0 0
      %228 = vmatprep.subr.bf16.mxu0 0
      %229 = vmatpush1.bf16.msra.mxu0 0
      %230 = vmatprep.subr.bf16.mxu0 0
      %231 = vmatpush1.bf16.msra.mxu0 0
      %232 = vmatprep.subr.bf16.mxu0 0
      %233 = vmatpush1.bf16.msra.mxu0 0
      %234 = vmatprep.subr.bf16.mxu0 0
      %235 = vmatpush1.bf16.msra.mxu0 0
      %236 = vmatprep.subr.bf16.mxu0 0
      %237 = vmatpush1.bf16.msra.mxu0 0
      %238 = vmatprep.subr.bf16.mxu0 0
      %239 = vmatpush1.bf16.msra.mxu0 0
      %240 = vmatprep.subr.bf16.mxu0 0
      %241 = vmatpush1.bf16.msra.mxu0 0
      %242 = vmatprep.subr.bf16.mxu0 0
      %243 = vmatpush1.bf16.msra.mxu0 0
      %244 = vmatprep.subr.bf16.mxu0 0
      %245 = vmatpush1.bf16.msra.mxu0 0
      %246 = vmatprep.subr.bf16.mxu0 0
      %247 = vmatpush1.bf16.msra.mxu0 0
      %248 = vmatprep.mubr.bf16.mxu0 0
      %249 = vmatmul.mubr.bf16.gmra.mrb[0].mxu0 %v201
      %v250 = vpop.f32.mrb[0].mxu0
      %v251 = vadd.f32 0.0, %v250
      %v252 = vpop.f32.mrb[0].mxu0
      %v253 = vadd.f32 0.0, %v252
      %v254 = vpop.f32.mrb[0].mxu0
      %v255 = vadd.f32 0.0, %v254
      %v256 = vpop.f32.mrb[0].mxu0
      %v257 = vadd.f32 0.0, %v256
      %258 = vdwg.mxu0
      %259 = vmatprep.subr.bf16.mxu0 %v214
      %260 = vmatpush1.bf16.msra.mxu0 %v211
      %261 = vmatprep.subr.bf16.mxu0 0
      %262 = vmatpush1.bf16.msra.mxu0 0
      %263 = vmatprep.subr.bf16.mxu0 0
      %264 = vmatpush1.bf16.msra.mxu0 0
      %265 = vmatprep.subr.bf16.mxu0 0
      %266 = vmatpush1.bf16.msra.mxu0 0
      %267 = vmatprep.subr.bf16.mxu0 0
      %268 = vmatpush1.bf16.msra.mxu0 0
      %269 = vmatprep.subr.bf16.mxu0 0
      %270 = vmatpush1.bf16.msra.mxu0 0
      %271 = vmatprep.subr.bf16.mxu0 0
      %272 = vmatpush1.bf16.msra.mxu0 0
      %273 = vmatprep.subr.bf16.mxu0 0
      %274 = vmatpush1.bf16.msra.mxu0 0
      %275 = vmatprep.subr.bf16.mxu0 0
      %276 = vmatpush1.bf16.msra.mxu0 0
      %277 = vmatprep.subr.bf16.mxu0 0
      %278 = vmatpush1.bf16.msra.mxu0 0
      %279 = vmatprep.subr.bf16.mxu0 0
      %280 = vmatpush1.bf16.msra.mxu0 0
      %281 = vmatprep.subr.bf16.mxu0 0
      %282 = vmatpush1.bf16.msra.mxu0 0
      %283 = vmatprep.subr.bf16.mxu0 0
      %284 = vmatpush1.bf16.msra.mxu0 0
      %285 = vmatprep.subr.bf16.mxu0 0
      %286 = vmatpush1.bf16.msra.mxu0 0
      %287 = vmatprep.subr.bf16.mxu0 0
      %288 = vmatpush1.bf16.msra.mxu0 0
      %289 = vmatprep.subr.bf16.mxu0 0
      %290 = vmatpush1.bf16.msra.mxu0 0
      %291 = vmatprep.mubr.bf16.mxu0 0
      %292 = vmatmul.mubr.bf16.gmra.mrb[0].mxu0 %v201
      %v293 = vpop.f32.mrb[0].mxu0
      %v294 = vadd.f32 0.0, %v293
      %v295 = vpop.f32.mrb[0].mxu0
      %v296 = vadd.f32 0.0, %v295
      %v297 = vpop.f32.mrb[0].mxu0
      %v298 = vadd.f32 0.0, %v297
      %v299 = vpop.f32.mrb[0].mxu0
      %v300 = vadd.f32 0.0, %v299
      %301 = vdwg.mxu0
      %v302 = vmax.f32 %v251, 0.0
      %v303 = vmax.f32 %v253, 0.0
      %v304 = vmax.f32 %v294, 0.0
      %v305 = vmax.f32 %v296, 0.0
      %v306 = vmax.f32 %v255, 0.0
      %v307 = vmax.f32 %v257, 0.0
      %v308 = vmax.f32 %v298, 0.0
      %v309 = vmax.f32 %v300, 0.0
      %v310 = vpack.c.bf16 %v306, %v302
      %v311 = vpack.c.bf16 %v307, %v303
      %v312 = vpack.c.bf16 %v308, %v304
      %v313 = vpack.c.bf16 %v309, %v305
      %v318 = vunpack.c.l.b16 %v310
      %v319 = vunpack.c.l.b16 %v311
      %v320 = vunpack.c.l.b16 %v312
      %v321 = vunpack.c.l.b16 %v313
      %v322 = vunpack.c.h.b16 %v310
      %v323 = vunpack.c.h.b16 %v311
      %v324 = vunpack.c.h.b16 %v312
      %v325 = vunpack.c.h.b16 %v313
      %v326 = vpack.c.b16 %v319, %v318
      %v327 = vpack.c.b16 %v321, %v320
      %v328 = vpack.c.b16 %v323, %v322
      %v329 = vpack.c.b16 %v325, %v324
      %334 = vst [vmem:[%s181] sm:$0xff] %v326
      %335 = vst [vmem:[%s181 + $0x8] sm:$0xff] %v327
      %336 = vst [vmem:[%s181 + $0x10] sm:$0xff] %v328
      %337 = vst [vmem:[%s181 + $0x18] sm:$0xff] %v329
      %s338 = smul.u32 4, %s18
      %p339 = scmp.lt.s32.totalorder %s17, 1
      %s340 = scalar_select %p339, %s17, 1
      %p341 = scmp.lt.s32.totalorder %s338, 3
      %s342 = scalar_select %p341, %s338, 3
      %s343 = smul.addr %s340, 8
      %s344 = sadd.s32 %s342, %s343
      %s345 = smul.addr %s344, 4
      %s346 = scalar_lea.vmem %s2, %s345
      // Predicated region
      $region29: #{conv_tasnet_forward.3} parent=27 // pred_check
        %p347 = pneg %p94
      $region30: #{conv_tasnet_forward.3} parent=27 // pred_check_branch
        %349 = sbr.rel (%p347) target = $region32
      $region31: #{conv_tasnet_forward.3} parent=27 // pred_region
        %s350 = smul.u32 4, %s18
      $region32: #{conv_tasnet_forward.3} parent=27 // pred_fallthru
        _
    $region28: #{conv_tasnet_forward.3} parent=5 // pred_fallthru
      _
    %p351 = scmp.le.s32.totalorder 2, %s8
    // Predicated region
    $region33: #{conv_tasnet_forward.3} parent=5 // pred_check
      %p352 = pneg %p351
    $region34: #{conv_tasnet_forward.3} parent=5 // pred_check_branch
      %354 = sbr.rel (%p352) target = $region36
    $region35: #{conv_tasnet_forward.3} parent=5 // pred_region
      %s355 = ssub.s32 %s8, 2
      // Predicated region
      $region37: #{conv_tasnet_forward.3} parent=35 // pred_check
        %p356 = pneg %p100
      $region38: #{conv_tasnet_forward.3} parent=35 // pred_check_branch
        %358 = sbr.rel (%p356) target = $region40
      $region39: #{conv_tasnet_forward.3} parent=35 // pred_region
        %s359 = smul.u32 4, %s20
        %p360 = scmp.lt.s32.totalorder %s19, 1
        %s361 = scalar_select %p360, %s19, 1
        %p362 = scmp.lt.s32.totalorder %s359, 3
        %s363 = scalar_select %p362, %s359, 3
        %s364 = smul.addr %s361, 8
        %s365 = sadd.s32 %s363, %s364
        %s366 = smul.addr %s365, 4
        %s367 = scalar_lea.vmem %s2, %s366
      $region40: #{conv_tasnet_forward.3} parent=35 // pred_fallthru
        _
    $region36: #{conv_tasnet_forward.3} parent=5 // pred_fallthru
      _
  $region6: #{conv_tasnet_forward.3} parent=0 // loop_footer
    %s12 = sadd.s32 1, %s8
  $region7: #{conv_tasnet_forward.3} parent=0 // loop_footer_branch
    %7 = sbr.rel target = $region3
  $region8: #{conv_tasnet_forward.3} parent=0 // loop_exit
    _

// kernel: conv_tasnet_forward.5
$region0: #{conv_tasnet_forward.5}
  #allocation0 [shape = 'u32[]', space=smem, size = 0x4, offset = 0x4, fixed_abs, tag = 'smem constant byte address 0x4 - core index']
  #allocation1 [shape = 'u32[144,128]{1,0:T(1,128)}', space=vmem, size = 0x12000, scoped, tag = 'internal scratch']
  %s0 = inlined_call_operand.vmem [shape: bf16[2,32,512], index: 0, kind: input, shape index: {}]
  %s1 = inlined_call_operand.vmem [shape: bf16[16,32], index: 1, kind: input, shape index: {}]
  %s2 = inlined_call_operand.vmem [shape: f32[2,16,512], index: 2, kind: output, shape index: {}]
  %s3 = sld [smem:[#allocation0]]
  $region41: #{conv_tasnet_forward.5} parent=0
    _
  %s5 = ssub.s32 1, %s3
  %s6 = scalar_select 0, %s5, %s3
  loop: start=0, step=1, limit=4
  $region2: #{conv_tasnet_forward.5} parent=0 // loop_pre_header
    _
  $region3: #{conv_tasnet_forward.5} parent=0 // loop_header
    %s8 = sphi 0, %s12
    %p9 = scmp.ge.s32.totalorder %s8, 4
    %s15 = sphi 0, %s27
    %s16 = sphi 0, %s23
    %s17 = sphi 0, %s15
    %s18 = sphi 0, %s16
    %s19 = sphi 0, %s17
    %s20 = sphi 0, %s18
    %s32 = sphi 0, %s34
    %s35 = sphi 0, %s32
    %s36 = sphi 0, %s35
    %s52 = sphi 0, %s36
    %s56 = sphi 0, %s56
    %s58 = sphi 0, %s56
    %s59 = sphi 0, %s58
    %s73 = sphi 0, %s59
    %s81 = sphi 0, %s83
    %s84 = sphi 0, %s81
    %s85 = sphi 0, %s84
    %s101 = sphi 0, %s85
  $region4: #{conv_tasnet_forward.5} parent=0 // loop_header_branch
    %11 = sbr.rel (%p9) target = $region8
  $region5: #{conv_tasnet_forward.5} parent=0 // loop_body
    %s13 = ssub.s32 %s8, 1
    %s14 = ssub.s32 %s8, 2
    %s21 = sadd.s32 1, %s16
    %p22 = scmp.ge.s32.totalorder %s21, 1
    %s23 = scalar_select %p22, 0, %s21
    %s24 = sadd.s32 1, %s15
    %s25 = scalar_select %p22, %s24, %s15
    %p26 = scmp.ge.s32.totalorder %s25, 2
    %s27 = scalar_select %p26, 0, %s25
    %s28 = ssub.s32 %s15, %s27
    %s29 = ssub.s32 %s16, %s23
    %s30 = sor.u32 %s28, %s29
    %p31 = scmp.eq.s32.totalorder %s30, 0
    %s33 = sadd.s32 %s32, 1
    %s34 = scalar_select %p31, %s32, %s33
    %p37 = pneg %p31
    %p38 = scmp.eq.s32.totalorder %s8, 1
    %p39 = por %p37, %p38
    %p40 = scmp.ne.s32.totalorder %s32, %s35
    %p41 = scmp.eq.s32.totalorder %s8, 0
    %p42 = por %p40, %p41
    %p43 = scmp.ne.s32.totalorder %s32, %s35
    %p44 = scmp.eq.s32.totalorder %s13, 1
    %p45 = por %p43, %p44
    %p46 = scmp.ne.s32.totalorder %s35, %s36
    %p47 = scmp.eq.s32.totalorder %s13, 0
    %p48 = por %p46, %p47
    %p49 = scmp.ne.s32.totalorder %s35, %s36
    %p50 = scmp.eq.s32.totalorder %s14, 1
    %p51 = por %p49, %p50
    %p53 = scmp.ne.s32.totalorder %s36, %s52
    %p54 = scmp.eq.s32.totalorder %s14, 0
    %p55 = por %p53, %p54
    %s57 = sadd.s32 %s56, 1
    %p60 = scmp.eq.s32.totalorder %s8, 1
    %p61 = scmp.ne.s32.totalorder %s56, %s58
    %p62 = scmp.eq.s32.totalorder %s8, 0
    %p63 = por %p61, %p62
    %p64 = scmp.ne.s32.totalorder %s56, %s58
    %p65 = scmp.eq.s32.totalorder %s13, 1
    %p66 = por %p64, %p65
    %p67 = scmp.ne.s32.totalorder %s58, %s59
    %p68 = scmp.eq.s32.totalorder %s13, 0
    %p69 = por %p67, %p68
    %p70 = scmp.ne.s32.totalorder %s58, %s59
    %p71 = scmp.eq.s32.totalorder %s14, 1
    %p72 = por %p70, %p71
    %p74 = scmp.ne.s32.totalorder %s59, %s73
    %p75 = scmp.eq.s32.totalorder %s14, 0
    %p76 = por %p74, %p75
    %s77 = ssub.s32 %s15, %s27
    %s78 = ssub.s32 %s16, %s23
    %s79 = sor.u32 %s77, %s78
    %p80 = scmp.eq.s32.totalorder %s79, 0
    %s82 = sadd.s32 %s81, 1
    %s83 = scalar_select %p80, %s81, %s82
    %p86 = pneg %p80
    %p87 = scmp.eq.s32.totalorder %s8, 1
    %p88 = por %p86, %p87
    %p89 = scmp.ne.s32.totalorder %s81, %s84
    %p90 = scmp.eq.s32.totalorder %s8, 0
    %p91 = por %p89, %p90
    %p92 = scmp.ne.s32.totalorder %s81, %s84
    %p93 = scmp.eq.s32.totalorder %s13, 1
    %p94 = por %p92, %p93
    %p95 = scmp.ne.s32.totalorder %s84, %s85
    %p96 = scmp.eq.s32.totalorder %s13, 0
    %p97 = por %p95, %p96
    %p98 = scmp.ne.s32.totalorder %s84, %s85
    %p99 = scmp.eq.s32.totalorder %s14, 1
    %p100 = por %p98, %p99
    %p102 = scmp.ne.s32.totalorder %s85, %s101
    %p103 = scmp.eq.s32.totalorder %s14, 0
    %p104 = por %p102, %p103
    %p105 = scmp.le.s32.totalorder 1, %s8
    %p106 = scmp.lt.s32.totalorder %s8, 3
    %p107 = pnand %p105, %p106
    %p108 = pneg %p107
    // Predicated region
    $region9: #{conv_tasnet_forward.5} parent=5 // pred_check
      _
    $region10: #{conv_tasnet_forward.5} parent=5 // pred_check_branch
      %110 = sbr.rel (%p107) target = $region12
    $region11: #{conv_tasnet_forward.5} parent=5 // pred_region
      %s111 = ssub.s32 %s8, 1
      // Predicated region
      $region13: #{conv_tasnet_forward.5} parent=11 // pred_check
        %p112 = pneg %p69
      $region14: #{conv_tasnet_forward.5} parent=11 // pred_check_branch
        %114 = sbr.rel (%p112) target = $region16
      $region15: #{conv_tasnet_forward.5} parent=11 // pred_region
        _
      $region16: #{conv_tasnet_forward.5} parent=11 // pred_fallthru
        _
    $region12: #{conv_tasnet_forward.5} parent=5 // pred_fallthru
      _
    %p115 = scmp.lt.s32.totalorder %s8, 2
    // Predicated region
    $region17: #{conv_tasnet_forward.5} parent=5 // pred_check
      %p116 = pneg %p115
    $region18: #{conv_tasnet_forward.5} parent=5 // pred_check_branch
      %118 = sbr.rel (%p116) target = $region20
    $region19: #{conv_tasnet_forward.5} parent=5 // pred_region
      // Predicated region
      $region21: #{conv_tasnet_forward.5} parent=19 // pred_check
        %p119 = pneg %p42
      $region22: #{conv_tasnet_forward.5} parent=19 // pred_check_branch
        %121 = sbr.rel (%p119) target = $region24
      $region23: #{conv_tasnet_forward.5} parent=19 // pred_region
        %s122 = smul.u32 4, %s16
        %p123 = scmp.lt.s32.totalorder %s15, 1
        %s124 = scalar_select %p123, %s15, 1
        %p125 = scmp.lt.s32.totalorder %s122, 3
        %s126 = scalar_select %p125, %s122, 3
        %s127 = smul.addr %s124, 16
        %s128 = sadd.s32 %s126, %s127
        %s129 = smul.addr %s128, 4
        %s130 = scalar_lea.vmem %s0, %s129
        %s131 = smul.u32 4, %s16
      $region24: #{conv_tasnet_forward.5} parent=19 // pred_fallthru
        _
    $region20: #{conv_tasnet_forward.5} parent=5 // pred_fallthru
      _
    %p132 = scmp.le.s32.totalorder 1, %s8
    %p133 = scmp.lt.s32.totalorder %s8, 3
    %p134 = pnand %p132, %p133
    %p135 = pneg %p134
    // Predicated region
    $region25: #{conv_tasnet_forward.5} parent=5 // pred_check
      _
    $region26: #{conv_tasnet_forward.5} parent=5 // pred_check_branch
      %137 = sbr.rel (%p134) target = $region28
    $region27: #{conv_tasnet_forward.5} parent=5 // pred_region
      %s138 = ssub.s32 %s8, 1
      %s139 = smul.u32 4, %s18
      %p140 = scmp.lt.s32.totalorder %s17, 1
      %s141 = scalar_select %p140, %s17, 1
      %p142 = scmp.lt.s32.totalorder %s139, 3
      %s143 = scalar_select %p142, %s139, 3
      %s144 = smul.addr %s141, 16
      %s145 = sadd.s32 %s143, %s144
      %s146 = smul.addr %s145, 4
      %s147 = scalar_lea.vmem %s0, %s146
      %p148 = pneg %p48
      %p149 = pneg %p45
      %p150 = pneg %p69
      %p151 = pneg %p66
      %p152 = pneg %p97
      %p153 = pneg %p94
      %s154 = smul.u32 4, %s18
      %p155 = scmp.lt.s32.totalorder %s17, 1
      %s156 = scalar_select %p155, %s17, 1
      %p157 = scmp.lt.s32.totalorder %s154, 3
      %s158 = scalar_select %p157, %s154, 3
      %s159 = smul.addr %s156, 8
      %s160 = sadd.s32 %s158, %s159
      %s161 = smul.addr %s160, 8
      %s162 = scalar_lea.vmem %s2, %s161
      %s163 = smul.u32 4, %s18
      %p164 = scmp.lt.s32.totalorder %s17, 1
      %s165 = scalar_select %p164, %s17, 1
      %p166 = scmp.lt.s32.totalorder %s163, 3
      %s167 = scalar_select %p166, %s163, 3
      %s168 = smul.addr %s165, 16
      %s169 = sadd.s32 %s167, %s168
      %s170 = smul.addr %s169, 4
      %s171 = scalar_lea.vmem %s0, %s170
      %s172 = smul.u32 4, %s18
      %s173 = smul.u32 4, %s18
      %p174 = scmp.lt.s32.totalorder %s17, 1
      %s175 = scalar_select %p174, %s17, 1
      %p176 = scmp.lt.s32.totalorder %s173, 3
      %s177 = scalar_select %p176, %s173, 3
      %s178 = smul.addr %s175, 8
      %s179 = sadd.s32 %s177, %s178
      %s180 = smul.addr %s179, 8
      %s181 = scalar_lea.vmem %s2, %s180
      %s182 = smul.u32 4, %s18
      %v184 = vld [vmem:[%s1] sm:$0xf]
      %v185 = vld [vmem:[%s1 + $0x4] sm:$0xf]
      %v186 = vld [vmem:[%s171] sm:$0xff]
      %v187 = vld [vmem:[%s171 + $0x8] sm:$0xff]
      %v188 = vld [vmem:[%s171 + $0x10] sm:$0xff]
      %v189 = vld [vmem:[%s171 + $0x18] sm:$0xff]
      %v190 = vld [vmem:[%s171 + $0x20] sm:$0xff]
      %v191 = vld [vmem:[%s171 + $0x28] sm:$0xff]
      %v192 = vld [vmem:[%s171 + $0x30] sm:$0xff]
      %v193 = vld [vmem:[%s171 + $0x38] sm:$0xff]
      %v196 = vunpack.c.l.b16 %v184
      %v197 = vunpack.c.l.b16 %v185
      %v198 = vpack.c.b16 %v197, %v196
      %v207 = vunpack.c.l.b16 %v186
      %v208 = vunpack.c.h.b16 %v186
      %v209 = vunpack.c.l.b16 %v187
      %v210 = vunpack.c.h.b16 %v187
      %v211 = vunpack.c.l.b16 %v188
      %v212 = vunpack.c.h.b16 %v188
      %v213 = vunpack.c.l.b16 %v189
      %v214 = vunpack.c.h.b16 %v189
      %v215 = vunpack.c.l.b16 %v190
      %v216 = vunpack.c.h.b16 %v190
      %v217 = vunpack.c.l.b16 %v191
      %v218 = vunpack.c.h.b16 %v191
      %v219 = vunpack.c.l.b16 %v192
      %v220 = vunpack.c.h.b16 %v192
      %v221 = vunpack.c.l.b16 %v193
      %v222 = vunpack.c.h.b16 %v193
      %v223 = vpack.c.b16 %v211, %v207
      %v224 = vpack.c.b16 %v212, %v208
      %v225 = vpack.c.b16 %v213, %v209
      %v226 = vpack.c.b16 %v214, %v210
      %v227 = vpack.c.b16 %v219, %v215
      %v228 = vpack.c.b16 %v220, %v216
      %v229 = vpack.c.b16 %v221, %v217
      %v230 = vpack.c.b16 %v222, %v218
      %vm239 = vcmask 261120
      %v241 = vsel %vm239, %v198, 0
      %243 = vmatprep.subr.bf16.mxu0 %v224
      %244 = vmatpush1.bf16.msra.mxu0 %v223
      %245 = vmatprep.subr.bf16.mxu0 %v228
      %246 = vmatpush1.bf16.msra.mxu0 %v227
      %247 = vmatprep.subr.bf16.mxu0 0
      %248 = vmatpush1.bf16.msra.mxu0 0
      %249 = vmatprep.subr.bf16.mxu0 0
      %250 = vmatpush1.bf16.msra.mxu0 0
      %251 = vmatprep.subr.bf16.mxu0 0
      %252 = vmatpush1.bf16.msra.mxu0 0
      %253 = vmatprep.subr.bf16.mxu0 0
      %254 = vmatpush1.bf16.msra.mxu0 0
      %255 = vmatprep.subr.bf16.mxu0 0
      %256 = vmatpush1.bf16.msra.mxu0 0
      %257 = vmatprep.subr.bf16.mxu0 0
      %258 = vmatpush1.bf16.msra.mxu0 0
      %259 = vmatprep.subr.bf16.mxu0 0
      %260 = vmatpush1.bf16.msra.mxu0 0
      %261 = vmatprep.subr.bf16.mxu0 0
      %262 = vmatpush1.bf16.msra.mxu0 0
      %263 = vmatprep.subr.bf16.mxu0 0
      %264 = vmatpush1.bf16.msra.mxu0 0
      %265 = vmatprep.subr.bf16.mxu0 0
      %266 = vmatpush1.bf16.msra.mxu0 0
      %267 = vmatprep.subr.bf16.mxu0 0
      %268 = vmatpush1.bf16.msra.mxu0 0
      %269 = vmatprep.subr.bf16.mxu0 0
      %270 = vmatpush1.bf16.msra.mxu0 0
      %271 = vmatprep.subr.bf16.mxu0 0
      %272 = vmatpush1.bf16.msra.mxu0 0
      %273 = vmatprep.subr.bf16.mxu0 0
      %274 = vmatpush1.bf16.msra.mxu0 0
      %275 = vmatprep.mubr.bf16.mxu0 0
      %276 = vmatmul.mubr.bf16.gmra.mrb[0].mxu0 %v241
      %v277 = vpop.f32.mrb[0].mxu0
      %v278 = vadd.f32 0.0, %v277
      %v279 = vpop.f32.mrb[0].mxu0
      %v280 = vadd.f32 0.0, %v279
      %v281 = vpop.f32.mrb[0].mxu0
      %v282 = vadd.f32 0.0, %v281
      %v283 = vpop.f32.mrb[0].mxu0
      %v284 = vadd.f32 0.0, %v283
      %285 = vdwg.mxu0
      %286 = vmatprep.subr.bf16.mxu0 %v226
      %287 = vmatpush1.bf16.msra.mxu0 %v225
      %288 = vmatprep.subr.bf16.mxu0 %v230
      %289 = vmatpush1.bf16.msra.mxu0 %v229
      %290 = vmatprep.subr.bf16.mxu0 0
      %291 = vmatpush1.bf16.msra.mxu0 0
      %292 = vmatprep.subr.bf16.mxu0 0
      %293 = vmatpush1.bf16.msra.mxu0 0
      %294 = vmatprep.subr.bf16.mxu0 0
      %295 = vmatpush1.bf16.msra.mxu0 0
      %296 = vmatprep.subr.bf16.mxu0 0
      %297 = vmatpush1.bf16.msra.mxu0 0
      %298 = vmatprep.subr.bf16.mxu0 0
      %299 = vmatpush1.bf16.msra.mxu0 0
      %300 = vmatprep.subr.bf16.mxu0 0
      %301 = vmatpush1.bf16.msra.mxu0 0
      %302 = vmatprep.subr.bf16.mxu0 0
      %303 = vmatpush1.bf16.msra.mxu0 0
      %304 = vmatprep.subr.bf16.mxu0 0
      %305 = vmatpush1.bf16.msra.mxu0 0
      %306 = vmatprep.subr.bf16.mxu0 0
      %307 = vmatpush1.bf16.msra.mxu0 0
      %308 = vmatprep.subr.bf16.mxu0 0
      %309 = vmatpush1.bf16.msra.mxu0 0
      %310 = vmatprep.subr.bf16.mxu0 0
      %311 = vmatpush1.bf16.msra.mxu0 0
      %312 = vmatprep.subr.bf16.mxu0 0
      %313 = vmatpush1.bf16.msra.mxu0 0
      %314 = vmatprep.subr.bf16.mxu0 0
      %315 = vmatpush1.bf16.msra.mxu0 0
      %316 = vmatprep.subr.bf16.mxu0 0
      %317 = vmatpush1.bf16.msra.mxu0 0
      %318 = vmatprep.mubr.bf16.mxu0 0
      %319 = vmatmul.mubr.bf16.gmra.mrb[0].mxu0 %v241
      %v320 = vpop.f32.mrb[0].mxu0
      %v321 = vadd.f32 0.0, %v320
      %v322 = vpop.f32.mrb[0].mxu0
      %v323 = vadd.f32 0.0, %v322
      %v324 = vpop.f32.mrb[0].mxu0
      %v325 = vadd.f32 0.0, %v324
      %v326 = vpop.f32.mrb[0].mxu0
      %v327 = vadd.f32 0.0, %v326
      %328 = vdwg.mxu0
      %329 = vst [vmem:[%s181] sm:$0xff] %v278
      %330 = vst [vmem:[%s181 + $0x8] sm:$0xff] %v280
      %331 = vst [vmem:[%s181 + $0x10] sm:$0xff] %v321
      %332 = vst [vmem:[%s181 + $0x18] sm:$0xff] %v323
      %333 = vst [vmem:[%s181 + $0x20] sm:$0xff] %v282
      %334 = vst [vmem:[%s181 + $0x28] sm:$0xff] %v284
      %335 = vst [vmem:[%s181 + $0x30] sm:$0xff] %v325
      %336 = vst [vmem:[%s181 + $0x38] sm:$0xff] %v327
      %s337 = smul.u32 4, %s18
      %p338 = scmp.lt.s32.totalorder %s17, 1
      %s339 = scalar_select %p338, %s17, 1
      %p340 = scmp.lt.s32.totalorder %s337, 3
      %s341 = scalar_select %p340, %s337, 3
      %s342 = smul.addr %s339, 8
      %s343 = sadd.s32 %s341, %s342
      %s344 = smul.addr %s343, 8
      %s345 = scalar_lea.vmem %s2, %s344
      // Predicated region
      $region29: #{conv_tasnet_forward.5} parent=27 // pred_check
        %p346 = pneg %p94
      $region30: #{conv_tasnet_forward.5} parent=27 // pred_check_branch
        %348 = sbr.rel (%p346) target = $region32
      $region31: #{conv_tasnet_forward.5} parent=27 // pred_region
        %s349 = smul.u32 4, %s18
      $region32: #{conv_tasnet_forward.5} parent=27 // pred_fallthru
        _
    $region28: #{conv_tasnet_forward.5} parent=5 // pred_fallthru
      _
    %p350 = scmp.le.s32.totalorder 2, %s8
    // Predicated region
    $region33: #{conv_tasnet_forward.5} parent=5 // pred_check
      %p351 = pneg %p350
    $region34: #{conv_tasnet_forward.5} parent=5 // pred_check_branch
      %353 = sbr.rel (%p351) target = $region36
    $region35: #{conv_tasnet_forward.5} parent=5 // pred_region
      %s354 = ssub.s32 %s8, 2
      // Predicated region
      $region37: #{conv_tasnet_forward.5} parent=35 // pred_check
        %p355 = pneg %p100
      $region38: #{conv_tasnet_forward.5} parent=35 // pred_check_branch
        %357 = sbr.rel (%p355) target = $region40
      $region39: #{conv_tasnet_forward.5} parent=35 // pred_region
        %s358 = smul.u32 4, %s20
        %p359 = scmp.lt.s32.totalorder %s19, 1
        %s360 = scalar_select %p359, %s19, 1
        %p361 = scmp.lt.s32.totalorder %s358, 3
        %s362 = scalar_select %p361, %s358, 3
        %s363 = smul.addr %s360, 8
        %s364 = sadd.s32 %s362, %s363
        %s365 = smul.addr %s364, 8
        %s366 = scalar_lea.vmem %s2, %s365
      $region40: #{conv_tasnet_forward.5} parent=35 // pred_fallthru
        _
    $region36: #{conv_tasnet_forward.5} parent=5 // pred_fallthru
      _
  $region6: #{conv_tasnet_forward.5} parent=0 // loop_footer
    %s12 = sadd.s32 1, %s8
  $region7: #{conv_tasnet_forward.5} parent=0 // loop_footer_branch
    %7 = sbr.rel target = $region3
  $region8: #{conv_tasnet_forward.5} parent=0 // loop_exit
    _

// kernel: conv_tasnet_forward.4
$region0: #{conv_tasnet_forward.4}
  #allocation0 [shape = 'u32[]', space=smem, size = 0x4, offset = 0x4, fixed_abs, tag = 'smem constant byte address 0x4 - core index']
  #allocation1 [shape = 'u32[144,128]{1,0:T(1,128)}', space=vmem, size = 0x12000, scoped, tag = 'internal scratch']
  #allocation2 [shape = 'f32[16,512]{1,0:T(8,128)}', space=vmem, size = 0x8000, scoped, tag = 'scratch operand']
  #allocation3 [shape = 'f32[16,512]{1,0:T(8,128)}', space=vmem, size = 0x8000, scoped, tag = 'scratch operand']
  #allocation4 [shape = 'f32[32,512]{1,0:T(8,128)}', space=vmem, size = 0x10000, scoped, tag = 'scratch operand']
  #allocation5 [shape = 'f32[1]{0:T(128)S(6)}', space=smem, size = 0x200, scoped, tag = 'scoped memory for conv_tasnet_forward.4']
  %s0 = inlined_call_operand.vmem [shape: bf16[2,16,512], index: 0, kind: input, shape index: {}]
  %s1 = inlined_call_operand.vmem [shape: f32[16,1], index: 1, kind: input, shape index: {}]
  %s2 = inlined_call_operand.vmem [shape: f32[16,1], index: 2, kind: input, shape index: {}]
  %s3 = inlined_call_operand.vmem [shape: bf16[16,16], index: 3, kind: input, shape index: {}]
  %s4 = inlined_call_operand.vmem [shape: f32[16,1], index: 4, kind: input, shape index: {}]
  %s5 = inlined_call_operand.vmem [shape: bf16[4,32,16], index: 5, kind: input, shape index: {}]
  %s6 = inlined_call_operand.vmem [shape: f32[4,32,1], index: 6, kind: input, shape index: {}]
  %s7 = inlined_call_operand.vmem [shape: f32[12,32,1], index: 7, kind: input, shape index: {}]
  %s8 = inlined_call_operand.vmem [shape: f32[4,32,1], index: 8, kind: input, shape index: {}]
  %s9 = inlined_call_operand.vmem [shape: f32[4,32,1], index: 9, kind: input, shape index: {}]
  %s10 = inlined_call_operand.vmem [shape: f32[4,32,1], index: 10, kind: input, shape index: {}]
  %s11 = inlined_call_operand.vmem [shape: bf16[4,32,32], index: 11, kind: input, shape index: {}]
  %s12 = inlined_call_operand.vmem [shape: f32[4,32,1], index: 12, kind: input, shape index: {}]
  %s13 = inlined_call_operand.vmem [shape: bf16[32,16], index: 13, kind: input, shape index: {}]
  %s14 = inlined_call_operand.vmem [shape: f32[4], index: 14, kind: input, shape index: {}]
  %s15 = inlined_call_operand.<no memory space> [shape: f32[1], index: 15, kind: input, shape index: {}]
  %s16 = inlined_call_operand.vmem [shape: bf16[2,32,512], index: 16, kind: output, shape index: {}]
  %s17 = sld [smem:[#allocation0]]
  $region117: #{conv_tasnet_forward.4} parent=0
    _
  %s19 = ssub.s32 1, %s17
  %s20 = scalar_select 0, %s19, %s17
  %21 = sst [smem:[#allocation5]] %s15
  $region1: #{conv_tasnet_forward.4} parent=0
    #allocation6 [shape = 'u8[512]{0}', space=smem, size = 0x200, scoped, tag = 'input window, operand 14, single buffered']
    #allocation7 [shape = 's32[2]{0}', space=sflag, size = 0x8, scoped, tag = 'scoped memory for conv_tasnet_forward.4']
    %22 = vsyncpa [#allocation7], 0
    loop: start=0, step=1, limit=10
    $region2: #{conv_tasnet_forward.4} parent=1 // loop_pre_header
      _
    $region3: #{conv_tasnet_forward.4} parent=1 // loop_header
      %s24 = sphi 0, %s28
      %p25 = scmp.ge.s32.totalorder %s24, 10
      %s31 = sphi 0, %s43
      %s32 = sphi 0, %s39
      %s33 = sphi 0, %s31
      %s34 = sphi 0, %s32
      %s35 = sphi 0, %s33
      %s36 = sphi 0, %s34
      %s46 = sphi 0, %s48
      %s49 = sphi 0, %s46
      %s50 = sphi 0, %s49
      %s66 = sphi 0, %s50
      %s70 = sphi 0, %s70
      %s72 = sphi 0, %s70
      %s73 = sphi 0, %s72
      %s87 = sphi 0, %s73
      %s91 = sphi 0, %s91
      %s93 = sphi 0, %s91
      %s94 = sphi 0, %s93
      %s108 = sphi 0, %s94
      %s112 = sphi 0, %s112
      %s114 = sphi 0, %s112
      %s115 = sphi 0, %s114
      %s129 = sphi 0, %s115
      %s133 = sphi 0, %s133
      %s135 = sphi 0, %s133
      %s136 = sphi 0, %s135
      %s150 = sphi 0, %s136
      %s156 = sphi 0, %s158
      %s159 = sphi 0, %s156
      %s160 = sphi 0, %s159
      %s176 = sphi 0, %s160
      %s182 = sphi 0, %s184
      %s185 = sphi 0, %s182
      %s186 = sphi 0, %s185
      %s202 = sphi 0, %s186
      %s208 = sphi 0, %s210
      %s211 = sphi 0, %s208
      %s212 = sphi 0, %s211
      %s228 = sphi 0, %s212
      %s234 = sphi 0, %s236
      %s237 = sphi 0, %s234
      %s238 = sphi 0, %s237
      %s254 = sphi 0, %s238
      %s260 = sphi 0, %s262
      %s263 = sphi 0, %s260
      %s264 = sphi 0, %s263
      %s280 = sphi 0, %s264
      %s286 = sphi 0, %s288
      %s289 = sphi 0, %s286
      %s290 = sphi 0, %s289
      %s306 = sphi 0, %s290
      %s312 = sphi 0, %s314
      %s315 = sphi 0, %s312
      %s316 = sphi 0, %s315
      %s332 = sphi 0, %s316
      %s338 = sphi 0, %s340
      %s341 = sphi 0, %s338
      %s342 = sphi 0, %s341
      %s358 = sphi 0, %s342
      %s362 = sphi 0, %s362
      %s364 = sphi 0, %s362
      %s365 = sphi 0, %s364
      %s379 = sphi 0, %s365
      %s383 = sphi 0, %s383
      %s385 = sphi 0, %s383
      %s386 = sphi 0, %s385
      %s400 = sphi 0, %s386
      %s404 = sphi 0, %s404
      %s406 = sphi 0, %s404
      %s407 = sphi 0, %s406
      %s421 = sphi 0, %s407
      %s427 = sphi 0, %s429
      %s430 = sphi 0, %s427
      %s431 = sphi 0, %s430
      %s447 = sphi 0, %s431
    $region4: #{conv_tasnet_forward.4} parent=1 // loop_header_branch
      %27 = sbr.rel (%p25) target = $region8
    $region5: #{conv_tasnet_forward.4} parent=1 // loop_body
      %s29 = ssub.s32 %s24, 1
      %s30 = ssub.s32 %s24, 2
      %s37 = sadd.s32 1, %s32
      %p38 = scmp.ge.s32.totalorder %s37, 4
      %s39 = scalar_select %p38, 0, %s37
      %s40 = sadd.s32 1, %s31
      %s41 = scalar_select %p38, %s40, %s31
      %p42 = scmp.ge.s32.totalorder %s41, 2
      %s43 = scalar_select %p42, 0, %s41
      %s44 = ssub.s32 %s31, %s43
      %p45 = scmp.eq.s32.totalorder %s44, 0
      %s47 = sadd.s32 %s46, 1
      %s48 = scalar_select %p45, %s46, %s47
      %p51 = pneg %p45
      %p52 = scmp.eq.s32.totalorder %s24, 7
      %p53 = por %p51, %p52
      %p54 = scmp.ne.s32.totalorder %s46, %s49
      %p55 = scmp.eq.s32.totalorder %s24, 0
      %p56 = por %p54, %p55
      %p57 = scmp.ne.s32.totalorder %s46, %s49
      %p58 = scmp.eq.s32.totalorder %s29, 7
      %p59 = por %p57, %p58
      %p60 = scmp.ne.s32.totalorder %s49, %s50
      %p61 = scmp.eq.s32.totalorder %s29, 0
      %p62 = por %p60, %p61
      %p63 = scmp.ne.s32.totalorder %s49, %s50
      %p64 = scmp.eq.s32.totalorder %s30, 7
      %p65 = por %p63, %p64
      %p67 = scmp.ne.s32.totalorder %s50, %s66
      %p68 = scmp.eq.s32.totalorder %s30, 0
      %p69 = por %p67, %p68
      %s71 = sadd.s32 %s70, 1
      %p74 = scmp.eq.s32.totalorder %s24, 7
      %p75 = scmp.ne.s32.totalorder %s70, %s72
      %p76 = scmp.eq.s32.totalorder %s24, 0
      %p77 = por %p75, %p76
      %p78 = scmp.ne.s32.totalorder %s70, %s72
      %p79 = scmp.eq.s32.totalorder %s29, 7
      %p80 = por %p78, %p79
      %p81 = scmp.ne.s32.totalorder %s72, %s73
      %p82 = scmp.eq.s32.totalorder %s29, 0
      %p83 = por %p81, %p82
      %p84 = scmp.ne.s32.totalorder %s72, %s73
      %p85 = scmp.eq.s32.totalorder %s30, 7
      %p86 = por %p84, %p85
      %p88 = scmp.ne.s32.totalorder %s73, %s87
      %p89 = scmp.eq.s32.totalorder %s30, 0
      %p90 = por %p88, %p89
      %s92 = sadd.s32 %s91, 1
      %p95 = scmp.eq.s32.totalorder %s24, 7
      %p96 = scmp.ne.s32.totalorder %s91, %s93
      %p97 = scmp.eq.s32.totalorder %s24, 0
      %p98 = por %p96, %p97
      %p99 = scmp.ne.s32.totalorder %s91, %s93
      %p100 = scmp.eq.s32.totalorder %s29, 7
      %p101 = por %p99, %p100
      %p102 = scmp.ne.s32.totalorder %s93, %s94
      %p103 = scmp.eq.s32.totalorder %s29, 0
      %p104 = por %p102, %p103
      %p105 = scmp.ne.s32.totalorder %s93, %s94
      %p106 = scmp.eq.s32.totalorder %s30, 7
      %p107 = por %p105, %p106
      %p109 = scmp.ne.s32.totalorder %s94, %s108
      %p110 = scmp.eq.s32.totalorder %s30, 0
      %p111 = por %p109, %p110
      %s113 = sadd.s32 %s112, 1
      %p116 = scmp.eq.s32.totalorder %s24, 7
      %p117 = scmp.ne.s32.totalorder %s112, %s114
      %p118 = scmp.eq.s32.totalorder %s24, 0
      %p119 = por %p117, %p118
      %p120 = scmp.ne.s32.totalorder %s112, %s114
      %p121 = scmp.eq.s32.totalorder %s29, 7
      %p122 = por %p120, %p121
      %p123 = scmp.ne.s32.totalorder %s114, %s115
      %p124 = scmp.eq.s32.totalorder %s29, 0
      %p125 = por %p123, %p124
      %p126 = scmp.ne.s32.totalorder %s114, %s115
      %p127 = scmp.eq.s32.totalorder %s30, 7
      %p128 = por %p126, %p127
      %p130 = scmp.ne.s32.totalorder %s115, %s129
      %p131 = scmp.eq.s32.totalorder %s30, 0
      %p132 = por %p130, %p131
      %s134 = sadd.s32 %s133, 1
      %p137 = scmp.eq.s32.totalorder %s24, 7
      %p138 = scmp.ne.s32.totalorder %s133, %s135
      %p139 = scmp.eq.s32.totalorder %s24, 0
      %p140 = por %p138, %p139
      %p141 = scmp.ne.s32.totalorder %s133, %s135
      %p142 = scmp.eq.s32.totalorder %s29, 7
      %p143 = por %p141, %p142
      %p144 = scmp.ne.s32.totalorder %s135, %s136
      %p145 = scmp.eq.s32.totalorder %s29, 0
      %p146 = por %p144, %p145
      %p147 = scmp.ne.s32.totalorder %s135, %s136
      %p148 = scmp.eq.s32.totalorder %s30, 7
      %p149 = por %p147, %p148
      %p151 = scmp.ne.s32.totalorder %s136, %s150
      %p152 = scmp.eq.s32.totalorder %s30, 0
      %p153 = por %p151, %p152
      %s154 = ssub.s32 %s32, %s39
      %p155 = scmp.eq.s32.totalorder %s154, 0
      %s157 = sadd.s32 %s156, 1
      %s158 = scalar_select %p155, %s156, %s157
      %p161 = pneg %p155
      %p162 = scmp.eq.s32.totalorder %s24, 7
      %p163 = por %p161, %p162
      %p164 = scmp.ne.s32.totalorder %s156, %s159
      %p165 = scmp.eq.s32.totalorder %s24, 0
      %p166 = por %p164, %p165
      %p167 = scmp.ne.s32.totalorder %s156, %s159
      %p168 = scmp.eq.s32.totalorder %s29, 7
      %p169 = por %p167, %p168
      %p170 = scmp.ne.s32.totalorder %s159, %s160
      %p171 = scmp.eq.s32.totalorder %s29, 0
      %p172 = por %p170, %p171
      %p173 = scmp.ne.s32.totalorder %s159, %s160
      %p174 = scmp.eq.s32.totalorder %s30, 7
      %p175 = por %p173, %p174
      %p177 = scmp.ne.s32.totalorder %s160, %s176
      %p178 = scmp.eq.s32.totalorder %s30, 0
      %p179 = por %p177, %p178
      %s180 = ssub.s32 %s32, %s39
      %p181 = scmp.eq.s32.totalorder %s180, 0
      %s183 = sadd.s32 %s182, 1
      %s184 = scalar_select %p181, %s182, %s183
      %p187 = pneg %p181
      %p188 = scmp.eq.s32.totalorder %s24, 7
      %p189 = por %p187, %p188
      %p190 = scmp.ne.s32.totalorder %s182, %s185
      %p191 = scmp.eq.s32.totalorder %s24, 0
      %p192 = por %p190, %p191
      %p193 = scmp.ne.s32.totalorder %s182, %s185
      %p194 = scmp.eq.s32.totalorder %s29, 7
      %p195 = por %p193, %p194
      %p196 = scmp.ne.s32.totalorder %s185, %s186
      %p197 = scmp.eq.s32.totalorder %s29, 0
      %p198 = por %p196, %p197
      %p199 = scmp.ne.s32.totalorder %s185, %s186
      %p200 = scmp.eq.s32.totalorder %s30, 7
      %p201 = por %p199, %p200
      %p203 = scmp.ne.s32.totalorder %s186, %s202
      %p204 = scmp.eq.s32.totalorder %s30, 0
      %p205 = por %p203, %p204
      %s206 = ssub.s32 %s32, %s39
      %p207 = scmp.eq.s32.totalorder %s206, 0
      %s209 = sadd.s32 %s208, 1
      %s210 = scalar_select %p207, %s208, %s209
      %p213 = pneg %p207
      %p214 = scmp.eq.s32.totalorder %s24, 7
      %p215 = por %p213, %p214
      %p216 = scmp.ne.s32.totalorder %s208, %s211
      %p217 = scmp.eq.s32.totalorder %s24, 0
      %p218 = por %p216, %p217
      %p219 = scmp.ne.s32.totalorder %s208, %s211
      %p220 = scmp.eq.s32.totalorder %s29, 7
      %p221 = por %p219, %p220
      %p222 = scmp.ne.s32.totalorder %s211, %s212
      %p223 = scmp.eq.s32.totalorder %s29, 0
      %p224 = por %p222, %p223
      %p225 = scmp.ne.s32.totalorder %s211, %s212
      %p226 = scmp.eq.s32.totalorder %s30, 7
      %p227 = por %p225, %p226
      %p229 = scmp.ne.s32.totalorder %s212, %s228
      %p230 = scmp.eq.s32.totalorder %s30, 0
      %p231 = por %p229, %p230
      %s232 = ssub.s32 %s32, %s39
      %p233 = scmp.eq.s32.totalorder %s232, 0
      %s235 = sadd.s32 %s234, 1
      %s236 = scalar_select %p233, %s234, %s235
      %p239 = pneg %p233
      %p240 = scmp.eq.s32.totalorder %s24, 7
      %p241 = por %p239, %p240
      %p242 = scmp.ne.s32.totalorder %s234, %s237
      %p243 = scmp.eq.s32.totalorder %s24, 0
      %p244 = por %p242, %p243
      %p245 = scmp.ne.s32.totalorder %s234, %s237
      %p246 = scmp.eq.s32.totalorder %s29, 7
      %p247 = por %p245, %p246
      %p248 = scmp.ne.s32.totalorder %s237, %s238
      %p249 = scmp.eq.s32.totalorder %s29, 0
      %p250 = por %p248, %p249
      %p251 = scmp.ne.s32.totalorder %s237, %s238
      %p252 = scmp.eq.s32.totalorder %s30, 7
      %p253 = por %p251, %p252
      %p255 = scmp.ne.s32.totalorder %s238, %s254
      %p256 = scmp.eq.s32.totalorder %s30, 0
      %p257 = por %p255, %p256
      %s258 = ssub.s32 %s32, %s39
      %p259 = scmp.eq.s32.totalorder %s258, 0
      %s261 = sadd.s32 %s260, 1
      %s262 = scalar_select %p259, %s260, %s261
      %p265 = pneg %p259
      %p266 = scmp.eq.s32.totalorder %s24, 7
      %p267 = por %p265, %p266
      %p268 = scmp.ne.s32.totalorder %s260, %s263
      %p269 = scmp.eq.s32.totalorder %s24, 0
      %p270 = por %p268, %p269
      %p271 = scmp.ne.s32.totalorder %s260, %s263
      %p272 = scmp.eq.s32.totalorder %s29, 7
      %p273 = por %p271, %p272
      %p274 = scmp.ne.s32.totalorder %s263, %s264
      %p275 = scmp.eq.s32.totalorder %s29, 0
      %p276 = por %p274, %p275
      %p277 = scmp.ne.s32.totalorder %s263, %s264
      %p278 = scmp.eq.s32.totalorder %s30, 7
      %p279 = por %p277, %p278
      %p281 = scmp.ne.s32.totalorder %s264, %s280
      %p282 = scmp.eq.s32.totalorder %s30, 0
      %p283 = por %p281, %p282
      %s284 = ssub.s32 %s32, %s39
      %p285 = scmp.eq.s32.totalorder %s284, 0
      %s287 = sadd.s32 %s286, 1
      %s288 = scalar_select %p285, %s286, %s287
      %p291 = pneg %p285
      %p292 = scmp.eq.s32.totalorder %s24, 7
      %p293 = por %p291, %p292
      %p294 = scmp.ne.s32.totalorder %s286, %s289
      %p295 = scmp.eq.s32.totalorder %s24, 0
      %p296 = por %p294, %p295
      %p297 = scmp.ne.s32.totalorder %s286, %s289
      %p298 = scmp.eq.s32.totalorder %s29, 7
      %p299 = por %p297, %p298
      %p300 = scmp.ne.s32.totalorder %s289, %s290
      %p301 = scmp.eq.s32.totalorder %s29, 0
      %p302 = por %p300, %p301
      %p303 = scmp.ne.s32.totalorder %s289, %s290
      %p304 = scmp.eq.s32.totalorder %s30, 7
      %p305 = por %p303, %p304
      %p307 = scmp.ne.s32.totalorder %s290, %s306
      %p308 = scmp.eq.s32.totalorder %s30, 0
      %p309 = por %p307, %p308
      %s310 = ssub.s32 %s32, %s39
      %p311 = scmp.eq.s32.totalorder %s310, 0
      %s313 = sadd.s32 %s312, 1
      %s314 = scalar_select %p311, %s312, %s313
      %p317 = pneg %p311
      %p318 = scmp.eq.s32.totalorder %s24, 7
      %p319 = por %p317, %p318
      %p320 = scmp.ne.s32.totalorder %s312, %s315
      %p321 = scmp.eq.s32.totalorder %s24, 0
      %p322 = por %p320, %p321
      %p323 = scmp.ne.s32.totalorder %s312, %s315
      %p324 = scmp.eq.s32.totalorder %s29, 7
      %p325 = por %p323, %p324
      %p326 = scmp.ne.s32.totalorder %s315, %s316
      %p327 = scmp.eq.s32.totalorder %s29, 0
      %p328 = por %p326, %p327
      %p329 = scmp.ne.s32.totalorder %s315, %s316
      %p330 = scmp.eq.s32.totalorder %s30, 7
      %p331 = por %p329, %p330
      %p333 = scmp.ne.s32.totalorder %s316, %s332
      %p334 = scmp.eq.s32.totalorder %s30, 0
      %p335 = por %p333, %p334
      %s336 = ssub.s32 %s32, %s39
      %p337 = scmp.eq.s32.totalorder %s336, 0
      %s339 = sadd.s32 %s338, 1
      %s340 = scalar_select %p337, %s338, %s339
      %p343 = pneg %p337
      %p344 = scmp.eq.s32.totalorder %s24, 7
      %p345 = por %p343, %p344
      %p346 = scmp.ne.s32.totalorder %s338, %s341
      %p347 = scmp.eq.s32.totalorder %s24, 0
      %p348 = por %p346, %p347
      %p349 = scmp.ne.s32.totalorder %s338, %s341
      %p350 = scmp.eq.s32.totalorder %s29, 7
      %p351 = por %p349, %p350
      %p352 = scmp.ne.s32.totalorder %s341, %s342
      %p353 = scmp.eq.s32.totalorder %s29, 0
      %p354 = por %p352, %p353
      %p355 = scmp.ne.s32.totalorder %s341, %s342
      %p356 = scmp.eq.s32.totalorder %s30, 7
      %p357 = por %p355, %p356
      %p359 = scmp.ne.s32.totalorder %s342, %s358
      %p360 = scmp.eq.s32.totalorder %s30, 0
      %p361 = por %p359, %p360
      %s363 = sadd.s32 %s362, 1
      %p366 = scmp.eq.s32.totalorder %s24, 7
      %p367 = scmp.ne.s32.totalorder %s362, %s364
      %p368 = scmp.eq.s32.totalorder %s24, 0
      %p369 = por %p367, %p368
      %p370 = scmp.ne.s32.totalorder %s362, %s364
      %p371 = scmp.eq.s32.totalorder %s29, 7
      %p372 = por %p370, %p371
      %p373 = scmp.ne.s32.totalorder %s364, %s365
      %p374 = scmp.eq.s32.totalorder %s29, 0
      %p375 = por %p373, %p374
      %p376 = scmp.ne.s32.totalorder %s364, %s365
      %p377 = scmp.eq.s32.totalorder %s30, 7
      %p378 = por %p376, %p377
      %p380 = scmp.ne.s32.totalorder %s365, %s379
      %p381 = scmp.eq.s32.totalorder %s30, 0
      %p382 = por %p380, %p381
      %s384 = sadd.s32 %s383, 1
      %p387 = scmp.eq.s32.totalorder %s24, 7
      %p388 = scmp.ne.s32.totalorder %s383, %s385
      %p389 = scmp.eq.s32.totalorder %s24, 0
      %p390 = por %p388, %p389
      %p391 = scmp.ne.s32.totalorder %s383, %s385
      %p392 = scmp.eq.s32.totalorder %s29, 7
      %p393 = por %p391, %p392
      %p394 = scmp.ne.s32.totalorder %s385, %s386
      %p395 = scmp.eq.s32.totalorder %s29, 0
      %p396 = por %p394, %p395
      %p397 = scmp.ne.s32.totalorder %s385, %s386
      %p398 = scmp.eq.s32.totalorder %s30, 7
      %p399 = por %p397, %p398
      %p401 = scmp.ne.s32.totalorder %s386, %s400
      %p402 = scmp.eq.s32.totalorder %s30, 0
      %p403 = por %p401, %p402
      %s405 = sadd.s32 %s404, 1
      %p408 = scmp.eq.s32.totalorder %s24, 7
      %p409 = scmp.ne.s32.totalorder %s404, %s406
      %p410 = scmp.eq.s32.totalorder %s24, 0
      %p411 = por %p409, %p410
      %p412 = scmp.ne.s32.totalorder %s404, %s406
      %p413 = scmp.eq.s32.totalorder %s29, 7
      %p414 = por %p412, %p413
      %p415 = scmp.ne.s32.totalorder %s406, %s407
      %p416 = scmp.eq.s32.totalorder %s29, 0
      %p417 = por %p415, %p416
      %p418 = scmp.ne.s32.totalorder %s406, %s407
      %p419 = scmp.eq.s32.totalorder %s30, 7
      %p420 = por %p418, %p419
      %p422 = scmp.ne.s32.totalorder %s407, %s421
      %p423 = scmp.eq.s32.totalorder %s30, 0
      %p424 = por %p422, %p423
      %s425 = ssub.s32 %s31, %s43
      %p426 = scmp.eq.s32.totalorder %s425, 0
      %s428 = sadd.s32 %s427, 1
      %s429 = scalar_select %p426, %s427, %s428
      %p432 = pneg %p426
      %p433 = scmp.eq.s32.totalorder %s24, 7
      %p434 = por %p432, %p433
      %p435 = scmp.ne.s32.totalorder %s427, %s430
      %p436 = scmp.eq.s32.totalorder %s24, 0
      %p437 = por %p435, %p436
      %p438 = scmp.ne.s32.totalorder %s427, %s430
      %p439 = scmp.eq.s32.totalorder %s29, 7
      %p440 = por %p438, %p439
      %p441 = scmp.ne.s32.totalorder %s430, %s431
      %p442 = scmp.eq.s32.totalorder %s29, 0
      %p443 = por %p441, %p442
      %p444 = scmp.ne.s32.totalorder %s430, %s431
      %p445 = scmp.eq.s32.totalorder %s30, 7
      %p446 = por %p444, %p445
      %p448 = scmp.ne.s32.totalorder %s431, %s447
      %p449 = scmp.eq.s32.totalorder %s30, 0
      %p450 = por %p448, %p449
      %p451 = scmp.le.s32.totalorder 1, %s24
      %p452 = scmp.lt.s32.totalorder %s24, 9
      %p453 = pnand %p451, %p452
      %p454 = pneg %p453
      // Predicated region
      $region9: #{conv_tasnet_forward.4} parent=5 // pred_check
        _
      $region10: #{conv_tasnet_forward.4} parent=5 // pred_check_branch
        %456 = sbr.rel (%p453) target = $region12
      $region11: #{conv_tasnet_forward.4} parent=5 // pred_region
        %s457 = ssub.s32 %s24, 1
        // Predicated region
        $region13: #{conv_tasnet_forward.4} parent=11 // pred_check
          %p458 = pneg %p83
        $region14: #{conv_tasnet_forward.4} parent=11 // pred_check_branch
          %460 = sbr.rel (%p458) target = $region16
        $region15: #{conv_tasnet_forward.4} parent=11 // pred_region
          _
        $region16: #{conv_tasnet_forward.4} parent=11 // pred_fallthru
          _
        // Predicated region
        $region17: #{conv_tasnet_forward.4} parent=11 // pred_check
          %p461 = pneg %p104
        $region18: #{conv_tasnet_forward.4} parent=11 // pred_check_branch
          %463 = sbr.rel (%p461) target = $region20
        $region19: #{conv_tasnet_forward.4} parent=11 // pred_region
          _
        $region20: #{conv_tasnet_forward.4} parent=11 // pred_fallthru
          _
        // Predicated region
        $region21: #{conv_tasnet_forward.4} parent=11 // pred_check
          %p464 = pneg %p125
        $region22: #{conv_tasnet_forward.4} parent=11 // pred_check_branch
          %466 = sbr.rel (%p464) target = $region24
        $region23: #{conv_tasnet_forward.4} parent=11 // pred_region
          _
        $region24: #{conv_tasnet_forward.4} parent=11 // pred_fallthru
          _
        // Predicated region
        $region25: #{conv_tasnet_forward.4} parent=11 // pred_check
          %p467 = pneg %p146
        $region26: #{conv_tasnet_forward.4} parent=11 // pred_check_branch
          %469 = sbr.rel (%p467) target = $region28
        $region27: #{conv_tasnet_forward.4} parent=11 // pred_region
          _
        $region28: #{conv_tasnet_forward.4} parent=11 // pred_fallthru
          _
        // Predicated region
        $region29: #{conv_tasnet_forward.4} parent=11 // pred_check
          %p470 = pneg %p375
        $region30: #{conv_tasnet_forward.4} parent=11 // pred_check_branch
          %472 = sbr.rel (%p470) target = $region32
        $region31: #{conv_tasnet_forward.4} parent=11 // pred_region
          _
        $region32: #{conv_tasnet_forward.4} parent=11 // pred_fallthru
          _
        // Predicated region
        $region33: #{conv_tasnet_forward.4} parent=11 // pred_check
          %p473 = pneg %p396
        $region34: #{conv_tasnet_forward.4} parent=11 // pred_check_branch
          %475 = sbr.rel (%p473) target = $region36
        $region35: #{conv_tasnet_forward.4} parent=11 // pred_region
          %s477 = ssub.s32 16, 16
          %478 = vsyncadd [#allocation7], %s477
          %s480 = sshll.u32 %s14, 4
          %s481 = int_to_ptr.vmem [resolvable:$true] %s480
          %483 = dma.vmem_to_smem %s481, 16, [#allocation6], [#allocation7]
        $region36: #{conv_tasnet_forward.4} parent=11 // pred_fallthru
          _
        // Predicated region
        $region37: #{conv_tasnet_forward.4} parent=11 // pred_check
          %p484 = pneg %p417
        $region38: #{conv_tasnet_forward.4} parent=11 // pred_check_branch
          %486 = sbr.rel (%p484) target = $region40
        $region39: #{conv_tasnet_forward.4} parent=11 // pred_region
          _
        $region40: #{conv_tasnet_forward.4} parent=11 // pred_fallthru
          _
      $region12: #{conv_tasnet_forward.4} parent=5 // pred_fallthru
        _
      %p487 = scmp.lt.s32.totalorder %s24, 8
      // Predicated region
      $region41: #{conv_tasnet_forward.4} parent=5 // pred_check
        %p488 = pneg %p487
      $region42: #{conv_tasnet_forward.4} parent=5 // pred_check_branch
        %490 = sbr.rel (%p488) target = $region44
      $region43: #{conv_tasnet_forward.4} parent=5 // pred_region
        // Predicated region
        $region45: #{conv_tasnet_forward.4} parent=43 // pred_check
          %p491 = pneg %p56
        $region46: #{conv_tasnet_forward.4} parent=43 // pred_check_branch
          %493 = sbr.rel (%p491) target = $region48
        $region47: #{conv_tasnet_forward.4} parent=43 // pred_region
          %p494 = scmp.lt.s32.totalorder %s31, 1
          %s495 = scalar_select %p494, %s31, 1
          %s496 = smul.addr %s495, 8
          %s497 = smul.addr %s496, 4
          %s498 = scalar_lea.vmem %s0, %s497
        $region48: #{conv_tasnet_forward.4} parent=43 // pred_fallthru
          _
        // Predicated region
        $region49: #{conv_tasnet_forward.4} parent=43 // pred_check
          %p499 = pneg %p166
        $region50: #{conv_tasnet_forward.4} parent=43 // pred_check_branch
          %501 = sbr.rel (%p499) target = $region52
        $region51: #{conv_tasnet_forward.4} parent=43 // pred_region
          %p502 = scmp.lt.s32.totalorder %s32, 3
          %s503 = scalar_select %p502, %s32, 3
          %s504 = smul.addr %s503, 4
          %s505 = smul.addr %s504, 4
          %s506 = scalar_lea.vmem %s5, %s505
        $region52: #{conv_tasnet_forward.4} parent=43 // pred_fallthru
          _
        // Predicated region
        $region53: #{conv_tasnet_forward.4} parent=43 // pred_check
          %p507 = pneg %p192
        $region54: #{conv_tasnet_forward.4} parent=43 // pred_check_branch
          %509 = sbr.rel (%p507) target = $region56
        $region55: #{conv_tasnet_forward.4} parent=43 // pred_region
          %p510 = scmp.lt.s32.totalorder %s32, 3
          %s511 = scalar_select %p510, %s32, 3
          %s512 = smul.addr %s511, 4
          %s513 = smul.addr %s512, 8
          %s514 = scalar_lea.vmem %s6, %s513
        $region56: #{conv_tasnet_forward.4} parent=43 // pred_fallthru
          _
        // Predicated region
        $region57: #{conv_tasnet_forward.4} parent=43 // pred_check
          %p515 = pneg %p218
        $region58: #{conv_tasnet_forward.4} parent=43 // pred_check_branch
          %517 = sbr.rel (%p515) target = $region60
        $region59: #{conv_tasnet_forward.4} parent=43 // pred_region
          %s518 = smul.u32 3, %s32
          %p519 = scmp.lt.s32.totalorder %s518, 11
          %s520 = scalar_select %p519, %s518, 11
          %s521 = smul.addr %s520, 4
          %s522 = smul.addr %s521, 8
          %s523 = scalar_lea.vmem %s7, %s522
          %s524 = smul.u32 3, %s32
        $region60: #{conv_tasnet_forward.4} parent=43 // pred_fallthru
          _
        // Predicated region
        $region61: #{conv_tasnet_forward.4} parent=43 // pred_check
          %p525 = pneg %p244
        $region62: #{conv_tasnet_forward.4} parent=43 // pred_check_branch
          %527 = sbr.rel (%p525) target = $region64
        $region63: #{conv_tasnet_forward.4} parent=43 // pred_region
          %p528 = scmp.lt.s32.totalorder %s32, 3
          %s529 = scalar_select %p528, %s32, 3
          %s530 = smul.addr %s529, 4
          %s531 = smul.addr %s530, 8
          %s532 = scalar_lea.vmem %s8, %s531
        $region64: #{conv_tasnet_forward.4} parent=43 // pred_fallthru
          _
        // Predicated region
        $region65: #{conv_tasnet_forward.4} parent=43 // pred_check
          %p533 = pneg %p270
        $region66: #{conv_tasnet_forward.4} parent=43 // pred_check_branch
          %535 = sbr.rel (%p533) target = $region68
        $region67: #{conv_tasnet_forward.4} parent=43 // pred_region
          %p536 = scmp.lt.s32.totalorder %s32, 3
          %s537 = scalar_select %p536, %s32, 3
          %s538 = smul.addr %s537, 4
          %s539 = smul.addr %s538, 8
          %s540 = scalar_lea.vmem %s9, %s539
        $region68: #{conv_tasnet_forward.4} parent=43 // pred_fallthru
          _
        // Predicated region
        $region69: #{conv_tasnet_forward.4} parent=43 // pred_check
          %p541 = pneg %p296
        $region70: #{conv_tasnet_forward.4} parent=43 // pred_check_branch
          %543 = sbr.rel (%p541) target = $region72
        $region71: #{conv_tasnet_forward.4} parent=43 // pred_region
          %p544 = scmp.lt.s32.totalorder %s32, 3
          %s545 = scalar_select %p544, %s32, 3
          %s546 = smul.addr %s545, 4
          %s547 = smul.addr %s546, 8
          %s548 = scalar_lea.vmem %s10, %s547
        $region72: #{conv_tasnet_forward.4} parent=43 // pred_fallthru
          _
        // Predicated region
        $region73: #{conv_tasnet_forward.4} parent=43 // pred_check
          %p549 = pneg %p322
        $region74: #{conv_tasnet_forward.4} parent=43 // pred_check_branch
          %551 = sbr.rel (%p549) target = $region76
        $region75: #{conv_tasnet_forward.4} parent=43 // pred_region
          %p552 = scmp.lt.s32.totalorder %s32, 3
          %s553 = scalar_select %p552, %s32, 3
          %s554 = smul.addr %s553, 4
          %s555 = smul.addr %s554, 4
          %s556 = scalar_lea.vmem %s11, %s555
        $region76: #{conv_tasnet_forward.4} parent=43 // pred_fallthru
          _
        // Predicated region
        $region77: #{conv_tasnet_forward.4} parent=43 // pred_check
          %p557 = pneg %p348
        $region78: #{conv_tasnet_forward.4} parent=43 // pred_check_branch
          %559 = sbr.rel (%p557) target = $region80
        $region79: #{conv_tasnet_forward.4} parent=43 // pred_region
          %p560 = scmp.lt.s32.totalorder %s32, 3
          %s561 = scalar_select %p560, %s32, 3
          %s562 = smul.addr %s561, 4
          %s563 = smul.addr %s562, 8
          %s564 = scalar_lea.vmem %s12, %s563
        $region80: #{conv_tasnet_forward.4} parent=43 // pred_fallthru
          _
      $region44: #{conv_tasnet_forward.4} parent=5 // pred_fallthru
        _
      %p565 = scmp.le.s32.totalorder 1, %s24
      %p566 = scmp.lt.s32.totalorder %s24, 9
      %p567 = pnand %p565, %p566
      %p568 = pneg %p567
      // Predicated region
      $region81: #{conv_tasnet_forward.4} parent=5 // pred_check
        _
      $region82: #{conv_tasnet_forward.4} parent=5 // pred_check_branch
        %570 = sbr.rel (%p567) target = $region84
      $region83: #{conv_tasnet_forward.4} parent=5 // pred_region
        %s571 = ssub.s32 %s24, 1
        // Predicated region
        $region85: #{conv_tasnet_forward.4} parent=83 // pred_check
          %p572 = pneg %p396
        $region86: #{conv_tasnet_forward.4} parent=83 // pred_check_branch
          %574 = sbr.rel (%p572) target = $region88
        $region87: #{conv_tasnet_forward.4} parent=83 // pred_region
          %575 = dma.done [#allocation7], 16
        $region88: #{conv_tasnet_forward.4} parent=83 // pred_fallthru
          _
        %576 = sfence
        %p577 = scmp.lt.s32.totalorder %s33, 1
        %s578 = scalar_select %p577, %s33, 1
        %s579 = smul.addr %s578, 8
        %s580 = smul.addr %s579, 4
        %s581 = scalar_lea.vmem %s0, %s580
        %p582 = pneg %p62
        %p583 = pneg %p59
        %p584 = pneg %p83
        %p585 = pneg %p80
        %p586 = pneg %p104
        %p587 = pneg %p101
        %p588 = pneg %p125
        %p589 = pneg %p122
        %p590 = pneg %p146
        %p591 = pneg %p143
        %p592 = scmp.lt.s32.totalorder %s34, 3
        %s593 = scalar_select %p592, %s34, 3
        %s594 = smul.addr %s593, 4
        %s595 = smul.addr %s594, 4
        %s596 = scalar_lea.vmem %s5, %s595
        %p597 = pneg %p172
        %p598 = pneg %p169
        %p599 = scmp.lt.s32.totalorder %s34, 3
        %s600 = scalar_select %p599, %s34, 3
        %s601 = smul.addr %s600, 4
        %s602 = smul.addr %s601, 8
        %s603 = scalar_lea.vmem %s6, %s602
        %p604 = pneg %p198
        %p605 = pneg %p195
        %s606 = smul.u32 3, %s34
        %p607 = scmp.lt.s32.totalorder %s606, 11
        %s608 = scalar_select %p607, %s606, 11
        %s609 = smul.addr %s608, 4
        %s610 = smul.addr %s609, 8
        %s611 = scalar_lea.vmem %s7, %s610
        %p612 = pneg %p224
        %p613 = pneg %p221
        %p614 = scmp.lt.s32.totalorder %s34, 3
        %s615 = scalar_select %p614, %s34, 3
        %s616 = smul.addr %s615, 4
        %s617 = smul.addr %s616, 8
        %s618 = scalar_lea.vmem %s8, %s617
        %p619 = pneg %p250
        %p620 = pneg %p247
        %p621 = scmp.lt.s32.totalorder %s34, 3
        %s622 = scalar_select %p621, %s34, 3
        %s623 = smul.addr %s622, 4
        %s624 = smul.addr %s623, 8
        %s625 = scalar_lea.vmem %s9, %s624
        %p626 = pneg %p276
        %p627 = pneg %p273
        %p628 = scmp.lt.s32.totalorder %s34, 3
        %s629 = scalar_select %p628, %s34, 3
        %s630 = smul.addr %s629, 4
        %s631 = smul.addr %s630, 8
        %s632 = scalar_lea.vmem %s10, %s631
        %p633 = pneg %p302
        %p634 = pneg %p299
        %p635 = scmp.lt.s32.totalorder %s34, 3
        %s636 = scalar_select %p635, %s34, 3
        %s637 = smul.addr %s636, 4
        %s638 = smul.addr %s637, 4
        %s639 = scalar_lea.vmem %s11, %s638
        %p640 = pneg %p328
        %p641 = pneg %p325
        %p642 = scmp.lt.s32.totalorder %s34, 3
        %s643 = scalar_select %p642, %s34, 3
        %s644 = smul.addr %s643, 4
        %s645 = smul.addr %s644, 8
        %s646 = scalar_lea.vmem %s12, %s645
        %p647 = pneg %p354
        %p648 = pneg %p351
        %p649 = pneg %p375
        %p650 = pneg %p372
        %p651 = pneg %p396
        %p652 = pneg %p393
        %p653 = pneg %p417
        %p654 = pneg %p414
        %p655 = pneg %p443
        %p656 = pneg %p440
        %p657 = scmp.lt.s32.totalorder %s33, 1
        %s658 = scalar_select %p657, %s33, 1
        %s659 = smul.addr %s658, 16
        %s660 = smul.addr %s659, 4
        %s661 = scalar_lea.vmem %s16, %s660
        %p662 = scmp.lt.s32.totalorder %s33, 1
        %s663 = scalar_select %p662, %s33, 1
        %s664 = smul.addr %s663, 8
        %s665 = smul.addr %s664, 4
        %s666 = scalar_lea.vmem %s0, %s665
        %p667 = scmp.lt.s32.totalorder %s34, 3
        %s668 = scalar_select %p667, %s34, 3
        %s669 = smul.addr %s668, 4
        %s670 = smul.addr %s669, 4
        %s671 = scalar_lea.vmem %s5, %s670
        %p672 = scmp.lt.s32.totalorder %s34, 3
        %s673 = scalar_select %p672, %s34, 3
        %s674 = smul.addr %s673, 4
        %s675 = smul.addr %s674, 8
        %s676 = scalar_lea.vmem %s6, %s675
        %s677 = smul.u32 3, %s34
        %p678 = scmp.lt.s32.totalorder %s677, 11
        %s679 = scalar_select %p678, %s677, 11
        %s680 = smul.addr %s679, 4
        %s681 = smul.addr %s680, 8
        %s682 = scalar_lea.vmem %s7, %s681
        %s683 = smul.u32 3, %s34
        %p684 = scmp.lt.s32.totalorder %s34, 3
        %s685 = scalar_select %p684, %s34, 3
        %s686 = smul.addr %s685, 4
        %s687 = smul.addr %s686, 8
        %s688 = scalar_lea.vmem %s8, %s687
        %p689 = scmp.lt.s32.totalorder %s34, 3
        %s690 = scalar_select %p689, %s34, 3
        %s691 = smul.addr %s690, 4
        %s692 = smul.addr %s691, 8
        %s693 = scalar_lea.vmem %s9, %s692
        %p694 = scmp.lt.s32.totalorder %s34, 3
        %s695 = scalar_select %p694, %s34, 3
        %s696 = smul.addr %s695, 4
        %s697 = smul.addr %s696, 8
        %s698 = scalar_lea.vmem %s10, %s697
        %p699 = scmp.lt.s32.totalorder %s34, 3
        %s700 = scalar_select %p699, %s34, 3
        %s701 = smul.addr %s700, 4
        %s702 = smul.addr %s701, 4
        %s703 = scalar_lea.vmem %s11, %s702
        %p704 = scmp.lt.s32.totalorder %s34, 3
        %s705 = scalar_select %p704, %s34, 3
        %s706 = smul.addr %s705, 4
        %s707 = smul.addr %s706, 8
        %s708 = scalar_lea.vmem %s12, %s707
        %p709 = scmp.lt.s32.totalorder %s33, 1
        %s710 = scalar_select %p709, %s33, 1
        %s711 = smul.addr %s710, 16
        %s712 = smul.addr %s711, 4
        %s713 = scalar_lea.vmem %s16, %s712
        %v715 = vlaneseq
        %v716 = vand.u32 %v715, 127
        %v717 = vadd.s32 %v716, 128
        %v718 = vadd.s32 %v716, 256
        %v719 = vadd.s32 %v716, 384
        %vm720 = vcmp.lt.s32.totalorder %v716, 15
        %vm721 = vcmp.lt.s32.totalorder %v717, 15
        %vm722 = vcmp.lt.s32.totalorder %v718, 15
        %vm723 = vcmp.lt.s32.totalorder %v719, 15
        %v724 = vsel %vm720, 1, 0
        %v725 = vsel %vm721, 1, 0
        %v726 = vsel %vm722, 1, 0
        %v727 = vsel %vm723, 1, 0
        %v728 = vcvt.s32.f32 %v724
        %v729 = vcvt.s32.f32 %v725
        %v730 = vcvt.s32.f32 %v726
        %v731 = vcvt.s32.f32 %v727
        %p732 = scmp.eq.s32.totalorder %s34, 0
        // Predicated region
        $region89: #{conv_tasnet_forward.4} parent=83 // pred_check
          %p733 = pneg %p732
        $region90: #{conv_tasnet_forward.4} parent=83 // pred_check_branch
          %735 = sbr.rel (%p733) target = $region92
        $region91: #{conv_tasnet_forward.4} parent=83 // pred_region
          %v736 = vld [vmem:[%s666] sm:$0xff]
          %v737 = vld [vmem:[%s666 + $0x8] sm:$0xff]
          %v738 = vld [vmem:[%s666 + $0x10] sm:$0xff]
          %v739 = vld [vmem:[%s666 + $0x18] sm:$0xff]
          %v740 = vunpack.c.l.bf16 %v736
          %v741 = vunpack.c.h.bf16 %v736
          %v742 = vunpack.c.l.bf16 %v737
          %v743 = vunpack.c.h.bf16 %v737
          %v744 = vunpack.c.l.bf16 %v738
          %v745 = vunpack.c.h.bf16 %v738
          %v746 = vunpack.c.l.bf16 %v739
          %v747 = vunpack.c.h.bf16 %v739
          %v748 = vld [vmem:[%s1] sm:$0xff]
          %v749 = vld [vmem:[%s1 + $0x8] sm:$0xff]
          %v750 = vld [vmem:[%s2] sm:$0xff]
          %v751 = vld [vmem:[%s2 + $0x8] sm:$0xff]
          %v752 = vmul.f32 %v740, %v728
          %v753 = vmul.f32 %v741, %v729
          %v754 = vmul.f32 %v742, %v730
          %v755 = vmul.f32 %v743, %v731
          %v756 = vmul.f32 %v744, %v728
          %v757 = vmul.f32 %v745, %v729
          %v758 = vmul.f32 %v746, %v730
          %v759 = vmul.f32 %v747, %v731
          %v760 = vadd.f32 %v752, %v753
          %v761 = vadd.f32 %v760, %v754
          %v762 = vadd.f32 %v761, %v755
          %v763 = vadd.f32 %v762, %v756
          %v764 = vadd.f32 %v763, %v757
          %v765 = vadd.f32 %v764, %v758
          %v766 = vadd.f32 %v765, %v759
          %767 = vadd.xlane.f32.xlu0 %v766
          %v768 = vpop.xlane.xlu0 %767
          %v769 = vrot.slane %v768, 4
          %v770 = vadd.f32 %v768, %v769
          %v771 = vrot.slane %v770, 2
          %v772 = vadd.f32 %v770, %v771
          %v773 = vrot.slane %v772, 1
          %v774 = vadd.f32 %v772, %v773
          %s775 = vtos %v774
          %v776 = vmul.f32 %v752, %v752
          %v777 = vmul.f32 %v753, %v753
          %v778 = vmul.f32 %v754, %v754
          %v779 = vmul.f32 %v755, %v755
          %v780 = vmul.f32 %v756, %v756
          %v781 = vmul.f32 %v757, %v757
          %v782 = vmul.f32 %v758, %v758
          %v783 = vmul.f32 %v759, %v759
          %v784 = vadd.f32 %v776, %v777
          %v785 = vadd.f32 %v784, %v778
          %v786 = vadd.f32 %v785, %v779
          %v787 = vadd.f32 %v786, %v780
          %v788 = vadd.f32 %v787, %v781
          %v789 = vadd.f32 %v788, %v782
          %v790 = vadd.f32 %v789, %v783
          %791 = vadd.xlane.f32.xlu0 %v790
          %v792 = vpop.xlane.xlu0 %791
          %v793 = vrot.slane %v792, 4
          %v794 = vadd.f32 %v792, %v793
          %v795 = vrot.slane %v794, 2
          %v796 = vadd.f32 %v794, %v795
          %v797 = vrot.slane %v796, 1
          %v798 = vadd.f32 %v796, %v797
          %s799 = vtos %v798
          %s800 = smul.f32 %s775, 0.004166667
          %s801 = smul.f32 %s799, 0.004166667
          %s802 = smul.f32 %s800, %s800
          %s803 = ssub.f32 %s801, %s802
          %s804 = smax.f32 %s803, 0.0
          %v805 = vstv %s800
          %v806 = vsub.f32 %v740, %v805
          %v807 = vsub.f32 %v741, %v805
          %v808 = vsub.f32 %v742, %v805
          %v809 = vsub.f32 %v743, %v805
          %v810 = vsub.f32 %v744, %v805
          %v811 = vsub.f32 %v745, %v805
          %v812 = vsub.f32 %v746, %v805
          %v813 = vsub.f32 %v747, %v805
          %s814 = sadd.f32 %s804, 1e-08
          %v815 = vstv %s814
          %v816 = vrsqrt.pop %v815
          %s817 = vtos %v816
          %v818 = vstv %s817
          %v819 = vmul.f32 %v806, %v818
          %v820 = vmul.f32 %v807, %v818
          %v821 = vmul.f32 %v808, %v818
          %v822 = vmul.f32 %v809, %v818
          %v823 = vmul.f32 %v810, %v818
          %v824 = vmul.f32 %v811, %v818
          %v825 = vmul.f32 %v812, %v818
          %v826 = vmul.f32 %v813, %v818
          %828 = vset.pattern.permute.xlu0 0
          %829 = vperm.xlu0 %828, %v748
          %v830 = vpop.permute.xlu0 %829
          %833 = vset.pattern.permute.xlu0 0
          %834 = vperm.xlu0 %833, %v749
          %v835 = vpop.permute.xlu0 %834
          %v837 = vmul.f32 %v819, %v830
          %v838 = vmul.f32 %v820, %v830
          %v839 = vmul.f32 %v821, %v830
          %v840 = vmul.f32 %v822, %v830
          %v841 = vmul.f32 %v823, %v835
          %v842 = vmul.f32 %v824, %v835
          %v843 = vmul.f32 %v825, %v835
          %v844 = vmul.f32 %v826, %v835
          %846 = vset.pattern.permute.xlu0 0
          %847 = vperm.xlu0 %846, %v750
          %v848 = vpop.permute.xlu0 %847
          %851 = vset.pattern.permute.xlu0 0
          %852 = vperm.xlu0 %851, %v751
          %v853 = vpop.permute.xlu0 %852
          %v855 = vadd.f32 %v837, %v848
          %v856 = vadd.f32 %v838, %v848
          %v857 = vadd.f32 %v839, %v848
          %v858 = vadd.f32 %v840, %v848
          %v859 = vadd.f32 %v841, %v853
          %v860 = vadd.f32 %v842, %v853
          %v861 = vadd.f32 %v843, %v853
          %v862 = vadd.f32 %v844, %v853
          %v863 = vld [vmem:[%s3] sm:$0xf]
          %v864 = vld [vmem:[%s3 + $0x4] sm:$0xf]
          %v865 = vpack.c.bf16 %v859, %v855
          %v866 = vpack.c.bf16 %v860, %v856
          %v867 = vpack.c.bf16 %v861, %v857
          %v868 = vpack.c.bf16 %v862, %v858
          %v869 = vld [vmem:[%s4] sm:$0xff]
          %v870 = vld [vmem:[%s4 + $0x8] sm:$0xff]
          %872 = vset.pattern.permute.xlu0 0
          %873 = vperm.xlu0 %872, %v869
          %v874 = vpop.permute.xlu0 %873
          %877 = vset.pattern.permute.xlu0 0
          %878 = vperm.xlu0 %877, %v870
          %v879 = vpop.permute.xlu0 %878
          %v883 = vunpack.c.l.b16 %v863
          %v884 = vunpack.c.l.b16 %v864
          %v885 = vpack.c.b16 %v884, %v883
          %vm886 = vcmask 130048
          %v888 = vsel %vm886, %v885, 0
          %890 = vmatprep.subr.bf16.mxu0 %v866
          %891 = vmatpush1.bf16.msra.mxu0 %v865
          %892 = vmatprep.subr.bf16.mxu0 0
          %893 = vmatpush1.bf16.msra.mxu0 0
          %894 = vmatprep.subr.bf16.mxu0 0
          %895 = vmatpush1.bf16.msra.mxu0 0
          %896 = vmatprep.subr.bf16.mxu0 0
          %897 = vmatpush1.bf16.msra.mxu0 0
          %898 = vmatprep.subr.bf16.mxu0 0
          %899 = vmatpush1.bf16.msra.mxu0 0
          %900 = vmatprep.subr.bf16.mxu0 0
          %901 = vmatpush1.bf16.msra.mxu0 0
          %902 = vmatprep.subr.bf16.mxu0 0
          %903 = vmatpush1.bf16.msra.mxu0 0
          %904 = vmatprep.subr.bf16.mxu0 0
          %905 = vmatpush1.bf16.msra.mxu0 0
          %906 = vmatprep.subr.bf16.mxu0 0
          %907 = vmatpush1.bf16.msra.mxu0 0
          %908 = vmatprep.subr.bf16.mxu0 0
          %909 = vmatpush1.bf16.msra.mxu0 0
          %910 = vmatprep.subr.bf16.mxu0 0
          %911 = vmatpush1.bf16.msra.mxu0 0
          %912 = vmatprep.subr.bf16.mxu0 0
          %913 = vmatpush1.bf16.msra.mxu0 0
          %914 = vmatprep.subr.bf16.mxu0 0
          %915 = vmatpush1.bf16.msra.mxu0 0
          %916 = vmatprep.subr.bf16.mxu0 0
          %917 = vmatpush1.bf16.msra.mxu0 0
          %918 = vmatprep.subr.bf16.mxu0 0
          %919 = vmatpush1.bf16.msra.mxu0 0
          %920 = vmatprep.subr.bf16.mxu0 0
          %921 = vmatpush1.bf16.msra.mxu0 0
          %922 = vmatprep.mubr.bf16.mxu0 0
          %923 = vmatmul.mubr.bf16.gmra.mrb[0].mxu0 %v888
          %v924 = vpop.f32.mrb[0].mxu0
          %v925 = vadd.f32 %v874, %v924
          %v926 = vpop.f32.mrb[0].mxu0
          %v927 = vadd.f32 %v874, %v926
          %v928 = vpop.f32.mrb[0].mxu0
          %v929 = vadd.f32 %v879, %v928
          %v930 = vpop.f32.mrb[0].mxu0
          %v931 = vadd.f32 %v879, %v930
          %932 = vdwg.mxu0
          %933 = vmatprep.subr.bf16.mxu0 %v868
          %934 = vmatpush1.bf16.msra.mxu0 %v867
          %935 = vmatprep.subr.bf16.mxu0 0
          %936 = vmatpush1.bf16.msra.mxu0 0
          %937 = vmatprep.subr.bf16.mxu0 0
          %938 = vmatpush1.bf16.msra.mxu0 0
          %939 = vmatprep.subr.bf16.mxu0 0
          %940 = vmatpush1.bf16.msra.mxu0 0
          %941 = vmatprep.subr.bf16.mxu0 0
          %942 = vmatpush1.bf16.msra.mxu0 0
          %943 = vmatprep.subr.bf16.mxu0 0
          %944 = vmatpush1.bf16.msra.mxu0 0
          %945 = vmatprep.subr.bf16.mxu0 0
          %946 = vmatpush1.bf16.msra.mxu0 0
          %947 = vmatprep.subr.bf16.mxu0 0
          %948 = vmatpush1.bf16.msra.mxu0 0
          %949 = vmatprep.subr.bf16.mxu0 0
          %950 = vmatpush1.bf16.msra.mxu0 0
          %951 = vmatprep.subr.bf16.mxu0 0
          %952 = vmatpush1.bf16.msra.mxu0 0
          %953 = vmatprep.subr.bf16.mxu0 0
          %954 = vmatpush1.bf16.msra.mxu0 0
          %955 = vmatprep.subr.bf16.mxu0 0
          %956 = vmatpush1.bf16.msra.mxu0 0
          %957 = vmatprep.subr.bf16.mxu0 0
          %958 = vmatpush1.bf16.msra.mxu0 0
          %959 = vmatprep.subr.bf16.mxu0 0
          %960 = vmatpush1.bf16.msra.mxu0 0
          %961 = vmatprep.subr.bf16.mxu0 0
          %962 = vmatpush1.bf16.msra.mxu0 0
          %963 = vmatprep.subr.bf16.mxu0 0
          %964 = vmatpush1.bf16.msra.mxu0 0
          %965 = vmatprep.mubr.bf16.mxu0 0
          %966 = vmatmul.mubr.bf16.gmra.mrb[0].mxu0 %v888
          %v967 = vpop.f32.mrb[0].mxu0
          %v968 = vadd.f32 %v874, %v967
          %v969 = vpop.f32.mrb[0].mxu0
          %v970 = vadd.f32 %v874, %v969
          %v971 = vpop.f32.mrb[0].mxu0
          %v972 = vadd.f32 %v879, %v971
          %v973 = vpop.f32.mrb[0].mxu0
          %v974 = vadd.f32 %v879, %v973
          %975 = vdwg.mxu0
          %v976 = vmul.f32 %v925, %v728
          %v977 = vmul.f32 %v927, %v729
          %v978 = vmul.f32 %v968, %v730
          %v979 = vmul.f32 %v970, %v731
          %v980 = vmul.f32 %v929, %v728
          %v981 = vmul.f32 %v931, %v729
          %v982 = vmul.f32 %v972, %v730
          %v983 = vmul.f32 %v974, %v731
          %984 = vst [vmem:[#allocation2] sm:$0xff] %v976
          %985 = vst [vmem:[#allocation2 + $0x8] sm:$0xff] %v977
          %986 = vst [vmem:[#allocation2 + $0x10] sm:$0xff] %v978
          %987 = vst [vmem:[#allocation2 + $0x18] sm:$0xff] %v979
          %988 = vst [vmem:[#allocation2 + $0x20] sm:$0xff] %v980
          %989 = vst [vmem:[#allocation2 + $0x28] sm:$0xff] %v981
          %990 = vst [vmem:[#allocation2 + $0x30] sm:$0xff] %v982
          %991 = vst [vmem:[#allocation2 + $0x38] sm:$0xff] %v983
          %992 = vst [vmem:[#allocation3] sm:$0xff] 0.0
          %993 = vst [vmem:[#allocation3 + $0x8] sm:$0xff] 0.0
          %994 = vst [vmem:[#allocation3 + $0x10] sm:$0xff] 0.0
          %995 = vst [vmem:[#allocation3 + $0x18] sm:$0xff] 0.0
          %996 = vst [vmem:[#allocation3 + $0x20] sm:$0xff] 0.0
          %997 = vst [vmem:[#allocation3 + $0x28] sm:$0xff] 0.0
          %998 = vst [vmem:[#allocation3 + $0x30] sm:$0xff] 0.0
          %999 = vst [vmem:[#allocation3 + $0x38] sm:$0xff] 0.0
        $region92: #{conv_tasnet_forward.4} parent=83 // pred_fallthru
          _
        %s1000 = sld [smem:[#allocation6 + %s34]]
        %v1001 = vld [vmem:[%s693] sm:$0xff]
        %v1002 = vld [vmem:[%s693 + $0x8] sm:$0xff]
        %v1003 = vld [vmem:[%s693 + $0x10] sm:$0xff]
        %v1004 = vld [vmem:[%s693 + $0x18] sm:$0xff]
        %v1005 = vld [vmem:[%s698] sm:$0xff]
        %v1006 = vld [vmem:[%s698 + $0x8] sm:$0xff]
        %v1007 = vld [vmem:[%s698 + $0x10] sm:$0xff]
        %v1008 = vld [vmem:[%s698 + $0x18] sm:$0xff]
        %v1009 = vld [vmem:[#allocation2] sm:$0xff]
        %v1010 = vld [vmem:[#allocation2 + $0x8] sm:$0xff]
        %v1011 = vld [vmem:[#allocation2 + $0x10] sm:$0xff]
        %v1012 = vld [vmem:[#allocation2 + $0x18] sm:$0xff]
        %v1013 = vld [vmem:[#allocation2 + $0x20] sm:$0xff]
        %v1014 = vld [vmem:[#allocation2 + $0x28] sm:$0xff]
        %v1015 = vld [vmem:[#allocation2 + $0x30] sm:$0xff]
        %v1016 = vld [vmem:[#allocation2 + $0x38] sm:$0xff]
        %v1017 = vld [vmem:[%s671] sm:$0xf]
        %v1018 = vld [vmem:[%s671 + $0x4] sm:$0xf]
        %v1019 = vld [vmem:[%s671 + $0x8] sm:$0xf]
        %v1020 = vld [vmem:[%s671 + $0xc] sm:$0xf]
        %v1021 = vpack.c.bf16 %v1013, %v1009
        %v1022 = vpack.c.bf16 %v1014, %v1010
        %v1023 = vpack.c.bf16 %v1015, %v1011
        %v1024 = vpack.c.bf16 %v1016, %v1012
        %v1025 = vld [vmem:[%s676] sm:$0xff]
        %v1026 = vld [vmem:[%s676 + $0x8] sm:$0xff]
        %v1027 = vld [vmem:[%s676 + $0x10] sm:$0xff]
        %v1028 = vld [vmem:[%s676 + $0x18] sm:$0xff]
        %1030 = vset.pattern.permute.xlu0 0
        %1031 = vperm.xlu0 %1030, %v1025
        %v1032 = vpop.permute.xlu0 %1031
        %1035 = vset.pattern.permute.xlu0 0
        %1036 = vperm.xlu0 %1035, %v1026
        %v1037 = vpop.permute.xlu0 %1036
        %1040 = vset.pattern.permute.xlu0 0
        %1041 = vperm.xlu0 %1040, %v1027
        %v1042 = vpop.permute.xlu0 %1041
        %1045 = vset.pattern.permute.xlu0 0
        %1046 = vperm.xlu0 %1045, %v1028
        %v1047 = vpop.permute.xlu0 %1046
        %v1053 = vunpack.c.l.b16 %v1017
        %v1054 = vunpack.c.l.b16 %v1018
        %v1055 = vunpack.c.l.b16 %v1019
        %v1056 = vunpack.c.l.b16 %v1020
        %v1057 = vpack.c.b16 %v1054, %v1053
        %v1058 = vpack.c.b16 %v1056, %v1055
        %vm1059 = vcmask 130048
        %v1061 = vsel %vm1059, %v1057, 0
        %v1064 = vsel %vm1059, %v1058, 0
        %1066 = vmatprep.subr.bf16.mxu0 %v1022
        %1067 = vmatpush1.bf16.msra.mxu0 %v1021
        %1068 = vmatprep.subr.bf16.mxu0 0
        %1069 = vmatpush1.bf16.msra.mxu0 0
        %1070 = vmatprep.subr.bf16.mxu0 0
        %1071 = vmatpush1.bf16.msra.mxu0 0
        %1072 = vmatprep.subr.bf16.mxu0 0
        %1073 = vmatpush1.bf16.msra.mxu0 0
        %1074 = vmatprep.subr.bf16.mxu0 0
        %1075 = vmatpush1.bf16.msra.mxu0 0
        %1076 = vmatprep.subr.bf16.mxu0 0
        %1077 = vmatpush1.bf16.msra.mxu0 0
        %1078 = vmatprep.subr.bf16.mxu0 0
        %1079 = vmatpush1.bf16.msra.mxu0 0
        %1080 = vmatprep.subr.bf16.mxu0 0
        %1081 = vmatpush1.bf16.msra.mxu0 0
        %1082 = vmatprep.subr.bf16.mxu0 0
        %1083 = vmatpush1.bf16.msra.mxu0 0
        %1084 = vmatprep.subr.bf16.mxu0 0
        %1085 = vmatpush1.bf16.msra.mxu0 0
        %1086 = vmatprep.subr.bf16.mxu0 0
        %1087 = vmatpush1.bf16.msra.mxu0 0
        %1088 = vmatprep.subr.bf16.mxu0 0
        %1089 = vmatpush1.bf16.msra.mxu0 0
        %1090 = vmatprep.subr.bf16.mxu0 0
        %1091 = vmatpush1.bf16.msra.mxu0 0
        %1092 = vmatprep.subr.bf16.mxu0 0
        %1093 = vmatpush1.bf16.msra.mxu0 0
        %1094 = vmatprep.subr.bf16.mxu0 0
        %1095 = vmatpush1.bf16.msra.mxu0 0
        %1096 = vmatprep.subr.bf16.mxu0 0
        %1097 = vmatpush1.bf16.msra.mxu0 0
        %1098 = vmatprep.mubr.bf16.mxu0 0
        %1099 = vmatmul.mubr.bf16.gmra.mrb[0].mxu0 %v1061
        %v1100 = vpop.f32.mrb[0].mxu0
        %v1101 = vadd.f32 %v1032, %v1100
        %v1102 = vpop.f32.mrb[0].mxu0
        %v1103 = vadd.f32 %v1032, %v1102
        %v1104 = vpop.f32.mrb[0].mxu0
        %v1105 = vadd.f32 %v1037, %v1104
        %v1106 = vpop.f32.mrb[0].mxu0
        %v1107 = vadd.f32 %v1037, %v1106
        %1108 = vmatprep.mubr.bf16.mxu0 0
        %1109 = vmatmul.mubr.bf16.gmra.mrb[0].mxu0 %v1064
        %v1110 = vpop.f32.mrb[0].mxu0
        %v1111 = vadd.f32 %v1042, %v1110
        %v1112 = vpop.f32.mrb[0].mxu0
        %v1113 = vadd.f32 %v1042, %v1112
        %v1114 = vpop.f32.mrb[0].mxu0
        %v1115 = vadd.f32 %v1047, %v1114
        %v1116 = vpop.f32.mrb[0].mxu0
        %v1117 = vadd.f32 %v1047, %v1116
        %1118 = vdwg.mxu0
        %1119 = vmatprep.subr.bf16.mxu0 %v1024
        %1120 = vmatpush1.bf16.msra.mxu0 %v1023
        %1121 = vmatprep.subr.bf16.mxu0 0
        %1122 = vmatpush1.bf16.msra.mxu0 0
        %1123 = vmatprep.subr.bf16.mxu0 0
        %1124 = vmatpush1.bf16.msra.mxu0 0
        %1125 = vmatprep.subr.bf16.mxu0 0
        %1126 = vmatpush1.bf16.msra.mxu0 0
        %1127 = vmatprep.subr.bf16.mxu0 0
        %1128 = vmatpush1.bf16.msra.mxu0 0
        %1129 = vmatprep.subr.bf16.mxu0 0
        %1130 = vmatpush1.bf16.msra.mxu0 0
        %1131 = vmatprep.subr.bf16.mxu0 0
        %1132 = vmatpush1.bf16.msra.mxu0 0
        %1133 = vmatprep.subr.bf16.mxu0 0
        %1134 = vmatpush1.bf16.msra.mxu0 0
        %1135 = vmatprep.subr.bf16.mxu0 0
        %1136 = vmatpush1.bf16.msra.mxu0 0
        %1137 = vmatprep.subr.bf16.mxu0 0
        %1138 = vmatpush1.bf16.msra.mxu0 0
        %1139 = vmatprep.subr.bf16.mxu0 0
        %1140 = vmatpush1.bf16.msra.mxu0 0
        %1141 = vmatprep.subr.bf16.mxu0 0
        %1142 = vmatpush1.bf16.msra.mxu0 0
        %1143 = vmatprep.subr.bf16.mxu0 0
        %1144 = vmatpush1.bf16.msra.mxu0 0
        %1145 = vmatprep.subr.bf16.mxu0 0
        %1146 = vmatpush1.bf16.msra.mxu0 0
        %1147 = vmatprep.subr.bf16.mxu0 0
        %1148 = vmatpush1.bf16.msra.mxu0 0
        %1149 = vmatprep.subr.bf16.mxu0 0
        %1150 = vmatpush1.bf16.msra.mxu0 0
        %1151 = vmatprep.mubr.bf16.mxu0 0
        %1152 = vmatmul.mubr.bf16.gmra.mrb[0].mxu0 %v1061
        %v1153 = vpop.f32.mrb[0].mxu0
        %v1154 = vadd.f32 %v1032, %v1153
        %v1155 = vpop.f32.mrb[0].mxu0
        %v1156 = vadd.f32 %v1032, %v1155
        %v1157 = vpop.f32.mrb[0].mxu0
        %v1158 = vadd.f32 %v1037, %v1157
        %v1159 = vpop.f32.mrb[0].mxu0
        %v1160 = vadd.f32 %v1037, %v1159
        %1161 = vmatprep.mubr.bf16.mxu0 0
        %1162 = vmatmul.mubr.bf16.gmra.mrb[0].mxu0 %v1064
        %v1163 = vpop.f32.mrb[0].mxu0
        %v1164 = vadd.f32 %v1042, %v1163
        %v1165 = vpop.f32.mrb[0].mxu0
        %v1166 = vadd.f32 %v1042, %v1165
        %v1167 = vpop.f32.mrb[0].mxu0
        %v1168 = vadd.f32 %v1047, %v1167
        %v1169 = vpop.f32.mrb[0].mxu0
        %v1170 = vadd.f32 %v1047, %v1169
        %1171 = vdwg.mxu0
        %vm1172 = vcmp.ge.f32.partialorder %v1101, 0.0
        %vm1173 = vcmp.ge.f32.partialorder %v1103, 0.0
        %vm1174 = vcmp.ge.f32.partialorder %v1154, 0.0
        %vm1175 = vcmp.ge.f32.partialorder %v1156, 0.0
        %vm1176 = vcmp.ge.f32.partialorder %v1105, 0.0
        %vm1177 = vcmp.ge.f32.partialorder %v1107, 0.0
        %vm1178 = vcmp.ge.f32.partialorder %v1158, 0.0
        %vm1179 = vcmp.ge.f32.partialorder %v1160, 0.0
        %vm1180 = vcmp.ge.f32.partialorder %v1111, 0.0
        %vm1181 = vcmp.ge.f32.partialorder %v1113, 0.0
        %vm1182 = vcmp.ge.f32.partialorder %v1164, 0.0
        %vm1183 = vcmp.ge.f32.partialorder %v1166, 0.0
        %vm1184 = vcmp.ge.f32.partialorder %v1115, 0.0
        %vm1185 = vcmp.ge.f32.partialorder %v1117, 0.0
        %vm1186 = vcmp.ge.f32.partialorder %v1168, 0.0
        %vm1187 = vcmp.ge.f32.partialorder %v1170, 0.0
        %v1188 = vstv %s1000
        %v1189 = vmul.f32 %v1188, %v1101
        %v1190 = vmul.f32 %v1188, %v1103
        %v1191 = vmul.f32 %v1188, %v1154
        %v1192 = vmul.f32 %v1188, %v1156
        %v1193 = vmul.f32 %v1188, %v1105
        %v1194 = vmul.f32 %v1188, %v1107
        %v1195 = vmul.f32 %v1188, %v1158
        %v1196 = vmul.f32 %v1188, %v1160
        %v1197 = vmul.f32 %v1188, %v1111
        %v1198 = vmul.f32 %v1188, %v1113
        %v1199 = vmul.f32 %v1188, %v1164
        %v1200 = vmul.f32 %v1188, %v1166
        %v1201 = vmul.f32 %v1188, %v1115
        %v1202 = vmul.f32 %v1188, %v1117
        %v1203 = vmul.f32 %v1188, %v1168
        %v1204 = vmul.f32 %v1188, %v1170
        %v1205 = vsel %vm1172, %v1101, %v1189
        %v1206 = vsel %vm1173, %v1103, %v1190
        %v1207 = vsel %vm1174, %v1154, %v1191
        %v1208 = vsel %vm1175, %v1156, %v1192
        %v1209 = vsel %vm1176, %v1105, %v1193
        %v1210 = vsel %vm1177, %v1107, %v1194
        %v1211 = vsel %vm1178, %v1158, %v1195
        %v1212 = vsel %vm1179, %v1160, %v1196
        %v1213 = vsel %vm1180, %v1111, %v1197
        %v1214 = vsel %vm1181, %v1113, %v1198
        %v1215 = vsel %vm1182, %v1164, %v1199
        %v1216 = vsel %vm1183, %v1166, %v1200
        %v1217 = vsel %vm1184, %v1115, %v1201
        %v1218 = vsel %vm1185, %v1117, %v1202
        %v1219 = vsel %vm1186, %v1168, %v1203
        %v1220 = vsel %vm1187, %v1170, %v1204
        %v1221 = vmul.f32 %v1205, %v728
        %v1222 = vmul.f32 %v1206, %v729
        %v1223 = vmul.f32 %v1207, %v730
        %v1224 = vmul.f32 %v1208, %v731
        %v1225 = vmul.f32 %v1209, %v728
        %v1226 = vmul.f32 %v1210, %v729
        %v1227 = vmul.f32 %v1211, %v730
        %v1228 = vmul.f32 %v1212, %v731
        %v1229 = vmul.f32 %v1213, %v728
        %v1230 = vmul.f32 %v1214, %v729
        %v1231 = vmul.f32 %v1215, %v730
        %v1232 = vmul.f32 %v1216, %v731
        %v1233 = vmul.f32 %v1217, %v728
        %v1234 = vmul.f32 %v1218, %v729
        %v1235 = vmul.f32 %v1219, %v730
        %v1236 = vmul.f32 %v1220, %v731
        %v1237 = vadd.f32 %v1221, %v1222
        %v1238 = vadd.f32 %v1237, %v1223
        %v1239 = vadd.f32 %v1238, %v1224
        %v1240 = vadd.f32 %v1239, %v1225
        %v1241 = vadd.f32 %v1240, %v1226
        %v1242 = vadd.f32 %v1241, %v1227
        %v1243 = vadd.f32 %v1242, %v1228
        %v1244 = vadd.f32 %v1243, %v1229
        %v1245 = vadd.f32 %v1244, %v1230
        %v1246 = vadd.f32 %v1245, %v1231
        %v1247 = vadd.f32 %v1246, %v1232
        %v1248 = vadd.f32 %v1247, %v1233
        %v1249 = vadd.f32 %v1248, %v1234
        %v1250 = vadd.f32 %v1249, %v1235
        %v1251 = vadd.f32 %v1250, %v1236
        %1252 = vadd.xlane.f32.xlu0 %v1251
        %v1253 = vpop.xlane.xlu0 %1252
        %v1254 = vrot.slane %v1253, 4
        %v1255 = vadd.f32 %v1253, %v1254
        %v1256 = vrot.slane %v1255, 2
        %v1257 = vadd.f32 %v1255, %v1256
        %v1258 = vrot.slane %v1257, 1
        %v1259 = vadd.f32 %v1257, %v1258
        %s1260 = vtos %v1259
        %v1261 = vmul.f32 %v1221, %v1221
        %v1262 = vmul.f32 %v1222, %v1222
        %v1263 = vmul.f32 %v1223, %v1223
        %v1264 = vmul.f32 %v1224, %v1224
        %v1265 = vmul.f32 %v1225, %v1225
        %v1266 = vmul.f32 %v1226, %v1226
        %v1267 = vmul.f32 %v1227, %v1227
        %v1268 = vmul.f32 %v1228, %v1228
        %v1269 = vmul.f32 %v1229, %v1229
        %v1270 = vmul.f32 %v1230, %v1230
        %v1271 = vmul.f32 %v1231, %v1231
        %v1272 = vmul.f32 %v1232, %v1232
        %v1273 = vmul.f32 %v1233, %v1233
        %v1274 = vmul.f32 %v1234, %v1234
        %v1275 = vmul.f32 %v1235, %v1235
        %v1276 = vmul.f32 %v1236, %v1236
        %v1277 = vadd.f32 %v1261, %v1262
        %v1278 = vadd.f32 %v1277, %v1263
        %v1279 = vadd.f32 %v1278, %v1264
        %v1280 = vadd.f32 %v1279, %v1265
        %v1281 = vadd.f32 %v1280, %v1266
        %v1282 = vadd.f32 %v1281, %v1267
        %v1283 = vadd.f32 %v1282, %v1268
        %v1284 = vadd.f32 %v1283, %v1269
        %v1285 = vadd.f32 %v1284, %v1270
        %v1286 = vadd.f32 %v1285, %v1271
        %v1287 = vadd.f32 %v1286, %v1272
        %v1288 = vadd.f32 %v1287, %v1273
        %v1289 = vadd.f32 %v1288, %v1274
        %v1290 = vadd.f32 %v1289, %v1275
        %v1291 = vadd.f32 %v1290, %v1276
        %1292 = vadd.xlane.f32.xlu0 %v1291
        %v1293 = vpop.xlane.xlu0 %1292
        %v1294 = vrot.slane %v1293, 4
        %v1295 = vadd.f32 %v1293, %v1294
        %v1296 = vrot.slane %v1295, 2
        %v1297 = vadd.f32 %v1295, %v1296
        %v1298 = vrot.slane %v1297, 1
        %v1299 = vadd.f32 %v1297, %v1298
        %s1300 = vtos %v1299
        %s1301 = smul.f32 %s1260, 0.0020833334
        %s1302 = smul.f32 %s1300, 0.0020833334
        %s1303 = smul.f32 %s1301, %s1301
        %s1304 = ssub.f32 %s1302, %s1303
        %s1305 = smax.f32 %s1304, 0.0
        %v1306 = vstv %s1301
        %v1307 = vsub.f32 %v1205, %v1306
        %v1308 = vsub.f32 %v1206, %v1306
        %v1309 = vsub.f32 %v1207, %v1306
        %v1310 = vsub.f32 %v1208, %v1306
        %v1311 = vsub.f32 %v1209, %v1306
        %v1312 = vsub.f32 %v1210, %v1306
        %v1313 = vsub.f32 %v1211, %v1306
        %v1314 = vsub.f32 %v1212, %v1306
        %v1315 = vsub.f32 %v1213, %v1306
        %v1316 = vsub.f32 %v1214, %v1306
        %v1317 = vsub.f32 %v1215, %v1306
        %v1318 = vsub.f32 %v1216, %v1306
        %v1319 = vsub.f32 %v1217, %v1306
        %v1320 = vsub.f32 %v1218, %v1306
        %v1321 = vsub.f32 %v1219, %v1306
        %v1322 = vsub.f32 %v1220, %v1306
        %s1323 = sadd.f32 %s1305, 1e-08
        %v1324 = vstv %s1323
        %v1325 = vrsqrt.pop %v1324
        %s1326 = vtos %v1325
        %v1327 = vstv %s1326
        %v1328 = vmul.f32 %v1307, %v1327
        %v1329 = vmul.f32 %v1308, %v1327
        %v1330 = vmul.f32 %v1309, %v1327
        %v1331 = vmul.f32 %v1310, %v1327
        %v1332 = vmul.f32 %v1311, %v1327
        %v1333 = vmul.f32 %v1312, %v1327
        %v1334 = vmul.f32 %v1313, %v1327
        %v1335 = vmul.f32 %v1314, %v1327
        %v1336 = vmul.f32 %v1315, %v1327
        %v1337 = vmul.f32 %v1316, %v1327
        %v1338 = vmul.f32 %v1317, %v1327
        %v1339 = vmul.f32 %v1318, %v1327
        %v1340 = vmul.f32 %v1319, %v1327
        %v1341 = vmul.f32 %v1320, %v1327
        %v1342 = vmul.f32 %v1321, %v1327
        %v1343 = vmul.f32 %v1322, %v1327
        %1345 = vset.pattern.permute.xlu0 0
        %1346 = vperm.xlu0 %1345, %v1001
        %v1347 = vpop.permute.xlu0 %1346
        %1350 = vset.pattern.permute.xlu0 0
        %1351 = vperm.xlu0 %1350, %v1002
        %v1352 = vpop.permute.xlu0 %1351
        %1355 = vset.pattern.permute.xlu0 0
        %1356 = vperm.xlu0 %1355, %v1003
        %v1357 = vpop.permute.xlu0 %1356
        %1360 = vset.pattern.permute.xlu0 0
        %1361 = vperm.xlu0 %1360, %v1004
        %v1362 = vpop.permute.xlu0 %1361
        %v1364 = vmul.f32 %v1328, %v1347
        %v1365 = vmul.f32 %v1329, %v1347
        %v1366 = vmul.f32 %v1330, %v1347
        %v1367 = vmul.f32 %v1331, %v1347
        %v1368 = vmul.f32 %v1332, %v1352
        %v1369 = vmul.f32 %v1333, %v1352
        %v1370 = vmul.f32 %v1334, %v1352
        %v1371 = vmul.f32 %v1335, %v1352
        %v1372 = vmul.f32 %v1336, %v1357
        %v1373 = vmul.f32 %v1337, %v1357
        %v1374 = vmul.f32 %v1338, %v1357
        %v1375 = vmul.f32 %v1339, %v1357
        %v1376 = vmul.f32 %v1340, %v1362
        %v1377 = vmul.f32 %v1341, %v1362
        %v1378 = vmul.f32 %v1342, %v1362
        %v1379 = vmul.f32 %v1343, %v1362
        %1381 = vset.pattern.permute.xlu0 0
        %1382 = vperm.xlu0 %1381, %v1005
        %v1383 = vpop.permute.xlu0 %1382
        %1386 = vset.pattern.permute.xlu0 0
        %1387 = vperm.xlu0 %1386, %v1006
        %v1388 = vpop.permute.xlu0 %1387
        %1391 = vset.pattern.permute.xlu0 0
        %1392 = vperm.xlu0 %1391, %v1007
        %v1393 = vpop.permute.xlu0 %1392
        %1396 = vset.pattern.permute.xlu0 0
        %1397 = vperm.xlu0 %1396, %v1008
        %v1398 = vpop.permute.xlu0 %1397
        %v1400 = vadd.f32 %v1364, %v1383
        %v1401 = vadd.f32 %v1365, %v1383
        %v1402 = vadd.f32 %v1366, %v1383
        %v1403 = vadd.f32 %v1367, %v1383
        %v1404 = vadd.f32 %v1368, %v1388
        %v1405 = vadd.f32 %v1369, %v1388
        %v1406 = vadd.f32 %v1370, %v1388
        %v1407 = vadd.f32 %v1371, %v1388
        %v1408 = vadd.f32 %v1372, %v1393
        %v1409 = vadd.f32 %v1373, %v1393
        %v1410 = vadd.f32 %v1374, %v1393
        %v1411 = vadd.f32 %v1375, %v1393
        %v1412 = vadd.f32 %v1376, %v1398
        %v1413 = vadd.f32 %v1377, %v1398
        %v1414 = vadd.f32 %v1378, %v1398
        %v1415 = vadd.f32 %v1379, %v1398
        %v1416 = vmul.f32 %v1400, %v728
        %v1417 = vmul.f32 %v1401, %v729
        %v1418 = vmul.f32 %v1402, %v730
        %v1419 = vmul.f32 %v1403, %v731
        %v1420 = vmul.f32 %v1404, %v728
        %v1421 = vmul.f32 %v1405, %v729
        %v1422 = vmul.f32 %v1406, %v730
        %v1423 = vmul.f32 %v1407, %v731
        %v1424 = vmul.f32 %v1408, %v728
        %v1425 = vmul.f32 %v1409, %v729
        %v1426 = vmul.f32 %v1410, %v730
        %v1427 = vmul.f32 %v1411, %v731
        %v1428 = vmul.f32 %v1412, %v728
        %v1429 = vmul.f32 %v1413, %v729
        %v1430 = vmul.f32 %v1414, %v730
        %v1431 = vmul.f32 %v1415, %v731
        %p1432 = scmp.lt.s32.totalorder %s34, 0
        %s1433 = ssub.s32 0, %s34
        %s1434 = scalar_select %p1432, %s1433, %s34
        %s1435 = sand.u32 %s1434, 1
        %s1436 = ssub.s32 0, %s1435
        %s1437 = scalar_select %p1432, %s1436, %s1435
        %p1438 = scmp.ne.s32.totalorder %s1437, 0
        %p1439 = scmp.lt.s32.totalorder %s1437, 0
        %p1440 = pnand %p1439, %p1438
        %p1441 = pneg %p1440
        %s1442 = sadd.s32 %s1437, 2
        %s1443 = scalar_select %p1441, %s1442, %s1437
        %p1444 = scmp.eq.s32.totalorder %s1443, 0
        // Predicated region
        $region93: #{conv_tasnet_forward.4} parent=83 // pred_check
          %p1445 = pneg %p1444
        $region94: #{conv_tasnet_forward.4} parent=83 // pred_check_branch
          %1447 = sbr.rel (%p1445) target = $region96
        $region95: #{conv_tasnet_forward.4} parent=83 // pred_region
          %1448 = vrot.lane.b32.xlu0 %v1416, 1
          %v1449 = vpop.permute.xlu0 %1448
          %1450 = vrot.lane.b32.xlu0 %v1420, 1
          %v1451 = vpop.permute.xlu0 %1450
          %1452 = vrot.lane.b32.xlu0 %v1424, 1
          %v1453 = vpop.permute.xlu0 %1452
          %1454 = vrot.lane.b32.xlu0 %v1428, 1
          %v1455 = vpop.permute.xlu0 %1454
          %1456 = vrot.lane.b32.xlu0 %v1417, 1
          %v1457 = vpop.permute.xlu0 %1456
          %1458 = vrot.lane.b32.xlu0 %v1421, 1
          %v1459 = vpop.permute.xlu0 %1458
          %1460 = vrot.lane.b32.xlu0 %v1425, 1
          %v1461 = vpop.permute.xlu0 %1460
          %1462 = vrot.lane.b32.xlu0 %v1429, 1
          %v1463 = vpop.permute.xlu0 %1462
          %1464 = vrot.lane.b32.xlu0 %v1418, 1
          %v1465 = vpop.permute.xlu0 %1464
          %1466 = vrot.lane.b32.xlu0 %v1422, 1
          %v1467 = vpop.permute.xlu0 %1466
          %1468 = vrot.lane.b32.xlu0 %v1426, 1
          %v1469 = vpop.permute.xlu0 %1468
          %1470 = vrot.lane.b32.xlu0 %v1430, 1
          %v1471 = vpop.permute.xlu0 %1470
          %1472 = vrot.lane.b32.xlu0 %v1419, 1
          %v1473 = vpop.permute.xlu0 %1472
          %1474 = vrot.lane.b32.xlu0 %v1423, 1
          %v1475 = vpop.permute.xlu0 %1474
          %1476 = vrot.lane.b32.xlu0 %v1427, 1
          %v1477 = vpop.permute.xlu0 %1476
          %1478 = vrot.lane.b32.xlu0 %v1431, 1
          %v1479 = vpop.permute.xlu0 %1478
          %vm1480 = vcmp.lt.s32.totalorder %v716, 1
          %v1481 = vsel %vm1480, %v1465, %v1473
          %v1482 = vsel %vm1480, %v1467, %v1475
          %v1483 = vsel %vm1480, %v1469, %v1477
          %v1484 = vsel %vm1480, %v1471, %v1479
          %v1485 = vsel %vm1480, %v1457, %v1465
          %v1486 = vsel %vm1480, %v1459, %v1467
          %v1487 = vsel %vm1480, %v1461, %v1469
          %v1488 = vsel %vm1480, %v1463, %v1471
          %v1489 = vsel %vm1480, %v1449, %v1457
          %v1490 = vsel %vm1480, %v1451, %v1459
          %v1491 = vsel %vm1480, %v1453, %v1461
          %v1492 = vsel %vm1480, %v1455, %v1463
          %v1493 = vsel %vm1480, %v1473, %v1449
          %v1494 = vsel %vm1480, %v1475, %v1451
          %v1495 = vsel %vm1480, %v1477, %v1453
          %v1496 = vsel %vm1480, %v1479, %v1455
          %v1497 = vld [vmem:[%s682] sm:$0xff]
          %v1498 = vld [vmem:[%s682 + $0x8] sm:$0xff]
          %v1499 = vld [vmem:[%s682 + $0x10] sm:$0xff]
          %v1500 = vld [vmem:[%s682 + $0x18] sm:$0xff]
          %1502 = vset.pattern.permute.xlu0 0
          %1503 = vperm.xlu0 %1502, %v1497
          %v1504 = vpop.permute.xlu0 %1503
          %1507 = vset.pattern.permute.xlu0 0
          %1508 = vperm.xlu0 %1507, %v1498
          %v1509 = vpop.permute.xlu0 %1508
          %1512 = vset.pattern.permute.xlu0 0
          %1513 = vperm.xlu0 %1512, %v1499
          %v1514 = vpop.permute.xlu0 %1513
          %1517 = vset.pattern.permute.xlu0 0
          %1518 = vperm.xlu0 %1517, %v1500
          %v1519 = vpop.permute.xlu0 %1518
          %v1521 = vmul.f32 %v1504, %v1493
          %v1522 = vmul.f32 %v1504, %v1489
          %v1523 = vmul.f32 %v1504, %v1485
          %v1524 = vmul.f32 %v1504, %v1481
          %v1525 = vmul.f32 %v1509, %v1494
          %v1526 = vmul.f32 %v1509, %v1490
          %v1527 = vmul.f32 %v1509, %v1486
          %v1528 = vmul.f32 %v1509, %v1482
          %v1529 = vmul.f32 %v1514, %v1495
          %v1530 = vmul.f32 %v1514, %v1491
          %v1531 = vmul.f32 %v1514, %v1487
          %v1532 = vmul.f32 %v1514, %v1483
          %v1533 = vmul.f32 %v1519, %v1496
          %v1534 = vmul.f32 %v1519, %v1492
          %v1535 = vmul.f32 %v1519, %v1488
          %v1536 = vmul.f32 %v1519, %v1484
          %s1537 = scalar_lea.vmem %s682, 32
          %v1538 = vld [vmem:[%s1537] sm:$0xff]
          %v1539 = vld [vmem:[%s1537 + $0x8] sm:$0xff]
          %v1540 = vld [vmem:[%s1537 + $0x10] sm:$0xff]
          %v1541 = vld [vmem:[%s1537 + $0x18] sm:$0xff]
          %1543 = vset.pattern.permute.xlu0 0
          %1544 = vperm.xlu0 %1543, %v1538
          %v1545 = vpop.permute.xlu0 %1544
          %1548 = vset.pattern.permute.xlu0 0
          %1549 = vperm.xlu0 %1548, %v1539
          %v1550 = vpop.permute.xlu0 %1549
          %1553 = vset.pattern.permute.xlu0 0
          %1554 = vperm.xlu0 %1553, %v1540
          %v1555 = vpop.permute.xlu0 %1554
          %1558 = vset.pattern.permute.xlu0 0
          %1559 = vperm.xlu0 %1558, %v1541
          %v1560 = vpop.permute.xlu0 %1559
          %v1562 = vmul.f32 %v1545, %v1416
          %v1563 = vmul.f32 %v1545, %v1417
          %v1564 = vmul.f32 %v1545, %v1418
          %v1565 = vmul.f32 %v1545, %v1419
          %v1566 = vmul.f32 %v1550, %v1420
          %v1567 = vmul.f32 %v1550, %v1421
          %v1568 = vmul.f32 %v1550, %v1422
          %v1569 = vmul.f32 %v1550, %v1423
          %v1570 = vmul.f32 %v1555, %v1424
          %v1571 = vmul.f32 %v1555, %v1425
          %v1572 = vmul.f32 %v1555, %v1426
          %v1573 = vmul.f32 %v1555, %v1427
          %v1574 = vmul.f32 %v1560, %v1428
          %v1575 = vmul.f32 %v1560, %v1429
          %v1576 = vmul.f32 %v1560, %v1430
          %v1577 = vmul.f32 %v1560, %v1431
          %v1578 = vadd.f32 %v1521, %v1562
          %v1579 = vadd.f32 %v1522, %v1563
          %v1580 = vadd.f32 %v1523, %v1564
          %v1581 = vadd.f32 %v1524, %v1565
          %v1582 = vadd.f32 %v1525, %v1566
          %v1583 = vadd.f32 %v1526, %v1567
          %v1584 = vadd.f32 %v1527, %v1568
          %v1585 = vadd.f32 %v1528, %v1569
          %v1586 = vadd.f32 %v1529, %v1570
          %v1587 = vadd.f32 %v1530, %v1571
          %v1588 = vadd.f32 %v1531, %v1572
          %v1589 = vadd.f32 %v1532, %v1573
          %v1590 = vadd.f32 %v1533, %v1574
          %v1591 = vadd.f32 %v1534, %v1575
          %v1592 = vadd.f32 %v1535, %v1576
          %v1593 = vadd.f32 %v1536, %v1577
          %1594 = vrot.lane.b32.xlu0 %v1416, 127
          %v1595 = vpop.permute.xlu0 %1594
          %1596 = vrot.lane.b32.xlu0 %v1420, 127
          %v1597 = vpop.permute.xlu0 %1596
          %1598 = vrot.lane.b32.xlu0 %v1424, 127
          %v1599 = vpop.permute.xlu0 %1598
          %1600 = vrot.lane.b32.xlu0 %v1428, 127
          %v1601 = vpop.permute.xlu0 %1600
          %1602 = vrot.lane.b32.xlu0 %v1417, 127
          %v1603 = vpop.permute.xlu0 %1602
          %1604 = vrot.lane.b32.xlu0 %v1421, 127
          %v1605 = vpop.permute.xlu0 %1604
          %1606 = vrot.lane.b32.xlu0 %v1425, 127
          %v1607 = vpop.permute.xlu0 %1606
          %1608 = vrot.lane.b32.xlu0 %v1429, 127
          %v1609 = vpop.permute.xlu0 %1608
          %1610 = vrot.lane.b32.xlu0 %v1418, 127
          %v1611 = vpop.permute.xlu0 %1610
          %1612 = vrot.lane.b32.xlu0 %v1422, 127
          %v1613 = vpop.permute.xlu0 %1612
          %1614 = vrot.lane.b32.xlu0 %v1426, 127
          %v1615 = vpop.permute.xlu0 %1614
          %1616 = vrot.lane.b32.xlu0 %v1430, 127
          %v1617 = vpop.permute.xlu0 %1616
          %1618 = vrot.lane.b32.xlu0 %v1419, 127
          %v1619 = vpop.permute.xlu0 %1618
          %1620 = vrot.lane.b32.xlu0 %v1423, 127
          %v1621 = vpop.permute.xlu0 %1620
          %1622 = vrot.lane.b32.xlu0 %v1427, 127
          %v1623 = vpop.permute.xlu0 %1622
          %1624 = vrot.lane.b32.xlu0 %v1431, 127
          %v1625 = vpop.permute.xlu0 %1624
          %vm1626 = vcmp.lt.s32.totalorder %v716, 127
          %v1627 = vsel %vm1626, %v1611, %v1619
          %v1628 = vsel %vm1626, %v1613, %v1621
          %v1629 = vsel %vm1626, %v1615, %v1623
          %v1630 = vsel %vm1626, %v1617, %v1625
          %v1631 = vsel %vm1626, %v1603, %v1611
          %v1632 = vsel %vm1626, %v1605, %v1613
          %v1633 = vsel %vm1626, %v1607, %v1615
          %v1634 = vsel %vm1626, %v1609, %v1617
          %v1635 = vsel %vm1626, %v1595, %v1603
          %v1636 = vsel %vm1626, %v1597, %v1605
          %v1637 = vsel %vm1626, %v1599, %v1607
          %v1638 = vsel %vm1626, %v1601, %v1609
          %v1639 = vsel %vm1626, %v1619, %v1595
          %v1640 = vsel %vm1626, %v1621, %v1597
          %v1641 = vsel %vm1626, %v1623, %v1599
          %v1642 = vsel %vm1626, %v1625, %v1601
          %s1643 = scalar_lea.vmem %s682, 64
          %v1644 = vld [vmem:[%s1643] sm:$0xff]
          %v1645 = vld [vmem:[%s1643 + $0x8] sm:$0xff]
          %v1646 = vld [vmem:[%s1643 + $0x10] sm:$0xff]
          %v1647 = vld [vmem:[%s1643 + $0x18] sm:$0xff]
          %1649 = vset.pattern.permute.xlu0 0
          %1650 = vperm.xlu0 %1649, %v1644
          %v1651 = vpop.permute.xlu0 %1650
          %1654 = vset.pattern.permute.xlu0 0
          %1655 = vperm.xlu0 %1654, %v1645
          %v1656 = vpop.permute.xlu0 %1655
          %1659 = vset.pattern.permute.xlu0 0
          %1660 = vperm.xlu0 %1659, %v1646
          %v1661 = vpop.permute.xlu0 %1660
          %1664 = vset.pattern.permute.xlu0 0
          %1665 = vperm.xlu0 %1664, %v1647
          %v1666 = vpop.permute.xlu0 %1665
          %v1668 = vmul.f32 %v1651, %v1635
          %v1669 = vmul.f32 %v1651, %v1631
          %v1670 = vmul.f32 %v1651, %v1627
          %v1671 = vmul.f32 %v1651, %v1639
          %v1672 = vmul.f32 %v1656, %v1636
          %v1673 = vmul.f32 %v1656, %v1632
          %v1674 = vmul.f32 %v1656, %v1628
          %v1675 = vmul.f32 %v1656, %v1640
          %v1676 = vmul.f32 %v1661, %v1637
          %v1677 = vmul.f32 %v1661, %v1633
          %v1678 = vmul.f32 %v1661, %v1629
          %v1679 = vmul.f32 %v1661, %v1641
          %v1680 = vmul.f32 %v1666, %v1638
          %v1681 = vmul.f32 %v1666, %v1634
          %v1682 = vmul.f32 %v1666, %v1630
          %v1683 = vmul.f32 %v1666, %v1642
          %v1684 = vadd.f32 %v1578, %v1668
          %v1685 = vadd.f32 %v1579, %v1669
          %v1686 = vadd.f32 %v1580, %v1670
          %v1687 = vadd.f32 %v1581, %v1671
          %v1688 = vadd.f32 %v1582, %v1672
          %v1689 = vadd.f32 %v1583, %v1673
          %v1690 = vadd.f32 %v1584, %v1674
          %v1691 = vadd.f32 %v1585, %v1675
          %v1692 = vadd.f32 %v1586, %v1676
          %v1693 = vadd.f32 %v1587, %v1677
          %v1694 = vadd.f32 %v1588, %v1678
          %v1695 = vadd.f32 %v1589, %v1679
          %v1696 = vadd.f32 %v1590, %v1680
          %v1697 = vadd.f32 %v1591, %v1681
          %v1698 = vadd.f32 %v1592, %v1682
          %v1699 = vadd.f32 %v1593, %v1683
          %1700 = vst [vmem:[#allocation4] sm:$0xff] %v1684
          %1701 = vst [vmem:[#allocation4 + $0x8] sm:$0xff] %v1685
          %1702 = vst [vmem:[#allocation4 + $0x10] sm:$0xff] %v1686
          %1703 = vst [vmem:[#allocation4 + $0x18] sm:$0xff] %v1687
          %1704 = vst [vmem:[#allocation4 + $0x20] sm:$0xff] %v1688
          %1705 = vst [vmem:[#allocation4 + $0x28] sm:$0xff] %v1689
          %1706 = vst [vmem:[#allocation4 + $0x30] sm:$0xff] %v1690
          %1707 = vst [vmem:[#allocation4 + $0x38] sm:$0xff] %v1691
          %1708 = vst [vmem:[#allocation4 + $0x40] sm:$0xff] %v1692
          %1709 = vst [vmem:[#allocation4 + $0x48] sm:$0xff] %v1693
          %1710 = vst [vmem:[#allocation4 + $0x50] sm:$0xff] %v1694
          %1711 = vst [vmem:[#allocation4 + $0x58] sm:$0xff] %v1695
          %1712 = vst [vmem:[#allocation4 + $0x60] sm:$0xff] %v1696
          %1713 = vst [vmem:[#allocation4 + $0x68] sm:$0xff] %v1697
          %1714 = vst [vmem:[#allocation4 + $0x70] sm:$0xff] %v1698
          %1715 = vst [vmem:[#allocation4 + $0x78] sm:$0xff] %v1699
        $region96: #{conv_tasnet_forward.4} parent=83 // pred_fallthru
          _
        %p1716 = scmp.eq.s32.totalorder %s1443, 1
        // Predicated region
        $region97: #{conv_tasnet_forward.4} parent=83 // pred_check
          %p1717 = pneg %p1716
        $region98: #{conv_tasnet_forward.4} parent=83 // pred_check_branch
          %1719 = sbr.rel (%p1717) target = $region100
        $region99: #{conv_tasnet_forward.4} parent=83 // pred_region
          %1720 = vrot.lane.b32.xlu0 %v1416, 2
          %v1721 = vpop.permute.xlu0 %1720
          %1722 = vrot.lane.b32.xlu0 %v1420, 2
          %v1723 = vpop.permute.xlu0 %1722
          %1724 = vrot.lane.b32.xlu0 %v1424, 2
          %v1725 = vpop.permute.xlu0 %1724
          %1726 = vrot.lane.b32.xlu0 %v1428, 2
          %v1727 = vpop.permute.xlu0 %1726
          %1728 = vrot.lane.b32.xlu0 %v1417, 2
          %v1729 = vpop.permute.xlu0 %1728
          %1730 = vrot.lane.b32.xlu0 %v1421, 2
          %v1731 = vpop.permute.xlu0 %1730
          %1732 = vrot.lane.b32.xlu0 %v1425, 2
          %v1733 = vpop.permute.xlu0 %1732
          %1734 = vrot.lane.b32.xlu0 %v1429, 2
          %v1735 = vpop.permute.xlu0 %1734
          %1736 = vrot.lane.b32.xlu0 %v1418, 2
          %v1737 = vpop.permute.xlu0 %1736
          %1738 = vrot.lane.b32.xlu0 %v1422, 2
          %v1739 = vpop.permute.xlu0 %1738
          %1740 = vrot.lane.b32.xlu0 %v1426, 2
          %v1741 = vpop.permute.xlu0 %1740
          %1742 = vrot.lane.b32.xlu0 %v1430, 2
          %v1743 = vpop.permute.xlu0 %1742
          %1744 = vrot.lane.b32.xlu0 %v1419, 2
          %v1745 = vpop.permute.xlu0 %1744
          %1746 = vrot.lane.b32.xlu0 %v1423, 2
          %v1747 = vpop.permute.xlu0 %1746
          %1748 = vrot.lane.b32.xlu0 %v1427, 2
          %v1749 = vpop.permute.xlu0 %1748
          %1750 = vrot.lane.b32.xlu0 %v1431, 2
          %v1751 = vpop.permute.xlu0 %1750
          %vm1752 = vcmp.lt.s32.totalorder %v716, 2
          %v1753 = vsel %vm1752, %v1737, %v1745
          %v1754 = vsel %vm1752, %v1739, %v1747
          %v1755 = vsel %vm1752, %v1741, %v1749
          %v1756 = vsel %vm1752, %v1743, %v1751
          %v1757 = vsel %vm1752, %v1729, %v1737
          %v1758 = vsel %vm1752, %v1731, %v1739
          %v1759 = vsel %vm1752, %v1733, %v1741
          %v1760 = vsel %vm1752, %v1735, %v1743
          %v1761 = vsel %vm1752, %v1721, %v1729
          %v1762 = vsel %vm1752, %v1723, %v1731
          %v1763 = vsel %vm1752, %v1725, %v1733
          %v1764 = vsel %vm1752, %v1727, %v1735
          %v1765 = vsel %vm1752, %v1745, %v1721
          %v1766 = vsel %vm1752, %v1747, %v1723
          %v1767 = vsel %vm1752, %v1749, %v1725
          %v1768 = vsel %vm1752, %v1751, %v1727
          %v1769 = vld [vmem:[%s682] sm:$0xff]
          %v1770 = vld [vmem:[%s682 + $0x8] sm:$0xff]
          %v1771 = vld [vmem:[%s682 + $0x10] sm:$0xff]
          %v1772 = vld [vmem:[%s682 + $0x18] sm:$0xff]
          %1774 = vset.pattern.permute.xlu0 0
          %1775 = vperm.xlu0 %1774, %v1769
          %v1776 = vpop.permute.xlu0 %1775
          %1779 = vset.pattern.permute.xlu0 0
          %1780 = vperm.xlu0 %1779, %v1770
          %v1781 = vpop.permute.xlu0 %1780
          %1784 = vset.pattern.permute.xlu0 0
          %1785 = vperm.xlu0 %1784, %v1771
          %v1786 = vpop.permute.xlu0 %1785
          %1789 = vset.pattern.permute.xlu0 0
          %1790 = vperm.xlu0 %1789, %v1772
          %v1791 = vpop.permute.xlu0 %1790
          %v1793 = vmul.f32 %v1776, %v1765
          %v1794 = vmul.f32 %v1776, %v1761
          %v1795 = vmul.f32 %v1776, %v1757
          %v1796 = vmul.f32 %v1776, %v1753
          %v1797 = vmul.f32 %v1781, %v1766
          %v1798 = vmul.f32 %v1781, %v1762
          %v1799 = vmul.f32 %v1781, %v1758
          %v1800 = vmul.f32 %v1781, %v1754
          %v1801 = vmul.f32 %v1786, %v1767
          %v1802 = vmul.f32 %v1786, %v1763
          %v1803 = vmul.f32 %v1786, %v1759
          %v1804 = vmul.f32 %v1786, %v1755
          %v1805 = vmul.f32 %v1791, %v1768
          %v1806 = vmul.f32 %v1791, %v1764
          %v1807 = vmul.f32 %v1791, %v1760
          %v1808 = vmul.f32 %v1791, %v1756
          %s1809 = scalar_lea.vmem %s682, 32
          %v1810 = vld [vmem:[%s1809] sm:$0xff]
          %v1811 = vld [vmem:[%s1809 + $0x8] sm:$0xff]
          %v1812 = vld [vmem:[%s1809 + $0x10] sm:$0xff]
          %v1813 = vld [vmem:[%s1809 + $0x18] sm:$0xff]
          %1815 = vset.pattern.permute.xlu0 0
          %1816 = vperm.xlu0 %1815, %v1810
          %v1817 = vpop.permute.xlu0 %1816
          %1820 = vset.pattern.permute.xlu0 0
          %1821 = vperm.xlu0 %1820, %v1811
          %v1822 = vpop.permute.xlu0 %1821
          %1825 = vset.pattern.permute.xlu0 0
          %1826 = vperm.xlu0 %1825, %v1812
          %v1827 = vpop.permute.xlu0 %1826
          %1830 = vset.pattern.permute.xlu0 0
          %1831 = vperm.xlu0 %1830, %v1813
          %v1832 = vpop.permute.xlu0 %1831
          %v1834 = vmul.f32 %v1817, %v1416
          %v1835 = vmul.f32 %v1817, %v1417
          %v1836 = vmul.f32 %v1817, %v1418
          %v1837 = vmul.f32 %v1817, %v1419
          %v1838 = vmul.f32 %v1822, %v1420
          %v1839 = vmul.f32 %v1822, %v1421
          %v1840 = vmul.f32 %v1822, %v1422
          %v1841 = vmul.f32 %v1822, %v1423
          %v1842 = vmul.f32 %v1827, %v1424
          %v1843 = vmul.f32 %v1827, %v1425
          %v1844 = vmul.f32 %v1827, %v1426
          %v1845 = vmul.f32 %v1827, %v1427
          %v1846 = vmul.f32 %v1832, %v1428
          %v1847 = vmul.f32 %v1832, %v1429
          %v1848 = vmul.f32 %v1832, %v1430
          %v1849 = vmul.f32 %v1832, %v1431
          %v1850 = vadd.f32 %v1793, %v1834
          %v1851 = vadd.f32 %v1794, %v1835
          %v1852 = vadd.f32 %v1795, %v1836
          %v1853 = vadd.f32 %v1796, %v1837
          %v1854 = vadd.f32 %v1797, %v1838
          %v1855 = vadd.f32 %v1798, %v1839
          %v1856 = vadd.f32 %v1799, %v1840
          %v1857 = vadd.f32 %v1800, %v1841
          %v1858 = vadd.f32 %v1801, %v1842
          %v1859 = vadd.f32 %v1802, %v1843
          %v1860 = vadd.f32 %v1803, %v1844
          %v1861 = vadd.f32 %v1804, %v1845
          %v1862 = vadd.f32 %v1805, %v1846
          %v1863 = vadd.f32 %v1806, %v1847
          %v1864 = vadd.f32 %v1807, %v1848
          %v1865 = vadd.f32 %v1808, %v1849
          %1866 = vrot.lane.b32.xlu0 %v1416, 126
          %v1867 = vpop.permute.xlu0 %1866
          %1868 = vrot.lane.b32.xlu0 %v1420, 126
          %v1869 = vpop.permute.xlu0 %1868
          %1870 = vrot.lane.b32.xlu0 %v1424, 126
          %v1871 = vpop.permute.xlu0 %1870
          %1872 = vrot.lane.b32.xlu0 %v1428, 126
          %v1873 = vpop.permute.xlu0 %1872
          %1874 = vrot.lane.b32.xlu0 %v1417, 126
          %v1875 = vpop.permute.xlu0 %1874
          %1876 = vrot.lane.b32.xlu0 %v1421, 126
          %v1877 = vpop.permute.xlu0 %1876
          %1878 = vrot.lane.b32.xlu0 %v1425, 126
          %v1879 = vpop.permute.xlu0 %1878
          %1880 = vrot.lane.b32.xlu0 %v1429, 126
          %v1881 = vpop.permute.xlu0 %1880
          %1882 = vrot.lane.b32.xlu0 %v1418, 126
          %v1883 = vpop.permute.xlu0 %1882
          %1884 = vrot.lane.b32.xlu0 %v1422, 126
          %v1885 = vpop.permute.xlu0 %1884
          %1886 = vrot.lane.b32.xlu0 %v1426, 126
          %v1887 = vpop.permute.xlu0 %1886
          %1888 = vrot.lane.b32.xlu0 %v1430, 126
          %v1889 = vpop.permute.xlu0 %1888
          %1890 = vrot.lane.b32.xlu0 %v1419, 126
          %v1891 = vpop.permute.xlu0 %1890
          %1892 = vrot.lane.b32.xlu0 %v1423, 126
          %v1893 = vpop.permute.xlu0 %1892
          %1894 = vrot.lane.b32.xlu0 %v1427, 126
          %v1895 = vpop.permute.xlu0 %1894
          %1896 = vrot.lane.b32.xlu0 %v1431, 126
          %v1897 = vpop.permute.xlu0 %1896
          %vm1898 = vcmp.lt.s32.totalorder %v716, 126
          %v1899 = vsel %vm1898, %v1883, %v1891
          %v1900 = vsel %vm1898, %v1885, %v1893
          %v1901 = vsel %vm1898, %v1887, %v1895
          %v1902 = vsel %vm1898, %v1889, %v1897
          %v1903 = vsel %vm1898, %v1875, %v1883
          %v1904 = vsel %vm1898, %v1877, %v1885
          %v1905 = vsel %vm1898, %v1879, %v1887
          %v1906 = vsel %vm1898, %v1881, %v1889
          %v1907 = vsel %vm1898, %v1867, %v1875
          %v1908 = vsel %vm1898, %v1869, %v1877
          %v1909 = vsel %vm1898, %v1871, %v1879
          %v1910 = vsel %vm1898, %v1873, %v1881
          %v1911 = vsel %vm1898, %v1891, %v1867
          %v1912 = vsel %vm1898, %v1893, %v1869
          %v1913 = vsel %vm1898, %v1895, %v1871
          %v1914 = vsel %vm1898, %v1897, %v1873
          %s1915 = scalar_lea.vmem %s682, 64
          %v1916 = vld [vmem:[%s1915] sm:$0xff]
          %v1917 = vld [vmem:[%s1915 + $0x8] sm:$0xff]
          %v1918 = vld [vmem:[%s1915 + $0x10] sm:$0xff]
          %v1919 = vld [vmem:[%s1915 + $0x18] sm:$0xff]
          %1921 = vset.pattern.permute.xlu0 0
          %1922 = vperm.xlu0 %1921, %v1916
          %v1923 = vpop.permute.xlu0 %1922
          %1926 = vset.pattern.permute.xlu0 0
          %1927 = vperm.xlu0 %1926, %v1917
          %v1928 = vpop.permute.xlu0 %1927
          %1931 = vset.pattern.permute.xlu0 0
          %1932 = vperm.xlu0 %1931, %v1918
          %v1933 = vpop.permute.xlu0 %1932
          %1936 = vset.pattern.permute.xlu0 0
          %1937 = vperm.xlu0 %1936, %v1919
          %v1938 = vpop.permute.xlu0 %1937
          %v1940 = vmul.f32 %v1923, %v1907
          %v1941 = vmul.f32 %v1923, %v1903
          %v1942 = vmul.f32 %v1923, %v1899
          %v1943 = vmul.f32 %v1923, %v1911
          %v1944 = vmul.f32 %v1928, %v1908
          %v1945 = vmul.f32 %v1928, %v1904
          %v1946 = vmul.f32 %v1928, %v1900
          %v1947 = vmul.f32 %v1928, %v1912
          %v1948 = vmul.f32 %v1933, %v1909
          %v1949 = vmul.f32 %v1933, %v1905
          %v1950 = vmul.f32 %v1933, %v1901
          %v1951 = vmul.f32 %v1933, %v1913
          %v1952 = vmul.f32 %v1938, %v1910
          %v1953 = vmul.f32 %v1938, %v1906
          %v1954 = vmul.f32 %v1938, %v1902
          %v1955 = vmul.f32 %v1938, %v1914
          %v1956 = vadd.f32 %v1850, %v1940
          %v1957 = vadd.f32 %v1851, %v1941
          %v1958 = vadd.f32 %v1852, %v1942
          %v1959 = vadd.f32 %v1853, %v1943
          %v1960 = vadd.f32 %v1854, %v1944
          %v1961 = vadd.f32 %v1855, %v1945
          %v1962 = vadd.f32 %v1856, %v1946
          %v1963 = vadd.f32 %v1857, %v1947
          %v1964 = vadd.f32 %v1858, %v1948
          %v1965 = vadd.f32 %v1859, %v1949
          %v1966 = vadd.f32 %v1860, %v1950
          %v1967 = vadd.f32 %v1861, %v1951
          %v1968 = vadd.f32 %v1862, %v1952
          %v1969 = vadd.f32 %v1863, %v1953
          %v1970 = vadd.f32 %v1864, %v1954
          %v1971 = vadd.f32 %v1865, %v1955
          %1972 = vst [vmem:[#allocation4] sm:$0xff] %v1956
          %1973 = vst [vmem:[#allocation4 + $0x8] sm:$0xff] %v1957
          %1974 = vst [vmem:[#allocation4 + $0x10] sm:$0xff] %v1958
          %1975 = vst [vmem:[#allocation4 + $0x18] sm:$0xff] %v1959
          %1976 = vst [vmem:[#allocation4 + $0x20] sm:$0xff] %v1960
          %1977 = vst [vmem:[#allocation4 + $0x28] sm:$0xff] %v1961
          %1978 = vst [vmem:[#allocation4 + $0x30] sm:$0xff] %v1962
          %1979 = vst [vmem:[#allocation4 + $0x38] sm:$0xff] %v1963
          %1980 = vst [vmem:[#allocation4 + $0x40] sm:$0xff] %v1964
          %1981 = vst [vmem:[#allocation4 + $0x48] sm:$0xff] %v1965
          %1982 = vst [vmem:[#allocation4 + $0x50] sm:$0xff] %v1966
          %1983 = vst [vmem:[#allocation4 + $0x58] sm:$0xff] %v1967
          %1984 = vst [vmem:[#allocation4 + $0x60] sm:$0xff] %v1968
          %1985 = vst [vmem:[#allocation4 + $0x68] sm:$0xff] %v1969
          %1986 = vst [vmem:[#allocation4 + $0x70] sm:$0xff] %v1970
          %1987 = vst [vmem:[#allocation4 + $0x78] sm:$0xff] %v1971
        $region100: #{conv_tasnet_forward.4} parent=83 // pred_fallthru
          _
        %v1988 = vld [vmem:[#allocation4] sm:$0xff]
        %v1989 = vld [vmem:[#allocation4 + $0x8] sm:$0xff]
        %v1990 = vld [vmem:[#allocation4 + $0x10] sm:$0xff]
        %v1991 = vld [vmem:[#allocation4 + $0x18] sm:$0xff]
        %v1992 = vld [vmem:[#allocation4 + $0x20] sm:$0xff]
        %v1993 = vld [vmem:[#allocation4 + $0x28] sm:$0xff]
        %v1994 = vld [vmem:[#allocation4 + $0x30] sm:$0xff]
        %v1995 = vld [vmem:[#allocation4 + $0x38] sm:$0xff]
        %v1996 = vld [vmem:[#allocation4 + $0x40] sm:$0xff]
        %v1997 = vld [vmem:[#allocation4 + $0x48] sm:$0xff]
        %v1998 = vld [vmem:[#allocation4 + $0x50] sm:$0xff]
        %v1999 = vld [vmem:[#allocation4 + $0x58] sm:$0xff]
        %v2000 = vld [vmem:[#allocation4 + $0x60] sm:$0xff]
        %v2001 = vld [vmem:[#allocation4 + $0x68] sm:$0xff]
        %v2002 = vld [vmem:[#allocation4 + $0x70] sm:$0xff]
        %v2003 = vld [vmem:[#allocation4 + $0x78] sm:$0xff]
        %v2004 = vld [vmem:[%s688] sm:$0xff]
        %v2005 = vld [vmem:[%s688 + $0x8] sm:$0xff]
        %v2006 = vld [vmem:[%s688 + $0x10] sm:$0xff]
        %v2007 = vld [vmem:[%s688 + $0x18] sm:$0xff]
        %2009 = vset.pattern.permute.xlu0 0
        %2010 = vperm.xlu0 %2009, %v2004
        %v2011 = vpop.permute.xlu0 %2010
        %2014 = vset.pattern.permute.xlu0 0
        %2015 = vperm.xlu0 %2014, %v2005
        %v2016 = vpop.permute.xlu0 %2015
        %2019 = vset.pattern.permute.xlu0 0
        %2020 = vperm.xlu0 %2019, %v2006
        %v2021 = vpop.permute.xlu0 %2020
        %2024 = vset.pattern.permute.xlu0 0
        %2025 = vperm.xlu0 %2024, %v2007
        %v2026 = vpop.permute.xlu0 %2025
        %v2028 = vadd.f32 %v1988, %v2011
        %v2029 = vadd.f32 %v1989, %v2011
        %v2030 = vadd.f32 %v1990, %v2011
        %v2031 = vadd.f32 %v1991, %v2011
        %v2032 = vadd.f32 %v1992, %v2016
        %v2033 = vadd.f32 %v1993, %v2016
        %v2034 = vadd.f32 %v1994, %v2016
        %v2035 = vadd.f32 %v1995, %v2016
        %v2036 = vadd.f32 %v1996, %v2021
        %v2037 = vadd.f32 %v1997, %v2021
        %v2038 = vadd.f32 %v1998, %v2021
        %v2039 = vadd.f32 %v1999, %v2021
        %v2040 = vadd.f32 %v2000, %v2026
        %v2041 = vadd.f32 %v2001, %v2026
        %v2042 = vadd.f32 %v2002, %v2026
        %v2043 = vadd.f32 %v2003, %v2026
        %vm2044 = vcmp.ge.f32.partialorder %v2028, 0.0
        %vm2045 = vcmp.ge.f32.partialorder %v2029, 0.0
        %vm2046 = vcmp.ge.f32.partialorder %v2030, 0.0
        %vm2047 = vcmp.ge.f32.partialorder %v2031, 0.0
        %vm2048 = vcmp.ge.f32.partialorder %v2032, 0.0
        %vm2049 = vcmp.ge.f32.partialorder %v2033, 0.0
        %vm2050 = vcmp.ge.f32.partialorder %v2034, 0.0
        %vm2051 = vcmp.ge.f32.partialorder %v2035, 0.0
        %vm2052 = vcmp.ge.f32.partialorder %v2036, 0.0
        %vm2053 = vcmp.ge.f32.partialorder %v2037, 0.0
        %vm2054 = vcmp.ge.f32.partialorder %v2038, 0.0
        %vm2055 = vcmp.ge.f32.partialorder %v2039, 0.0
        %vm2056 = vcmp.ge.f32.partialorder %v2040, 0.0
        %vm2057 = vcmp.ge.f32.partialorder %v2041, 0.0
        %vm2058 = vcmp.ge.f32.partialorder %v2042, 0.0
        %vm2059 = vcmp.ge.f32.partialorder %v2043, 0.0
        %v2060 = vmul.f32 %v1188, %v2028
        %v2061 = vmul.f32 %v1188, %v2029
        %v2062 = vmul.f32 %v1188, %v2030
        %v2063 = vmul.f32 %v1188, %v2031
        %v2064 = vmul.f32 %v1188, %v2032
        %v2065 = vmul.f32 %v1188, %v2033
        %v2066 = vmul.f32 %v1188, %v2034
        %v2067 = vmul.f32 %v1188, %v2035
        %v2068 = vmul.f32 %v1188, %v2036
        %v2069 = vmul.f32 %v1188, %v2037
        %v2070 = vmul.f32 %v1188, %v2038
        %v2071 = vmul.f32 %v1188, %v2039
        %v2072 = vmul.f32 %v1188, %v2040
        %v2073 = vmul.f32 %v1188, %v2041
        %v2074 = vmul.f32 %v1188, %v2042
        %v2075 = vmul.f32 %v1188, %v2043
        %v2076 = vsel %vm2044, %v2028, %v2060
        %v2077 = vsel %vm2045, %v2029, %v2061
        %v2078 = vsel %vm2046, %v2030, %v2062
        %v2079 = vsel %vm2047, %v2031, %v2063
        %v2080 = vsel %vm2048, %v2032, %v2064
        %v2081 = vsel %vm2049, %v2033, %v2065
        %v2082 = vsel %vm2050, %v2034, %v2066
        %v2083 = vsel %vm2051, %v2035, %v2067
        %v2084 = vsel %vm2052, %v2036, %v2068
        %v2085 = vsel %vm2053, %v2037, %v2069
        %v2086 = vsel %vm2054, %v2038, %v2070
        %v2087 = vsel %vm2055, %v2039, %v2071
        %v2088 = vsel %vm2056, %v2040, %v2072
        %v2089 = vsel %vm2057, %v2041, %v2073
        %v2090 = vsel %vm2058, %v2042, %v2074
        %v2091 = vsel %vm2059, %v2043, %v2075
        %v2092 = vmul.f32 %v2076, %v728
        %v2093 = vmul.f32 %v2077, %v729
        %v2094 = vmul.f32 %v2078, %v730
        %v2095 = vmul.f32 %v2079, %v731
        %v2096 = vmul.f32 %v2080, %v728
        %v2097 = vmul.f32 %v2081, %v729
        %v2098 = vmul.f32 %v2082, %v730
        %v2099 = vmul.f32 %v2083, %v731
        %v2100 = vmul.f32 %v2084, %v728
        %v2101 = vmul.f32 %v2085, %v729
        %v2102 = vmul.f32 %v2086, %v730
        %v2103 = vmul.f32 %v2087, %v731
        %v2104 = vmul.f32 %v2088, %v728
        %v2105 = vmul.f32 %v2089, %v729
        %v2106 = vmul.f32 %v2090, %v730
        %v2107 = vmul.f32 %v2091, %v731
        %v2108 = vadd.f32 %v2092, %v2093
        %v2109 = vadd.f32 %v2108, %v2094
        %v2110 = vadd.f32 %v2109, %v2095
        %v2111 = vadd.f32 %v2110, %v2096
        %v2112 = vadd.f32 %v2111, %v2097
        %v2113 = vadd.f32 %v2112, %v2098
        %v2114 = vadd.f32 %v2113, %v2099
        %v2115 = vadd.f32 %v2114, %v2100
        %v2116 = vadd.f32 %v2115, %v2101
        %v2117 = vadd.f32 %v2116, %v2102
        %v2118 = vadd.f32 %v2117, %v2103
        %v2119 = vadd.f32 %v2118, %v2104
        %v2120 = vadd.f32 %v2119, %v2105
        %v2121 = vadd.f32 %v2120, %v2106
        %v2122 = vadd.f32 %v2121, %v2107
        %2123 = vadd.xlane.f32.xlu0 %v2122
        %v2124 = vpop.xlane.xlu0 %2123
        %v2125 = vrot.slane %v2124, 4
        %v2126 = vadd.f32 %v2124, %v2125
        %v2127 = vrot.slane %v2126, 2
        %v2128 = vadd.f32 %v2126, %v2127
        %v2129 = vrot.slane %v2128, 1
        %v2130 = vadd.f32 %v2128, %v2129
        %s2131 = vtos %v2130
        %v2132 = vmul.f32 %v2092, %v2092
        %v2133 = vmul.f32 %v2093, %v2093
        %v2134 = vmul.f32 %v2094, %v2094
        %v2135 = vmul.f32 %v2095, %v2095
        %v2136 = vmul.f32 %v2096, %v2096
        %v2137 = vmul.f32 %v2097, %v2097
        %v2138 = vmul.f32 %v2098, %v2098
        %v2139 = vmul.f32 %v2099, %v2099
        %v2140 = vmul.f32 %v2100, %v2100
        %v2141 = vmul.f32 %v2101, %v2101
        %v2142 = vmul.f32 %v2102, %v2102
        %v2143 = vmul.f32 %v2103, %v2103
        %v2144 = vmul.f32 %v2104, %v2104
        %v2145 = vmul.f32 %v2105, %v2105
        %v2146 = vmul.f32 %v2106, %v2106
        %v2147 = vmul.f32 %v2107, %v2107
        %v2148 = vadd.f32 %v2132, %v2133
        %v2149 = vadd.f32 %v2148, %v2134
        %v2150 = vadd.f32 %v2149, %v2135
        %v2151 = vadd.f32 %v2150, %v2136
        %v2152 = vadd.f32 %v2151, %v2137
        %v2153 = vadd.f32 %v2152, %v2138
        %v2154 = vadd.f32 %v2153, %v2139
        %v2155 = vadd.f32 %v2154, %v2140
        %v2156 = vadd.f32 %v2155, %v2141
        %v2157 = vadd.f32 %v2156, %v2142
        %v2158 = vadd.f32 %v2157, %v2143
        %v2159 = vadd.f32 %v2158, %v2144
        %v2160 = vadd.f32 %v2159, %v2145
        %v2161 = vadd.f32 %v2160, %v2146
        %v2162 = vadd.f32 %v2161, %v2147
        %2163 = vadd.xlane.f32.xlu0 %v2162
        %v2164 = vpop.xlane.xlu0 %2163
        %v2165 = vrot.slane %v2164, 4
        %v2166 = vadd.f32 %v2164, %v2165
        %v2167 = vrot.slane %v2166, 2
        %v2168 = vadd.f32 %v2166, %v2167
        %v2169 = vrot.slane %v2168, 1
        %v2170 = vadd.f32 %v2168, %v2169
        %s2171 = vtos %v2170
        %s2172 = smul.f32 %s2131, 0.0020833334
        %s2173 = smul.f32 %s2171, 0.0020833334
        %s2174 = smul.f32 %s2172, %s2172
        %s2175 = ssub.f32 %s2173, %s2174
        %s2176 = smax.f32 %s2175, 0.0
        %v2177 = vstv %s2172
        %v2178 = vsub.f32 %v2076, %v2177
        %v2179 = vsub.f32 %v2077, %v2177
        %v2180 = vsub.f32 %v2078, %v2177
        %v2181 = vsub.f32 %v2079, %v2177
        %v2182 = vsub.f32 %v2080, %v2177
        %v2183 = vsub.f32 %v2081, %v2177
        %v2184 = vsub.f32 %v2082, %v2177
        %v2185 = vsub.f32 %v2083, %v2177
        %v2186 = vsub.f32 %v2084, %v2177
        %v2187 = vsub.f32 %v2085, %v2177
        %v2188 = vsub.f32 %v2086, %v2177
        %v2189 = vsub.f32 %v2087, %v2177
        %v2190 = vsub.f32 %v2088, %v2177
        %v2191 = vsub.f32 %v2089, %v2177
        %v2192 = vsub.f32 %v2090, %v2177
        %v2193 = vsub.f32 %v2091, %v2177
        %s2194 = sadd.f32 %s2176, 1e-08
        %v2195 = vstv %s2194
        %v2196 = vrsqrt.pop %v2195
        %s2197 = vtos %v2196
        %v2198 = vstv %s2197
        %v2199 = vmul.f32 %v2178, %v2198
        %v2200 = vmul.f32 %v2179, %v2198
        %v2201 = vmul.f32 %v2180, %v2198
        %v2202 = vmul.f32 %v2181, %v2198
        %v2203 = vmul.f32 %v2182, %v2198
        %v2204 = vmul.f32 %v2183, %v2198
        %v2205 = vmul.f32 %v2184, %v2198
        %v2206 = vmul.f32 %v2185, %v2198
        %v2207 = vmul.f32 %v2186, %v2198
        %v2208 = vmul.f32 %v2187, %v2198
        %v2209 = vmul.f32 %v2188, %v2198
        %v2210 = vmul.f32 %v2189, %v2198
        %v2211 = vmul.f32 %v2190, %v2198
        %v2212 = vmul.f32 %v2191, %v2198
        %v2213 = vmul.f32 %v2192, %v2198
        %v2214 = vmul.f32 %v2193, %v2198
        %v2215 = vmul.f32 %v2199, %v1347
        %v2216 = vmul.f32 %v2200, %v1347
        %v2217 = vmul.f32 %v2201, %v1347
        %v2218 = vmul.f32 %v2202, %v1347
        %v2219 = vmul.f32 %v2203, %v1352
        %v2220 = vmul.f32 %v2204, %v1352
        %v2221 = vmul.f32 %v2205, %v1352
        %v2222 = vmul.f32 %v2206, %v1352
        %v2223 = vmul.f32 %v2207, %v1357
        %v2224 = vmul.f32 %v2208, %v1357
        %v2225 = vmul.f32 %v2209, %v1357
        %v2226 = vmul.f32 %v2210, %v1357
        %v2227 = vmul.f32 %v2211, %v1362
        %v2228 = vmul.f32 %v2212, %v1362
        %v2229 = vmul.f32 %v2213, %v1362
        %v2230 = vmul.f32 %v2214, %v1362
        %v2231 = vadd.f32 %v2215, %v1383
        %v2232 = vadd.f32 %v2216, %v1383
        %v2233 = vadd.f32 %v2217, %v1383
        %v2234 = vadd.f32 %v2218, %v1383
        %v2235 = vadd.f32 %v2219, %v1388
        %v2236 = vadd.f32 %v2220, %v1388
        %v2237 = vadd.f32 %v2221, %v1388
        %v2238 = vadd.f32 %v2222, %v1388
        %v2239 = vadd.f32 %v2223, %v1393
        %v2240 = vadd.f32 %v2224, %v1393
        %v2241 = vadd.f32 %v2225, %v1393
        %v2242 = vadd.f32 %v2226, %v1393
        %v2243 = vadd.f32 %v2227, %v1398
        %v2244 = vadd.f32 %v2228, %v1398
        %v2245 = vadd.f32 %v2229, %v1398
        %v2246 = vadd.f32 %v2230, %v1398
        %v2247 = vld [vmem:[%s703] sm:$0xf]
        %v2248 = vld [vmem:[%s703 + $0x4] sm:$0xf]
        %v2249 = vld [vmem:[%s703 + $0x8] sm:$0xf]
        %v2250 = vld [vmem:[%s703 + $0xc] sm:$0xf]
        %v2251 = vpack.c.bf16 %v2235, %v2231
        %v2252 = vpack.c.bf16 %v2236, %v2232
        %v2253 = vpack.c.bf16 %v2237, %v2233
        %v2254 = vpack.c.bf16 %v2238, %v2234
        %v2255 = vpack.c.bf16 %v2243, %v2239
        %v2256 = vpack.c.bf16 %v2244, %v2240
        %v2257 = vpack.c.bf16 %v2245, %v2241
        %v2258 = vpack.c.bf16 %v2246, %v2242
        %v2259 = vld [vmem:[%s708] sm:$0xff]
        %v2260 = vld [vmem:[%s708 + $0x8] sm:$0xff]
        %v2261 = vld [vmem:[%s708 + $0x10] sm:$0xff]
        %v2262 = vld [vmem:[%s708 + $0x18] sm:$0xff]
        %2264 = vset.pattern.permute.xlu0 0
        %2265 = vperm.xlu0 %2264, %v2259
        %v2266 = vpop.permute.xlu0 %2265
        %2269 = vset.pattern.permute.xlu0 0
        %2270 = vperm.xlu0 %2269, %v2260
        %v2271 = vpop.permute.xlu0 %2270
        %2274 = vset.pattern.permute.xlu0 0
        %2275 = vperm.xlu0 %2274, %v2261
        %v2276 = vpop.permute.xlu0 %2275
        %2279 = vset.pattern.permute.xlu0 0
        %2280 = vperm.xlu0 %2279, %v2262
        %v2281 = vpop.permute.xlu0 %2280
        %v2287 = vunpack.c.l.b16 %v2247
        %v2288 = vunpack.c.l.b16 %v2248
        %v2289 = vunpack.c.l.b16 %v2249
        %v2290 = vunpack.c.l.b16 %v2250
        %v2291 = vpack.c.b16 %v2288, %v2287
        %v2292 = vpack.c.b16 %v2290, %v2289
        %vm2293 = vcmask 261120
        %v2295 = vsel %vm2293, %v2291, 0
        %v2298 = vsel %vm2293, %v2292, 0
        %2300 = vmatprep.subr.bf16.mxu0 %v2252
        %2301 = vmatpush1.bf16.msra.mxu0 %v2251
        %2302 = vmatprep.subr.bf16.mxu0 %v2256
        %2303 = vmatpush1.bf16.msra.mxu0 %v2255
        %2304 = vmatprep.subr.bf16.mxu0 0
        %2305 = vmatpush1.bf16.msra.mxu0 0
        %2306 = vmatprep.subr.bf16.mxu0 0
        %2307 = vmatpush1.bf16.msra.mxu0 0
        %2308 = vmatprep.subr.bf16.mxu0 0
        %2309 = vmatpush1.bf16.msra.mxu0 0
        %2310 = vmatprep.subr.bf16.mxu0 0
        %2311 = vmatpush1.bf16.msra.mxu0 0
        %2312 = vmatprep.subr.bf16.mxu0 0
        %2313 = vmatpush1.bf16.msra.mxu0 0
        %2314 = vmatprep.subr.bf16.mxu0 0
        %2315 = vmatpush1.bf16.msra.mxu0 0
        %2316 = vmatprep.subr.bf16.mxu0 0
        %2317 = vmatpush1.bf16.msra.mxu0 0
        %2318 = vmatprep.subr.bf16.mxu0 0
        %2319 = vmatpush1.bf16.msra.mxu0 0
        %2320 = vmatprep.subr.bf16.mxu0 0
        %2321 = vmatpush1.bf16.msra.mxu0 0
        %2322 = vmatprep.subr.bf16.mxu0 0
        %2323 = vmatpush1.bf16.msra.mxu0 0
        %2324 = vmatprep.subr.bf16.mxu0 0
        %2325 = vmatpush1.bf16.msra.mxu0 0
        %2326 = vmatprep.subr.bf16.mxu0 0
        %2327 = vmatpush1.bf16.msra.mxu0 0
        %2328 = vmatprep.subr.bf16.mxu0 0
        %2329 = vmatpush1.bf16.msra.mxu0 0
        %2330 = vmatprep.subr.bf16.mxu0 0
        %2331 = vmatpush1.bf16.msra.mxu0 0
        %2332 = vmatprep.mubr.bf16.mxu0 0
        %2333 = vmatmul.mubr.bf16.gmra.mrb[0].mxu0 %v2295
        %v2334 = vpop.f32.mrb[0].mxu0
        %v2335 = vadd.f32 %v2266, %v2334
        %v2336 = vpop.f32.mrb[0].mxu0
        %v2337 = vadd.f32 %v2266, %v2336
        %v2338 = vpop.f32.mrb[0].mxu0
        %v2339 = vadd.f32 %v2271, %v2338
        %v2340 = vpop.f32.mrb[0].mxu0
        %v2341 = vadd.f32 %v2271, %v2340
        %2342 = vmatprep.mubr.bf16.mxu0 0
        %2343 = vmatmul.mubr.bf16.gmra.mrb[0].mxu0 %v2298
        %v2344 = vpop.f32.mrb[0].mxu0
        %v2345 = vadd.f32 %v2276, %v2344
        %v2346 = vpop.f32.mrb[0].mxu0
        %v2347 = vadd.f32 %v2276, %v2346
        %v2348 = vpop.f32.mrb[0].mxu0
        %v2349 = vadd.f32 %v2281, %v2348
        %v2350 = vpop.f32.mrb[0].mxu0
        %v2351 = vadd.f32 %v2281, %v2350
        %2352 = vdwg.mxu0
        %2353 = vmatprep.subr.bf16.mxu0 %v2254
        %2354 = vmatpush1.bf16.msra.mxu0 %v2253
        %2355 = vmatprep.subr.bf16.mxu0 %v2258
        %2356 = vmatpush1.bf16.msra.mxu0 %v2257
        %2357 = vmatprep.subr.bf16.mxu0 0
        %2358 = vmatpush1.bf16.msra.mxu0 0
        %2359 = vmatprep.subr.bf16.mxu0 0
        %2360 = vmatpush1.bf16.msra.mxu0 0
        %2361 = vmatprep.subr.bf16.mxu0 0
        %2362 = vmatpush1.bf16.msra.mxu0 0
        %2363 = vmatprep.subr.bf16.mxu0 0
        %2364 = vmatpush1.bf16.msra.mxu0 0
        %2365 = vmatprep.subr.bf16.mxu0 0
        %2366 = vmatpush1.bf16.msra.mxu0 0
        %2367 = vmatprep.subr.bf16.mxu0 0
        %2368 = vmatpush1.bf16.msra.mxu0 0
        %2369 = vmatprep.subr.bf16.mxu0 0
        %2370 = vmatpush1.bf16.msra.mxu0 0
        %2371 = vmatprep.subr.bf16.mxu0 0
        %2372 = vmatpush1.bf16.msra.mxu0 0
        %2373 = vmatprep.subr.bf16.mxu0 0
        %2374 = vmatpush1.bf16.msra.mxu0 0
        %2375 = vmatprep.subr.bf16.mxu0 0
        %2376 = vmatpush1.bf16.msra.mxu0 0
        %2377 = vmatprep.subr.bf16.mxu0 0
        %2378 = vmatpush1.bf16.msra.mxu0 0
        %2379 = vmatprep.subr.bf16.mxu0 0
        %2380 = vmatpush1.bf16.msra.mxu0 0
        %2381 = vmatprep.subr.bf16.mxu0 0
        %2382 = vmatpush1.bf16.msra.mxu0 0
        %2383 = vmatprep.subr.bf16.mxu0 0
        %2384 = vmatpush1.bf16.msra.mxu0 0
        %2385 = vmatprep.mubr.bf16.mxu0 0
        %2386 = vmatmul.mubr.bf16.gmra.mrb[0].mxu0 %v2295
        %v2387 = vpop.f32.mrb[0].mxu0
        %v2388 = vadd.f32 %v2266, %v2387
        %v2389 = vpop.f32.mrb[0].mxu0
        %v2390 = vadd.f32 %v2266, %v2389
        %v2391 = vpop.f32.mrb[0].mxu0
        %v2392 = vadd.f32 %v2271, %v2391
        %v2393 = vpop.f32.mrb[0].mxu0
        %v2394 = vadd.f32 %v2271, %v2393
        %2395 = vmatprep.mubr.bf16.mxu0 0
        %2396 = vmatmul.mubr.bf16.gmra.mrb[0].mxu0 %v2298
        %v2397 = vpop.f32.mrb[0].mxu0
        %v2398 = vadd.f32 %v2276, %v2397
        %v2399 = vpop.f32.mrb[0].mxu0
        %v2400 = vadd.f32 %v2276, %v2399
        %v2401 = vpop.f32.mrb[0].mxu0
        %v2402 = vadd.f32 %v2281, %v2401
        %v2403 = vpop.f32.mrb[0].mxu0
        %v2404 = vadd.f32 %v2281, %v2403
        %2405 = vdwg.mxu0
        %v2406 = vadd.f32 %v1009, %v2335
        %v2407 = vadd.f32 %v1010, %v2337
        %v2408 = vadd.f32 %v1011, %v2388
        %v2409 = vadd.f32 %v1012, %v2390
        %v2410 = vadd.f32 %v1013, %v2339
        %v2411 = vadd.f32 %v1014, %v2341
        %v2412 = vadd.f32 %v1015, %v2392
        %v2413 = vadd.f32 %v1016, %v2394
        %v2414 = vmul.f32 %v2406, %v728
        %v2415 = vmul.f32 %v2407, %v729
        %v2416 = vmul.f32 %v2408, %v730
        %v2417 = vmul.f32 %v2409, %v731
        %v2418 = vmul.f32 %v2410, %v728
        %v2419 = vmul.f32 %v2411, %v729
        %v2420 = vmul.f32 %v2412, %v730
        %v2421 = vmul.f32 %v2413, %v731
        %2422 = vst [vmem:[#allocation2] sm:$0xff] %v2414
        %2423 = vst [vmem:[#allocation2 + $0x8] sm:$0xff] %v2415
        %2424 = vst [vmem:[#allocation2 + $0x10] sm:$0xff] %v2416
        %2425 = vst [vmem:[#allocation2 + $0x18] sm:$0xff] %v2417
        %2426 = vst [vmem:[#allocation2 + $0x20] sm:$0xff] %v2418
        %2427 = vst [vmem:[#allocation2 + $0x28] sm:$0xff] %v2419
        %2428 = vst [vmem:[#allocation2 + $0x30] sm:$0xff] %v2420
        %2429 = vst [vmem:[#allocation2 + $0x38] sm:$0xff] %v2421
        %v2430 = vld [vmem:[#allocation3] sm:$0xff]
        %v2431 = vld [vmem:[#allocation3 + $0x8] sm:$0xff]
        %v2432 = vld [vmem:[#allocation3 + $0x10] sm:$0xff]
        %v2433 = vld [vmem:[#allocation3 + $0x18] sm:$0xff]
        %v2434 = vld [vmem:[#allocation3 + $0x20] sm:$0xff]
        %v2435 = vld [vmem:[#allocation3 + $0x28] sm:$0xff]
        %v2436 = vld [vmem:[#allocation3 + $0x30] sm:$0xff]
        %v2437 = vld [vmem:[#allocation3 + $0x38] sm:$0xff]
        %v2438 = vadd.f32 %v2430, %v2345
        %v2439 = vadd.f32 %v2431, %v2347
        %v2440 = vadd.f32 %v2432, %v2398
        %v2441 = vadd.f32 %v2433, %v2400
        %v2442 = vadd.f32 %v2434, %v2349
        %v2443 = vadd.f32 %v2435, %v2351
        %v2444 = vadd.f32 %v2436, %v2402
        %v2445 = vadd.f32 %v2437, %v2404
        %2446 = vst [vmem:[#allocation3] sm:$0xff] %v2438
        %2447 = vst [vmem:[#allocation3 + $0x8] sm:$0xff] %v2439
        %2448 = vst [vmem:[#allocation3 + $0x10] sm:$0xff] %v2440
        %2449 = vst [vmem:[#allocation3 + $0x18] sm:$0xff] %v2441
        %2450 = vst [vmem:[#allocation3 + $0x20] sm:$0xff] %v2442
        %2451 = vst [vmem:[#allocation3 + $0x28] sm:$0xff] %v2443
        %2452 = vst [vmem:[#allocation3 + $0x30] sm:$0xff] %v2444
        %2453 = vst [vmem:[#allocation3 + $0x38] sm:$0xff] %v2445
        %p2454 = scmp.eq.s32.totalorder %s34, 3
        // Predicated region
        $region101: #{conv_tasnet_forward.4} parent=83 // pred_check
          %p2455 = pneg %p2454
        $region102: #{conv_tasnet_forward.4} parent=83 // pred_check_branch
          %2457 = sbr.rel (%p2455) target = $region104
        $region103: #{conv_tasnet_forward.4} parent=83 // pred_region
          %v2458 = vld [vmem:[#allocation3] sm:$0xff]
          %v2459 = vld [vmem:[#allocation3 + $0x8] sm:$0xff]
          %v2460 = vld [vmem:[#allocation3 + $0x10] sm:$0xff]
          %v2461 = vld [vmem:[#allocation3 + $0x18] sm:$0xff]
          %v2462 = vld [vmem:[#allocation3 + $0x20] sm:$0xff]
          %v2463 = vld [vmem:[#allocation3 + $0x28] sm:$0xff]
          %v2464 = vld [vmem:[#allocation3 + $0x30] sm:$0xff]
          %v2465 = vld [vmem:[#allocation3 + $0x38] sm:$0xff]
          %vm2466 = vcmp.ge.f32.partialorder %v2458, 0.0
          %vm2467 = vcmp.ge.f32.partialorder %v2459, 0.0
          %vm2468 = vcmp.ge.f32.partialorder %v2460, 0.0
          %vm2469 = vcmp.ge.f32.partialorder %v2461, 0.0
          %vm2470 = vcmp.ge.f32.partialorder %v2462, 0.0
          %vm2471 = vcmp.ge.f32.partialorder %v2463, 0.0
          %vm2472 = vcmp.ge.f32.partialorder %v2464, 0.0
          %vm2473 = vcmp.ge.f32.partialorder %v2465, 0.0
          %s2474 = sld [smem:[#allocation5]]
          %v2475 = vstv %s2474
          %v2476 = vmul.f32 %v2475, %v2458
          %v2477 = vmul.f32 %v2475, %v2459
          %v2478 = vmul.f32 %v2475, %v2460
          %v2479 = vmul.f32 %v2475, %v2461
          %v2480 = vmul.f32 %v2475, %v2462
          %v2481 = vmul.f32 %v2475, %v2463
          %v2482 = vmul.f32 %v2475, %v2464
          %v2483 = vmul.f32 %v2475, %v2465
          %v2484 = vsel %vm2466, %v2458, %v2476
          %v2485 = vsel %vm2467, %v2459, %v2477
          %v2486 = vsel %vm2468, %v2460, %v2478
          %v2487 = vsel %vm2469, %v2461, %v2479
          %v2488 = vsel %vm2470, %v2462, %v2480
          %v2489 = vsel %vm2471, %v2463, %v2481
          %v2490 = vsel %vm2472, %v2464, %v2482
          %v2491 = vsel %vm2473, %v2465, %v2483
          %v2492 = vld [vmem:[%s13] sm:$0xf]
          %v2493 = vld [vmem:[%s13 + $0x4] sm:$0xf]
          %v2494 = vld [vmem:[%s13 + $0x8] sm:$0xf]
          %v2495 = vld [vmem:[%s13 + $0xc] sm:$0xf]
          %v2496 = vpack.c.bf16 %v2488, %v2484
          %v2497 = vpack.c.bf16 %v2489, %v2485
          %v2498 = vpack.c.bf16 %v2490, %v2486
          %v2499 = vpack.c.bf16 %v2491, %v2487
          %v2504 = vunpack.c.l.b16 %v2492
          %v2505 = vunpack.c.l.b16 %v2493
          %v2506 = vunpack.c.l.b16 %v2494
          %v2507 = vunpack.c.l.b16 %v2495
          %v2508 = vpack.c.b16 %v2505, %v2504
          %v2509 = vpack.c.b16 %v2507, %v2506
          %v2511 = vsel %vm1059, %v2508, 0
          %v2514 = vsel %vm1059, %v2509, 0
          %2516 = vmatprep.subr.bf16.mxu0 %v2497
          %2517 = vmatpush1.bf16.msra.mxu0 %v2496
          %2518 = vmatprep.subr.bf16.mxu0 0
          %2519 = vmatpush1.bf16.msra.mxu0 0
          %2520 = vmatprep.subr.bf16.mxu0 0
          %2521 = vmatpush1.bf16.msra.mxu0 0
          %2522 = vmatprep.subr.bf16.mxu0 0
          %2523 = vmatpush1.bf16.msra.mxu0 0
          %2524 = vmatprep.subr.bf16.mxu0 0
          %2525 = vmatpush1.bf16.msra.mxu0 0
          %2526 = vmatprep.subr.bf16.mxu0 0
          %2527 = vmatpush1.bf16.msra.mxu0 0
          %2528 = vmatprep.subr.bf16.mxu0 0
          %2529 = vmatpush1.bf16.msra.mxu0 0
          %2530 = vmatprep.subr.bf16.mxu0 0
          %2531 = vmatpush1.bf16.msra.mxu0 0
          %2532 = vmatprep.subr.bf16.mxu0 0
          %2533 = vmatpush1.bf16.msra.mxu0 0
          %2534 = vmatprep.subr.bf16.mxu0 0
          %2535 = vmatpush1.bf16.msra.mxu0 0
          %2536 = vmatprep.subr.bf16.mxu0 0
          %2537 = vmatpush1.bf16.msra.mxu0 0
          %2538 = vmatprep.subr.bf16.mxu0 0
          %2539 = vmatpush1.bf16.msra.mxu0 0
          %2540 = vmatprep.subr.bf16.mxu0 0
          %2541 = vmatpush1.bf16.msra.mxu0 0
          %2542 = vmatprep.subr.bf16.mxu0 0
          %2543 = vmatpush1.bf16.msra.mxu0 0
          %2544 = vmatprep.subr.bf16.mxu0 0
          %2545 = vmatpush1.bf16.msra.mxu0 0
          %2546 = vmatprep.subr.bf16.mxu0 0
          %2547 = vmatpush1.bf16.msra.mxu0 0
          %2548 = vmatprep.mubr.bf16.mxu0 0
          %2549 = vmatmul.mubr.bf16.gmra.mrb[0].mxu0 %v2511
          %v2550 = vpop.f32.mrb[0].mxu0
          %v2551 = vadd.f32 0.0, %v2550
          %v2552 = vpop.f32.mrb[0].mxu0
          %v2553 = vadd.f32 0.0, %v2552
          %v2554 = vpop.f32.mrb[0].mxu0
          %v2555 = vadd.f32 0.0, %v2554
          %v2556 = vpop.f32.mrb[0].mxu0
          %v2557 = vadd.f32 0.0, %v2556
          %2558 = vmatprep.mubr.bf16.mxu0 0
          %2559 = vmatmul.mubr.bf16.gmra.mrb[0].mxu0 %v2514
          %v2560 = vpop.f32.mrb[0].mxu0
          %v2561 = vadd.f32 0.0, %v2560
          %v2562 = vpop.f32.mrb[0].mxu0
          %v2563 = vadd.f32 0.0, %v2562
          %v2564 = vpop.f32.mrb[0].mxu0
          %v2565 = vadd.f32 0.0, %v2564
          %v2566 = vpop.f32.mrb[0].mxu0
          %v2567 = vadd.f32 0.0, %v2566
          %2568 = vdwg.mxu0
          %2569 = vmatprep.subr.bf16.mxu0 %v2499
          %2570 = vmatpush1.bf16.msra.mxu0 %v2498
          %2571 = vmatprep.subr.bf16.mxu0 0
          %2572 = vmatpush1.bf16.msra.mxu0 0
          %2573 = vmatprep.subr.bf16.mxu0 0
          %2574 = vmatpush1.bf16.msra.mxu0 0
          %2575 = vmatprep.subr.bf16.mxu0 0
          %2576 = vmatpush1.bf16.msra.mxu0 0
          %2577 = vmatprep.subr.bf16.mxu0 0
          %2578 = vmatpush1.bf16.msra.mxu0 0
          %2579 = vmatprep.subr.bf16.mxu0 0
          %2580 = vmatpush1.bf16.msra.mxu0 0
          %2581 = vmatprep.subr.bf16.mxu0 0
          %2582 = vmatpush1.bf16.msra.mxu0 0
          %2583 = vmatprep.subr.bf16.mxu0 0
          %2584 = vmatpush1.bf16.msra.mxu0 0
          %2585 = vmatprep.subr.bf16.mxu0 0
          %2586 = vmatpush1.bf16.msra.mxu0 0
          %2587 = vmatprep.subr.bf16.mxu0 0
          %2588 = vmatpush1.bf16.msra.mxu0 0
          %2589 = vmatprep.subr.bf16.mxu0 0
          %2590 = vmatpush1.bf16.msra.mxu0 0
          %2591 = vmatprep.subr.bf16.mxu0 0
          %2592 = vmatpush1.bf16.msra.mxu0 0
          %2593 = vmatprep.subr.bf16.mxu0 0
          %2594 = vmatpush1.bf16.msra.mxu0 0
          %2595 = vmatprep.subr.bf16.mxu0 0
          %2596 = vmatpush1.bf16.msra.mxu0 0
          %2597 = vmatprep.subr.bf16.mxu0 0
          %2598 = vmatpush1.bf16.msra.mxu0 0
          %2599 = vmatprep.subr.bf16.mxu0 0
          %2600 = vmatpush1.bf16.msra.mxu0 0
          %2601 = vmatprep.mubr.bf16.mxu0 0
          %2602 = vmatmul.mubr.bf16.gmra.mrb[0].mxu0 %v2511
          %v2603 = vpop.f32.mrb[0].mxu0
          %v2604 = vadd.f32 0.0, %v2603
          %v2605 = vpop.f32.mrb[0].mxu0
          %v2606 = vadd.f32 0.0, %v2605
          %v2607 = vpop.f32.mrb[0].mxu0
          %v2608 = vadd.f32 0.0, %v2607
          %v2609 = vpop.f32.mrb[0].mxu0
          %v2610 = vadd.f32 0.0, %v2609
          %2611 = vmatprep.mubr.bf16.mxu0 0
          %2612 = vmatmul.mubr.bf16.gmra.mrb[0].mxu0 %v2514
          %v2613 = vpop.f32.mrb[0].mxu0
          %v2614 = vadd.f32 0.0, %v2613
          %v2615 = vpop.f32.mrb[0].mxu0
          %v2616 = vadd.f32 0.0, %v2615
          %v2617 = vpop.f32.mrb[0].mxu0
          %v2618 = vadd.f32 0.0, %v2617
          %v2619 = vpop.f32.mrb[0].mxu0
          %v2620 = vadd.f32 0.0, %v2619
          %2621 = vdwg.mxu0
          %v2622 = vmax.f32 %v2551, 0.0
          %v2623 = vmax.f32 %v2553, 0.0
          %v2624 = vmax.f32 %v2604, 0.0
          %v2625 = vmax.f32 %v2606, 0.0
          %v2626 = vmax.f32 %v2555, 0.0
          %v2627 = vmax.f32 %v2557, 0.0
          %v2628 = vmax.f32 %v2608, 0.0
          %v2629 = vmax.f32 %v2610, 0.0
          %v2630 = vmax.f32 %v2561, 0.0
          %v2631 = vmax.f32 %v2563, 0.0
          %v2632 = vmax.f32 %v2614, 0.0
          %v2633 = vmax.f32 %v2616, 0.0
          %v2634 = vmax.f32 %v2565, 0.0
          %v2635 = vmax.f32 %v2567, 0.0
          %v2636 = vmax.f32 %v2618, 0.0
          %v2637 = vmax.f32 %v2620, 0.0
          %v2638 = vld [vmem:[%s666] sm:$0xff]
          %v2639 = vld [vmem:[%s666 + $0x8] sm:$0xff]
          %v2640 = vld [vmem:[%s666 + $0x10] sm:$0xff]
          %v2641 = vld [vmem:[%s666 + $0x18] sm:$0xff]
          %v2642 = vunpack.c.l.bf16 %v2638
          %v2643 = vunpack.c.h.bf16 %v2638
          %v2644 = vunpack.c.l.bf16 %v2639
          %v2645 = vunpack.c.h.bf16 %v2639
          %v2646 = vunpack.c.l.bf16 %v2640
          %v2647 = vunpack.c.h.bf16 %v2640
          %v2648 = vunpack.c.l.bf16 %v2641
          %v2649 = vunpack.c.h.bf16 %v2641
          %v2650 = vmul.f32 %v2622, %v2642
          %v2651 = vmul.f32 %v2623, %v2643
          %v2652 = vmul.f32 %v2624, %v2644
          %v2653 = vmul.f32 %v2625, %v2645
          %v2654 = vmul.f32 %v2626, %v2646
          %v2655 = vmul.f32 %v2627, %v2647
          %v2656 = vmul.f32 %v2628, %v2648
          %v2657 = vmul.f32 %v2629, %v2649
          %v2658 = vpack.c.bf16 %v2654, %v2650
          %v2659 = vpack.c.bf16 %v2655, %v2651
          %v2660 = vpack.c.bf16 %v2656, %v2652
          %v2661 = vpack.c.bf16 %v2657, %v2653
          %v2666 = vunpack.c.l.b16 %v2658
          %v2667 = vunpack.c.l.b16 %v2659
          %v2668 = vunpack.c.l.b16 %v2660
          %v2669 = vunpack.c.l.b16 %v2661
          %v2670 = vunpack.c.h.b16 %v2658
          %v2671 = vunpack.c.h.b16 %v2659
          %v2672 = vunpack.c.h.b16 %v2660
          %v2673 = vunpack.c.h.b16 %v2661
          %v2674 = vpack.c.b16 %v2667, %v2666
          %v2675 = vpack.c.b16 %v2669, %v2668
          %v2676 = vpack.c.b16 %v2671, %v2670
          %v2677 = vpack.c.b16 %v2673, %v2672
          %2682 = vst [vmem:[%s713] sm:$0xff] %v2674
          %2683 = vst [vmem:[%s713 + $0x8] sm:$0xff] %v2675
          %2684 = vst [vmem:[%s713 + $0x10] sm:$0xff] %v2676
          %2685 = vst [vmem:[%s713 + $0x18] sm:$0xff] %v2677
          %v2686 = vmul.f32 %v2630, %v2642
          %v2687 = vmul.f32 %v2631, %v2643
          %v2688 = vmul.f32 %v2632, %v2644
          %v2689 = vmul.f32 %v2633, %v2645
          %v2690 = vmul.f32 %v2634, %v2646
          %v2691 = vmul.f32 %v2635, %v2647
          %v2692 = vmul.f32 %v2636, %v2648
          %v2693 = vmul.f32 %v2637, %v2649
          %v2694 = vpack.c.bf16 %v2690, %v2686
          %v2695 = vpack.c.bf16 %v2691, %v2687
          %v2696 = vpack.c.bf16 %v2692, %v2688
          %v2697 = vpack.c.bf16 %v2693, %v2689
          %v2702 = vunpack.c.l.b16 %v2694
          %v2703 = vunpack.c.l.b16 %v2695
          %v2704 = vunpack.c.l.b16 %v2696
          %v2705 = vunpack.c.l.b16 %v2697
          %v2706 = vunpack.c.h.b16 %v2694
          %v2707 = vunpack.c.h.b16 %v2695
          %v2708 = vunpack.c.h.b16 %v2696
          %v2709 = vunpack.c.h.b16 %v2697
          %v2710 = vpack.c.b16 %v2703, %v2702
          %v2711 = vpack.c.b16 %v2705, %v2704
          %v2712 = vpack.c.b16 %v2707, %v2706
          %v2713 = vpack.c.b16 %v2709, %v2708
          %2718 = vst [vmem:[%s713 + $0x20] sm:$0xff] %v2710
          %2719 = vst [vmem:[%s713 + $0x28] sm:$0xff] %v2711
          %2720 = vst [vmem:[%s713 + $0x30] sm:$0xff] %v2712
          %2721 = vst [vmem:[%s713 + $0x38] sm:$0xff] %v2713
        $region104: #{conv_tasnet_forward.4} parent=83 // pred_fallthru
          _
        %p2722 = scmp.lt.s32.totalorder %s33, 1
        %s2723 = scalar_select %p2722, %s33, 1
        %s2724 = smul.addr %s2723, 16
        %s2725 = smul.addr %s2724, 4
        %s2726 = scalar_lea.vmem %s16, %s2725
        // Predicated region
        $region105: #{conv_tasnet_forward.4} parent=83 // pred_check
          %p2727 = pneg %p440
        $region106: #{conv_tasnet_forward.4} parent=83 // pred_check_branch
          %2729 = sbr.rel (%p2727) target = $region108
        $region107: #{conv_tasnet_forward.4} parent=83 // pred_region
          _
        $region108: #{conv_tasnet_forward.4} parent=83 // pred_fallthru
          _
      $region84: #{conv_tasnet_forward.4} parent=5 // pred_fallthru
        _
      %p2730 = scmp.le.s32.totalorder 2, %s24
      // Predicated region
      $region109: #{conv_tasnet_forward.4} parent=5 // pred_check
        %p2731 = pneg %p2730
      $region110: #{conv_tasnet_forward.4} parent=5 // pred_check_branch
        %2733 = sbr.rel (%p2731) target = $region112
      $region111: #{conv_tasnet_forward.4} parent=5 // pred_region
        %s2734 = ssub.s32 %s24, 2
        // Predicated region
        $region113: #{conv_tasnet_forward.4} parent=111 // pred_check
          %p2735 = pneg %p446
        $region114: #{conv_tasnet_forward.4} parent=111 // pred_check_branch
          %2737 = sbr.rel (%p2735) target = $region116
        $region115: #{conv_tasnet_forward.4} parent=111 // pred_region
          %p2738 = scmp.lt.s32.totalorder %s35, 1
          %s2739 = scalar_select %p2738, %s35, 1
          %s2740 = smul.addr %s2739, 16
          %s2741 = smul.addr %s2740, 4
          %s2742 = scalar_lea.vmem %s16, %s2741
        $region116: #{conv_tasnet_forward.4} parent=111 // pred_fallthru
          _
      $region112: #{conv_tasnet_forward.4} parent=5 // pred_fallthru
        _
    $region6: #{conv_tasnet_forward.4} parent=1 // loop_footer
      %s28 = sadd.s32 1, %s24
    $region7: #{conv_tasnet_forward.4} parent=1 // loop_footer_branch
      %23 = sbr.rel target = $region3
    $region8: #{conv_tasnet_forward.4} parent=1 // loop_exit
      _
    %2743 = vsyncpa [#allocation7], 1
    %s2744 = scalar_lea.sflag [#allocation7], 1
    %2745 = vsyncpa %s2744, 1

</llo_original>
